<compile_context>
chip_gen: v6e
topology: v6e:2x2x1
jax: 0.10.0
libtpu: 0.0.40
codegen_flags: <defaults>
</compile_context>

<pallas_src>
import jax
import jax.numpy as jnp
from jax.experimental import pallas as pl
from jax.experimental.pallas import tpu as pltpu


# ----------------------------------------------------------------------------- kernel
def uv_agg_kernel(e_uv_ref, e_r_ref, uv_ref,
                  w1_ref, b1_ref,        # packed w_r1: (2*Dp, Dp), (1, Dp)
                  w2_ref, b2_ref,        # w_r2:        (Dp, Dp),   (1, Dp)
                  wa1_ref, ba1_ref,      # packed att1: (2*Dp, Dp), (1, Dp)
                  wa2_ref, ba2_ref,      # att2:        (Dp, Dp),   (1, Dp)
                  wa3_ref, ba3_ref,      # att3:        (1, Dp),    (1, 1)
                  out_ref):
    f32 = jnp.float32
    TB, L, Dp = e_uv_ref.shape
    rows = TB * L

    e_uv = e_uv_ref[...].reshape(rows, Dp)          # (TB*L, Dp)
    e_r = e_r_ref[...].reshape(rows, Dp)            # (TB*L, Dp)
    u = uv_ref[...]                                 # (TB, Dp)

    # x = relu(w_r1(cat(e_uv, e_r)))  -- single K=2*Dp matmul
    x = jnp.concatenate([e_uv, e_r], axis=-1)                       # (rows, 2*Dp)
    h = jnp.dot(x, w1_ref[...], preferred_element_type=f32) + b1_ref[...]
    h = jnp.maximum(h, 0.0)

    # o_history = relu(w_r2(x))
    o = jnp.dot(h, w2_ref[...], preferred_element_type=f32) + b2_ref[...]
    o = jnp.maximum(o, 0.0)                                         # (rows, Dp)

    # attention: relu(att1(cat(o, u_rep))) -> relu(att2(.)) -> att3 -> softmax over L
    u_b = jnp.broadcast_to(u[:, None, :], (TB, L, Dp)).reshape(rows, Dp)
    a = jnp.concatenate([o, u_b], axis=-1)                          # (rows, 2*Dp)
    a = jnp.dot(a, wa1_ref[...], preferred_element_type=f32) + ba1_ref[...]
    a = jnp.maximum(a, 0.0)
    a = jnp.dot(a, wa2_ref[...], preferred_element_type=f32) + ba2_ref[...]
    a = jnp.maximum(a, 0.0)                                         # (rows, Dp)

    # att3 projection as VPU multiply + lane reduce (not a (.,1) matmul)
    a3 = a.reshape(TB, L, Dp)
    logits = jnp.sum(a3 * wa3_ref[...], axis=-1) + ba3_ref[0, 0]    # (TB, L)

    # softmax over the history axis (per node)
    m = jnp.max(logits, axis=-1, keepdims=True)
    e = jnp.exp(logits - m)
    denom = jnp.sum(e, axis=-1, keepdims=True)
    att = e * pl.reciprocal(denom, approx=True)                     # (TB, L)

    # att_history[b, :] = sum_l att[b, l] * o[b, l, :]
    o3 = o.reshape(TB, L, Dp)
    out_ref[...] = jnp.sum(o3 * att[:, :, None], axis=1)            # (TB, Dp)


# --------------------------------------------------------------------- one-time prep
def prepare_params(params, D, lane=128):
    """Hoisted, call-once prep: pre-transpose/stack the Linear weights, zero-pad the
    embed dim to a lane-dense multiple of 128, and pad the embedding tables to match."""
    Dp = ((D + lane - 1) // lane) * lane
    pad = Dp - D
    f32 = jnp.float32

    def pad_last(x):
        x = x.astype(f32)
        return jnp.pad(x, [(0, 0)] * (x.ndim - 1) + [(0, pad)]) if pad else x

    def pack_concat_linear(w, b):
        # nn.Linear weight (D, 2D) acting on cat(x_a, x_b) -> packed (2*Dp, Dp)
        wa, wb = w[:, :D].T, w[:, D:].T
        w_p = jnp.zeros((2 * Dp, Dp), f32)
        w_p = w_p.at[:D, :D].set(wa).at[Dp:Dp + D, :D].set(wb)
        b_p = jnp.zeros((1, Dp), f32).at[0, :D].set(b)
        return w_p, b_p

    def pack_linear(w, b):
        w_p = jnp.zeros((Dp, Dp), f32).at[:D, :D].set(w.T)
        b_p = jnp.zeros((1, Dp), f32).at[0, :D].set(b)
        return w_p, b_p

    w1, b1 = pack_concat_linear(params["w_r1_w"], params["w_r1_b"])
    w2, b2 = pack_linear(params["w_r2_w"], params["w_r2_b"])
    wa1, ba1 = pack_concat_linear(params["att1_w"], params["att1_b"])
    wa2, ba2 = pack_linear(params["att2_w"], params["att2_b"])
    wa3 = jnp.zeros((1, Dp), f32).at[0, :D].set(params["att3_w"][0])
    ba3 = params["att3_b"].reshape(1, 1).astype(f32)

    return {
        "D": D, "Dp": Dp,
        "u2e": pad_last(params["u2e"]),
        "v2e": pad_last(params["v2e"]),
        "r2e": pad_last(params["r2e"]),
        "w1": w1, "b1": b1, "w2": w2, "b2": b2,
        "wa1": wa1, "ba1": ba1, "wa2": wa2, "ba2": ba2,
        "wa3": wa3, "ba3": ba3,
    }


# --------------------------------------------------------------------------- wrapper
def uv_aggregator_forward(nodes, history_uv, history_r, prepped, uv=True, tb=32):
    D, Dp = prepped["D"], prepped["Dp"]
    v2e, u2e, r2e = prepped["v2e"], prepped["u2e"], prepped["r2e"]
    if uv:
        e_uv = v2e[history_uv]            # (B, L, Dp)
        uv_rep = u2e[nodes]               # (B, Dp)
    else:
        e_uv = u2e[history_uv]
        uv_rep = v2e[nodes]
    e_r = r2e[history_r]                  # (B, L, Dp)

    B, L, _ = e_uv.shape
    TB = tb
    Bp = ((B + TB - 1) // TB) * TB
    if Bp != B:                           # pad batch to a whole number of tiles
        pb = Bp - B
        e_uv = jnp.pad(e_uv, ((0, pb), (0, 0), (0, 0)))
        e_r = jnp.pad(e_r, ((0, pb), (0, 0), (0, 0)))
        uv_rep = jnp.pad(uv_rep, ((0, pb), (0, 0)))

    def full_spec(shape):
        return pl.BlockSpec(shape, lambda i: (0,) * len(shape))

    out = pl.pallas_call(
        uv_agg_kernel,
        out_shape=jax.ShapeDtypeStruct((Bp, Dp), jnp.float32),
        grid=(Bp // TB,),
        in_specs=[
            pl.BlockSpec((TB, L, Dp), lambda i: (i, 0, 0)),   # e_uv
            pl.BlockSpec((TB, L, Dp), lambda i: (i, 0, 0)),   # e_r
            pl.BlockSpec((TB, Dp), lambda i: (i, 0)),         # uv_rep
            full_spec((2 * Dp, Dp)), full_spec((1, Dp)),      # w_r1 (packed) + bias
            full_spec((Dp, Dp)), full_spec((1, Dp)),          # w_r2 + bias
            full_spec((2 * Dp, Dp)), full_spec((1, Dp)),      # att1 (packed) + bias
            full_spec((Dp, Dp)), full_spec((1, Dp)),          # att2 + bias
            full_spec((1, Dp)), full_spec((1, 1)),            # att3 + bias
        ],
        out_specs=pl.BlockSpec((TB, Dp), lambda i: (i, 0)),
        compiler_params=pltpu.CompilerParams(dimension_semantics=("parallel",)),
    )(e_uv, e_r, uv_rep,
      prepped["w1"], prepped["b1"], prepped["w2"], prepped["b2"],
      prepped["wa1"], prepped["ba1"], prepped["wa2"], prepped["ba2"],
      prepped["wa3"], prepped["ba3"])
    return out[:B, :D]                    # (B, D)


# -------------------------------------------------------------------- JAX reference
def reference_forward(nodes, history_uv, history_r, params, uv=True):
    """Pure-JAX reference matching the PyTorch loop semantics (eval mode)."""
    v2e, u2e, r2e = params["v2e"], params["u2e"], params["r2e"]
    if uv:
        e_uv, uv_rep = v2e[history_uv], u2e[nodes]
    else:
        e_uv, uv_rep = u2e[history_uv], v2e[nodes]
    e_r = r2e[history_r]
    B, L, D = e_uv.shape
    relu = lambda t: jnp.maximum(t, 0.0)

    x = jnp.concatenate([e_uv, e_r], axis=-1)                                    # (B,L,2D)
    x = relu(jnp.einsum("bli,oi->blo", x, params["w_r1_w"]) + params["w_r1_b"])
    o = relu(jnp.einsum("bli,oi->blo", x, params["w_r2_w"]) + params["w_r2_b"])  # (B,L,D)

    u_t = jnp.broadcast_to(uv_rep[:, None, :], (B, L, D))
    a = jnp.concatenate([o, u_t], axis=-1)
    a = relu(jnp.einsum("bli,oi->blo", a, params["att1_w"]) + params["att1_b"])
    a = relu(jnp.einsum("bli,oi->blo", a, params["att2_w"]) + params["att2_b"])
    logits = jnp.einsum("bli,oi->blo", a, params["att3_w"]) + params["att3_b"]   # (B,L,1)
    att = jax.nn.softmax(logits, axis=1)
    return jnp.sum(o * att, axis=1)                                              # (B,D)


def make_params(key, num_users, num_items, num_ratings, D):
    ks = jax.random.split(key, 16)
    u = lambda k, shape, fan_in: jax.random.uniform(
        k, shape, jnp.float32, -1.0 / jnp.sqrt(fan_in), 1.0 / jnp.sqrt(fan_in))
    return {
        "u2e": jax.random.normal(ks[0], (num_users, D), jnp.float32),
        "v2e": jax.random.normal(ks[1], (num_items, D), jnp.float32),
        "r2e": jax.random.normal(ks[2], (num_ratings, D), jnp.float32),
        "w_r1_w": u(ks[3], (D, 2 * D), 2 * D), "w_r1_b": u(ks[4], (D,), 2 * D),
        "w_r2_w": u(ks[5], (D, D), D),         "w_r2_b": u(ks[6], (D,), D),
        "att1_w": u(ks[7], (D, 2 * D), 2 * D), "att1_b": u(ks[8], (D,), 2 * D),
        "att2_w": u(ks[9], (D, D), D),         "att2_b": u(ks[10], (D,), D),
        "att3_w": u(ks[11], (1, D), D),        "att3_b": u(ks[12], (1,), D),
    }


if __name__ == "__main__":
    B, L, D = 64, 8, 32
    num_users, num_items, num_ratings = 50, 80, 5

    key = jax.random.PRNGKey(0)
    kp, k1, k2, k3 = jax.random.split(key, 4)
    params = make_params(kp, num_users, num_items, num_ratings, D)
    prepped = prepare_params(params, D)       # one-time: transpose/stack/pad weights

    nodes = jax.random.randint(k1, (B,), 0, num_users)
    history_uv = jax.random.randint(k2, (B, L), 0, num_items)
    history_r = jax.random.randint(k3, (B, L), 0, num_ratings)

    out = uv_aggregator_forward(nodes, history_uv, history_r, prepped, uv=True, tb=32)
    out = jax.block_until_ready(out)

    ref = reference_forward(nodes, history_uv, history_r, params, uv=True)
    assert out.shape == (B, D)
    err = jnp.max(jnp.abs(out - ref))
    # tolerance loosened slightly vs exact f32 because of pl.reciprocal(approx=True)
    assert jnp.allclose(out, ref, atol=1e-3, rtol=1e-3), f"max err {err}"
    print("KERNEL_OK")
</pallas_src>

<mosaic_0001>
module attributes {stable_mosaic.version = 11 : i64} {
  func.func @uv_agg_kernel(%arg0: i32, %arg1: memref<32x8x128xf32, #tpu.memory_space<vmem>>, %arg2: memref<32x8x128xf32, #tpu.memory_space<vmem>>, %arg3: memref<32x128xf32, #tpu.memory_space<vmem>>, %arg4: memref<256x128xf32, #tpu.memory_space<vmem>>, %arg5: memref<1x128xf32, #tpu.memory_space<vmem>>, %arg6: memref<128x128xf32, #tpu.memory_space<vmem>>, %arg7: memref<1x128xf32, #tpu.memory_space<vmem>>, %arg8: memref<256x128xf32, #tpu.memory_space<vmem>>, %arg9: memref<1x128xf32, #tpu.memory_space<vmem>>, %arg10: memref<128x128xf32, #tpu.memory_space<vmem>>, %arg11: memref<1x128xf32, #tpu.memory_space<vmem>>, %arg12: memref<1x128xf32, #tpu.memory_space<vmem>>, %arg13: memref<1x1xf32, #tpu.memory_space<vmem>>, %arg14: memref<32x128xf32, #tpu.memory_space<vmem>>) attributes {dimension_semantics = [#tpu.dimension_semantics<parallel>], iteration_bounds = array<i64: 2>, scalar_prefetch = 0 : i64, scratch_operands = 0 : i64, tpu.core_type = #tpu.core_type<tc>, window_params = [{transform_indices = @transform_0, window_bounds = array<i64: 32, 8, 128>}, {transform_indices = @transform_1, window_bounds = array<i64: 32, 8, 128>}, {transform_indices = @transform_2, window_bounds = array<i64: 32, 128>}, {pipeline_mode = #tpu.pipeline_mode<synchronous>, transform_indices = @transform_3, window_bounds = array<i64: 256, 128>}, {pipeline_mode = #tpu.pipeline_mode<synchronous>, transform_indices = @transform_4, window_bounds = array<i64: 1, 128>}, {pipeline_mode = #tpu.pipeline_mode<synchronous>, transform_indices = @transform_5, window_bounds = array<i64: 128, 128>}, {pipeline_mode = #tpu.pipeline_mode<synchronous>, transform_indices = @transform_6, window_bounds = array<i64: 1, 128>}, {pipeline_mode = #tpu.pipeline_mode<synchronous>, transform_indices = @transform_7, window_bounds = array<i64: 256, 128>}, {pipeline_mode = #tpu.pipeline_mode<synchronous>, transform_indices = @transform_8, window_bounds = array<i64: 1, 128>}, {pipeline_mode = #tpu.pipeline_mode<synchronous>, transform_indices = @transform_9, window_bounds = array<i64: 128, 128>}, {pipeline_mode = #tpu.pipeline_mode<synchronous>, transform_indices = @transform_10, window_bounds = array<i64: 1, 128>}, {pipeline_mode = #tpu.pipeline_mode<synchronous>, transform_indices = @transform_11, window_bounds = array<i64: 1, 128>}, {pipeline_mode = #tpu.pipeline_mode<synchronous>, transform_indices = @transform_12, window_bounds = array<i64: 1, 1>}, {transform_indices = @transform_13, window_bounds = array<i64: 32, 128>}]} {
    %c0 = arith.constant 0 : index
    %c0_0 = arith.constant 0 : index
    %c0_1 = arith.constant 0 : index
    %0 = vector.load %arg1[%c0, %c0_0, %c0_1] : memref<32x8x128xf32, #tpu.memory_space<vmem>>, vector<32x8x128xf32>
    %1 = vector.shape_cast %0 : vector<32x8x128xf32> to vector<256x128xf32>
    %c0_2 = arith.constant 0 : index
    %c0_3 = arith.constant 0 : index
    %c0_4 = arith.constant 0 : index
    %2 = vector.load %arg2[%c0_2, %c0_3, %c0_4] : memref<32x8x128xf32, #tpu.memory_space<vmem>>, vector<32x8x128xf32>
    %3 = vector.shape_cast %2 : vector<32x8x128xf32> to vector<256x128xf32>
    %c0_5 = arith.constant 0 : index
    %c0_6 = arith.constant 0 : index
    %4 = vector.load %arg3[%c0_5, %c0_6] : memref<32x128xf32, #tpu.memory_space<vmem>>, vector<32x128xf32>
    %5 = tpu.concatenate %1, %3 in 1 : vector<256x128xf32>, vector<256x128xf32> -> vector<256x256xf32>
    %c0_7 = arith.constant 0 : index
    %c0_8 = arith.constant 0 : index
    %6 = vector.load %arg4[%c0_7, %c0_8] : memref<256x128xf32, #tpu.memory_space<vmem>>, vector<256x128xf32>
    %cst = arith.constant dense<0.000000e+00> : vector<256x128xf32>
    %7 = tpu.matmul %5, %6, %cst {dimension_numbers = #tpu.dot_dimension_numbers<[1], [0], [0], [1], [0, 0, 1, 1], [], []>} : vector<256x256xf32>, vector<256x128xf32>, vector<256x128xf32> -> vector<256x128xf32>
    %c0_9 = arith.constant 0 : index
    %c0_10 = arith.constant 0 : index
    %8 = vector.load %arg5[%c0_9, %c0_10] : memref<1x128xf32, #tpu.memory_space<vmem>>, vector<1x128xf32>
    %9 = vector.broadcast %8 : vector<1x128xf32> to vector<256x128xf32>
    %10 = arith.addf %7, %9 : vector<256x128xf32>
    %cst_11 = arith.constant 0.000000e+00 : f32
    %11 = vector.broadcast %cst_11 : f32 to vector<256x128xf32>
    %12 = arith.maximumf %10, %11 : vector<256x128xf32>
    %c0_12 = arith.constant 0 : index
    %c0_13 = arith.constant 0 : index
    %13 = vector.load %arg6[%c0_12, %c0_13] : memref<128x128xf32, #tpu.memory_space<vmem>>, vector<128x128xf32>
    %cst_14 = arith.constant dense<0.000000e+00> : vector<256x128xf32>
    %14 = tpu.matmul %12, %13, %cst_14 {dimension_numbers = #tpu.dot_dimension_numbers<[1], [0], [0], [1], [0, 0, 1, 1], [], []>} : vector<256x128xf32>, vector<128x128xf32>, vector<256x128xf32> -> vector<256x128xf32>
    %c0_15 = arith.constant 0 : index
    %c0_16 = arith.constant 0 : index
    %15 = vector.load %arg7[%c0_15, %c0_16] : memref<1x128xf32, #tpu.memory_space<vmem>>, vector<1x128xf32>
    %16 = vector.broadcast %15 : vector<1x128xf32> to vector<256x128xf32>
    %17 = arith.addf %14, %16 : vector<256x128xf32>
    %cst_17 = arith.constant 0.000000e+00 : f32
    %18 = vector.broadcast %cst_17 : f32 to vector<256x128xf32>
    %19 = arith.maximumf %17, %18 : vector<256x128xf32>
    %20 = vector.shape_cast %4 : vector<32x128xf32> to vector<32x1x128xf32>
    %21 = vector.shape_cast %20 : vector<32x1x128xf32> to vector<32x1x128xf32>
    %22 = vector.broadcast %21 : vector<32x1x128xf32> to vector<32x8x128xf32>
    %23 = vector.shape_cast %22 : vector<32x8x128xf32> to vector<256x128xf32>
    %24 = tpu.concatenate %19, %23 in 1 : vector<256x128xf32>, vector<256x128xf32> -> vector<256x256xf32>
    %c0_18 = arith.constant 0 : index
    %c0_19 = arith.constant 0 : index
    %25 = vector.load %arg8[%c0_18, %c0_19] : memref<256x128xf32, #tpu.memory_space<vmem>>, vector<256x128xf32>
    %cst_20 = arith.constant dense<0.000000e+00> : vector<256x128xf32>
    %26 = tpu.matmul %24, %25, %cst_20 {dimension_numbers = #tpu.dot_dimension_numbers<[1], [0], [0], [1], [0, 0, 1, 1], [], []>} : vector<256x256xf32>, vector<256x128xf32>, vector<256x128xf32> -> vector<256x128xf32>
    %c0_21 = arith.constant 0 : index
    %c0_22 = arith.constant 0 : index
    %27 = vector.load %arg9[%c0_21, %c0_22] : memref<1x128xf32, #tpu.memory_space<vmem>>, vector<1x128xf32>
    %28 = vector.broadcast %27 : vector<1x128xf32> to vector<256x128xf32>
    %29 = arith.addf %26, %28 : vector<256x128xf32>
    %cst_23 = arith.constant 0.000000e+00 : f32
    %30 = vector.broadcast %cst_23 : f32 to vector<256x128xf32>
    %31 = arith.maximumf %29, %30 : vector<256x128xf32>
    %c0_24 = arith.constant 0 : index
    %c0_25 = arith.constant 0 : index
    %32 = vector.load %arg10[%c0_24, %c0_25] : memref<128x128xf32, #tpu.memory_space<vmem>>, vector<128x128xf32>
    %cst_26 = arith.constant dense<0.000000e+00> : vector<256x128xf32>
    %33 = tpu.matmul %31, %32, %cst_26 {dimension_numbers = #tpu.dot_dimension_numbers<[1], [0], [0], [1], [0, 0, 1, 1], [], []>} : vector<256x128xf32>, vector<128x128xf32>, vector<256x128xf32> -> vector<256x128xf32>
    %c0_27 = arith.constant 0 : index
    %c0_28 = arith.constant 0 : index
    %34 = vector.load %arg11[%c0_27, %c0_28] : memref<1x128xf32, #tpu.memory_space<vmem>>, vector<1x128xf32>
    %35 = vector.broadcast %34 : vector<1x128xf32> to vector<256x128xf32>
    %36 = arith.addf %33, %35 : vector<256x128xf32>
    %cst_29 = arith.constant 0.000000e+00 : f32
    %37 = vector.broadcast %cst_29 : f32 to vector<256x128xf32>
    %38 = arith.maximumf %36, %37 : vector<256x128xf32>
    %39 = vector.shape_cast %38 : vector<256x128xf32> to vector<32x8x128xf32>
    %c0_30 = arith.constant 0 : index
    %c0_31 = arith.constant 0 : index
    %40 = vector.load %arg12[%c0_30, %c0_31] : memref<1x128xf32, #tpu.memory_space<vmem>>, vector<1x128xf32>
    %41 = vector.shape_cast %40 : vector<1x128xf32> to vector<1x1x128xf32>
    %42 = vector.broadcast %41 : vector<1x1x128xf32> to vector<32x8x128xf32>
    %43 = arith.mulf %39, %42 : vector<32x8x128xf32>
    %cst_32 = arith.constant dense<0.000000e+00> : vector<32x8xf32>
    %44 = vector.multi_reduction <add>, %43, %cst_32 [2] : vector<32x8x128xf32> to vector<32x8xf32>
    %c0_33 = arith.constant 0 : index
    %c0_34 = arith.constant 0 : index
    %45 = vector.load %arg13[%c0_33, %c0_34] : memref<1x1xf32, #tpu.memory_space<vmem>>, vector<1x1xf32>
    %46 = vector.extract %45[0, 0] : f32 from vector<1x1xf32>
    %47 = vector.broadcast %46 : f32 to vector<32x8xf32>
    %48 = arith.addf %44, %47 : vector<32x8xf32>
    %cst_35 = arith.constant dense<0xFF800000> : vector<32xf32>
    %49 = vector.multi_reduction <maximumf>, %48, %cst_35 [1] : vector<32x8xf32> to vector<32xf32>
    %50 = vector.shape_cast %49 : vector<32xf32> to vector<32x1xf32>
    %51 = vector.broadcast %50 : vector<32x1xf32> to vector<32x8xf32>
    %52 = arith.subf %48, %51 : vector<32x8xf32>
    %53 = math.exp %52 : vector<32x8xf32>
    %cst_36 = arith.constant dense<0.000000e+00> : vector<32xf32>
    %54 = vector.multi_reduction <add>, %53, %cst_36 [1] : vector<32x8xf32> to vector<32xf32>
    %55 = vector.shape_cast %54 : vector<32xf32> to vector<32x1xf32>
    %56 = tpu.reciprocal %55 {approx = true} : vector<32x1xf32> -> vector<32x1xf32>
    %57 = vector.broadcast %56 : vector<32x1xf32> to vector<32x8xf32>
    %58 = arith.mulf %53, %57 : vector<32x8xf32>
    %59 = vector.shape_cast %19 : vector<256x128xf32> to vector<32x8x128xf32>
    %60 = vector.shape_cast %58 : vector<32x8xf32> to vector<32x8x1xf32>
    %61 = vector.broadcast %60 : vector<32x8x1xf32> to vector<32x8x128xf32>
    %62 = arith.mulf %59, %61 : vector<32x8x128xf32>
    %cst_37 = arith.constant dense<0.000000e+00> : vector<32x128xf32>
    %63 = vector.multi_reduction <add>, %62, %cst_37 [1] : vector<32x8x128xf32> to vector<32x128xf32>
    %c0_38 = arith.constant 0 : index
    %c0_39 = arith.constant 0 : index
    %64 = vector.load %arg14[%c0_38, %c0_39] : memref<32x128xf32, #tpu.memory_space<vmem>>, vector<32x128xf32>
    tpu.vector_store %arg14[%c0_38, %c0_39], %63 {strides = array<i32>} : memref<32x128xf32, #tpu.memory_space<vmem>>, vector<32x128xf32>,
    return
  }
  func.func @transform_0(%arg0: i32) -> (i32, i32, i32) {
    %c0_i32 = arith.constant 0 : i32
    %c0_i32_0 = arith.constant 0 : i32
    %c0_i32_1 = arith.constant 0 : i32
    return %arg0, %c0_i32, %c0_i32_0 : i32, i32, i32
  }
  func.func @transform_1(%arg0: i32) -> (i32, i32, i32) {
    %c0_i32 = arith.constant 0 : i32
    %c0_i32_0 = arith.constant 0 : i32
    %c0_i32_1 = arith.constant 0 : i32
    return %arg0, %c0_i32, %c0_i32_0 : i32, i32, i32
  }
  func.func @transform_2(%arg0: i32) -> (i32, i32) {
    %c0_i32 = arith.constant 0 : i32
    %c0_i32_0 = arith.constant 0 : i32
    return %arg0, %c0_i32 : i32, i32
  }
  func.func @transform_3(%arg0: i32) -> (i32, i32) {
    %c0_i32 = arith.constant 0 : i32
    %c0_i32_0 = arith.constant 0 : i32
    %c0_i32_1 = arith.constant 0 : i32
    return %c0_i32, %c0_i32_0 : i32, i32
  }
  func.func @transform_4(%arg0: i32) -> (i32, i32) {
    %c0_i32 = arith.constant 0 : i32
    %c0_i32_0 = arith.constant 0 : i32
    %c0_i32_1 = arith.constant 0 : i32
    return %c0_i32, %c0_i32_0 : i32, i32
  }
  func.func @transform_5(%arg0: i32) -> (i32, i32) {
    %c0_i32 = arith.constant 0 : i32
    %c0_i32_0 = arith.constant 0 : i32
    %c0_i32_1 = arith.constant 0 : i32
    return %c0_i32, %c0_i32_0 : i32, i32
  }
  func.func @transform_6(%arg0: i32) -> (i32, i32) {
    %c0_i32 = arith.constant 0 : i32
    %c0_i32_0 = arith.constant 0 : i32
    %c0_i32_1 = arith.constant 0 : i32
    return %c0_i32, %c0_i32_0 : i32, i32
  }
  func.func @transform_7(%arg0: i32) -> (i32, i32) {
    %c0_i32 = arith.constant 0 : i32
    %c0_i32_0 = arith.constant 0 : i32
    %c0_i32_1 = arith.constant 0 : i32
    return %c0_i32, %c0_i32_0 : i32, i32
  }
  func.func @transform_8(%arg0: i32) -> (i32, i32) {
    %c0_i32 = arith.constant 0 : i32
    %c0_i32_0 = arith.constant 0 : i32
    %c0_i32_1 = arith.constant 0 : i32
    return %c0_i32, %c0_i32_0 : i32, i32
  }
  func.func @transform_9(%arg0: i32) -> (i32, i32) {
    %c0_i32 = arith.constant 0 : i32
    %c0_i32_0 = arith.constant 0 : i32
    %c0_i32_1 = arith.constant 0 : i32
    return %c0_i32, %c0_i32_0 : i32, i32
  }
  func.func @transform_10(%arg0: i32) -> (i32, i32) {
    %c0_i32 = arith.constant 0 : i32
    %c0_i32_0 = arith.constant 0 : i32
    %c0_i32_1 = arith.constant 0 : i32
    return %c0_i32, %c0_i32_0 : i32, i32
  }
  func.func @transform_11(%arg0: i32) -> (i32, i32) {
    %c0_i32 = arith.constant 0 : i32
    %c0_i32_0 = arith.constant 0 : i32
    %c0_i32_1 = arith.constant 0 : i32
    return %c0_i32, %c0_i32_0 : i32, i32
  }
  func.func @transform_12(%arg0: i32) -> (i32, i32) {
    %c0_i32 = arith.constant 0 : i32
    %c0_i32_0 = arith.constant 0 : i32
    %c0_i32_1 = arith.constant 0 : i32
    return %c0_i32, %c0_i32_0 : i32, i32
  }
  func.func @transform_13(%arg0: i32) -> (i32, i32) {
    %c0_i32 = arith.constant 0 : i32
    %c0_i32_0 = arith.constant 0 : i32
    return %arg0, %c0_i32 : i32, i32
  }
}

</mosaic_0001>

<llo_original>
// kernel: tpu_custom_call.1
$region0: #{tpu_custom_call.1}
  #allocation0 [shape = 'u32[]', space=smem, size = 0x4, offset = 0x4, fixed_abs, tag = 'smem constant byte address 0x4 - core index']
  #allocation1 [shape = 'u32[144,128]{1,0:T(1,128)}', space=vmem, size = 0x12000, scoped, tag = 'internal scratch']
  #allocation2 [shape = 'f32[1,1]{1,0:T(1,128)S(1)}', space=vmem, size = 0x200, scoped, tag = 'scoped memory for tpu_custom_call.1']
  %s0 = inlined_call_operand.hbm [shape: f32[64,8,128], index: 0, kind: input, shape index: {}]
  %s1 = inlined_call_operand.hbm [shape: f32[64,8,128], index: 1, kind: input, shape index: {}]
  %s2 = inlined_call_operand.hbm [shape: f32[64,128], index: 2, kind: input, shape index: {}]
  %s3 = inlined_call_operand.hbm [shape: f32[256,128], index: 3, kind: input, shape index: {}]
  %s4 = inlined_call_operand.vmem [shape: f32[1,128], index: 4, kind: input, shape index: {}]
  %s5 = inlined_call_operand.hbm [shape: f32[128,128], index: 5, kind: input, shape index: {}]
  %s6 = inlined_call_operand.vmem [shape: f32[1,128], index: 6, kind: input, shape index: {}]
  %s7 = inlined_call_operand.hbm [shape: f32[256,128], index: 7, kind: input, shape index: {}]
  %s8 = inlined_call_operand.vmem [shape: f32[1,128], index: 8, kind: input, shape index: {}]
  %s9 = inlined_call_operand.hbm [shape: f32[128,128], index: 9, kind: input, shape index: {}]
  %s10 = inlined_call_operand.vmem [shape: f32[1,128], index: 10, kind: input, shape index: {}]
  %s11 = inlined_call_operand.vmem [shape: f32[1,128], index: 11, kind: input, shape index: {}]
  %s12 = inlined_call_operand.<no memory space> [shape: f32[1,1], index: 12, kind: input, shape index: {}]
  %s13 = inlined_call_operand.hbm [shape: f32[64,128], index: 13, kind: output, shape index: {}]
  %s14 = sld [smem:[#allocation0]]
  $region113: #{tpu_custom_call.1} parent=0
    _
  %s16 = ssub.s32 1, %s14
  %s17 = scalar_select 0, %s16, %s14
  %v18 = vstv %s12
  %19 = vst [vmem:[#allocation2] sm:$0x1] %v18
  $region1: #{tpu_custom_call.1} parent=0
    #allocation3 [shape = 'u8[262144]{0}', space=vmem, size = 0x40000, scoped, tag = 'input window, operand 0']
    #allocation4 [shape = 's32[2]{0}', space=sflag, size = 0x8, scoped, tag = 'scoped memory for tpu_custom_call.1']
    #allocation5 [shape = 's32[2]{0}', space=sflag, size = 0x8, scoped, tag = 'scoped memory for tpu_custom_call.1']
    #allocation6 [shape = 'u8[262144]{0}', space=vmem, size = 0x40000, scoped, tag = 'input window, operand 1']
    #allocation7 [shape = 's32[2]{0}', space=sflag, size = 0x8, scoped, tag = 'scoped memory for tpu_custom_call.1']
    #allocation8 [shape = 'u8[32768]{0}', space=vmem, size = 0x8000, scoped, tag = 'input window, operand 2']
    #allocation9 [shape = 'u8[131072]{0}', space=vmem, size = 0x20000, scoped, tag = 'input window, operand 3, single buffered']
    #allocation10 [shape = 's32[1]{0}', space=sflag, size = 0x4, scoped, tag = 'scoped memory for tpu_custom_call.1']
    #allocation11 [shape = 'u8[65536]{0}', space=vmem, size = 0x10000, scoped, tag = 'input window, operand 5, single buffered']
    #allocation12 [shape = 'u8[131072]{0}', space=vmem, size = 0x20000, scoped, tag = 'input window, operand 7, single buffered']
    #allocation13 [shape = 's32[1]{0}', space=sflag, size = 0x4, scoped, tag = 'scoped memory for tpu_custom_call.1']
    #allocation14 [shape = 'u8[65536]{0}', space=vmem, size = 0x10000, scoped, tag = 'input window, operand 9, single buffered']
    #allocation15 [shape = 'u8[32768]{0}', space=vmem, size = 0x8000, scoped, tag = 'output window, operand 0']
    %20 = vsyncpa [#allocation4], 0
    %s21 = scalar_lea.sflag [#allocation4], 1
    %22 = vsyncpa %s21, 0
    %23 = vsyncpa [#allocation7], 0
    %s24 = scalar_lea.sflag [#allocation7], 1
    %25 = vsyncpa %s24, 0
    %26 = vsyncpa [#allocation10], 0
    %27 = vsyncpa [#allocation13], 0
    %28 = vsyncpa [#allocation5], 0
    %s29 = scalar_lea.sflag [#allocation5], 1
    %30 = vsyncpa %s29, 0
    loop: start=0, step=1, limit=4
    $region2: #{tpu_custom_call.1} parent=1 // loop_pre_header
      _
    $region3: #{tpu_custom_call.1} parent=1 // loop_header
      %s32 = sphi 0, %s36
      %p33 = scmp.ge.s32.totalorder %s32, 4
      %s42 = sphi 0, %s44
      %s45 = sphi 0, %s42
      %s46 = sphi 0, %s45
      %s62 = sphi 0, %s46
      %s68 = sphi 0, %s70
      %s71 = sphi 0, %s68
      %s72 = sphi 0, %s71
      %s88 = sphi 0, %s72
      %s94 = sphi 0, %s96
      %s97 = sphi 0, %s94
      %s98 = sphi 0, %s97
      %s114 = sphi 0, %s98
      %s118 = sphi 0, %s118
      %s120 = sphi 0, %s118
      %s121 = sphi 0, %s120
      %s135 = sphi 0, %s121
      %s139 = sphi 0, %s139
      %s141 = sphi 0, %s139
      %s142 = sphi 0, %s141
      %s156 = sphi 0, %s142
      %s160 = sphi 0, %s160
      %s162 = sphi 0, %s160
      %s163 = sphi 0, %s162
      %s177 = sphi 0, %s163
      %s181 = sphi 0, %s181
      %s183 = sphi 0, %s181
      %s184 = sphi 0, %s183
      %s198 = sphi 0, %s184
      %s202 = sphi 0, %s202
      %s204 = sphi 0, %s202
      %s205 = sphi 0, %s204
      %s219 = sphi 0, %s205
      %s223 = sphi 0, %s223
      %s225 = sphi 0, %s223
      %s226 = sphi 0, %s225
      %s240 = sphi 0, %s226
      %s244 = sphi 0, %s244
      %s246 = sphi 0, %s244
      %s247 = sphi 0, %s246
      %s261 = sphi 0, %s247
      %s265 = sphi 0, %s265
      %s267 = sphi 0, %s265
      %s268 = sphi 0, %s267
      %s282 = sphi 0, %s268
      %s286 = sphi 0, %s286
      %s288 = sphi 0, %s286
      %s289 = sphi 0, %s288
      %s303 = sphi 0, %s289
      %s307 = sphi 0, %s307
      %s309 = sphi 0, %s307
      %s310 = sphi 0, %s309
      %s324 = sphi 0, %s310
      %s330 = sphi 0, %s332
      %s333 = sphi 0, %s330
      %s334 = sphi 0, %s333
      %s350 = sphi 0, %s334
    $region4: #{tpu_custom_call.1} parent=1 // loop_header_branch
      %35 = sbr.rel (%p33) target = $region8
    $region5: #{tpu_custom_call.1} parent=1 // loop_body
      %s37 = ssub.s32 %s32, 1
      %s38 = ssub.s32 %s32, 2
      %s39 = sadd.s32 %s32, 1
      %s40 = ssub.s32 %s32, %s39
      %p41 = scmp.eq.s32.totalorder %s40, 0
      %s43 = sadd.s32 %s42, 1
      %s44 = scalar_select %p41, %s42, %s43
      %p47 = pneg %p41
      %p48 = scmp.eq.s32.totalorder %s32, 1
      %p49 = por %p47, %p48
      %p50 = scmp.ne.s32.totalorder %s42, %s45
      %p51 = scmp.eq.s32.totalorder %s32, 0
      %p52 = por %p50, %p51
      %p53 = scmp.ne.s32.totalorder %s42, %s45
      %p54 = scmp.eq.s32.totalorder %s37, 1
      %p55 = por %p53, %p54
      %p56 = scmp.ne.s32.totalorder %s45, %s46
      %p57 = scmp.eq.s32.totalorder %s37, 0
      %p58 = por %p56, %p57
      %p59 = scmp.ne.s32.totalorder %s45, %s46
      %p60 = scmp.eq.s32.totalorder %s38, 1
      %p61 = por %p59, %p60
      %p63 = scmp.ne.s32.totalorder %s46, %s62
      %p64 = scmp.eq.s32.totalorder %s38, 0
      %p65 = por %p63, %p64
      %s66 = ssub.s32 %s32, %s39
      %p67 = scmp.eq.s32.totalorder %s66, 0
      %s69 = sadd.s32 %s68, 1
      %s70 = scalar_select %p67, %s68, %s69
      %p73 = pneg %p67
      %p74 = scmp.eq.s32.totalorder %s32, 1
      %p75 = por %p73, %p74
      %p76 = scmp.ne.s32.totalorder %s68, %s71
      %p77 = scmp.eq.s32.totalorder %s32, 0
      %p78 = por %p76, %p77
      %p79 = scmp.ne.s32.totalorder %s68, %s71
      %p80 = scmp.eq.s32.totalorder %s37, 1
      %p81 = por %p79, %p80
      %p82 = scmp.ne.s32.totalorder %s71, %s72
      %p83 = scmp.eq.s32.totalorder %s37, 0
      %p84 = por %p82, %p83
      %p85 = scmp.ne.s32.totalorder %s71, %s72
      %p86 = scmp.eq.s32.totalorder %s38, 1
      %p87 = por %p85, %p86
      %p89 = scmp.ne.s32.totalorder %s72, %s88
      %p90 = scmp.eq.s32.totalorder %s38, 0
      %p91 = por %p89, %p90
      %s92 = ssub.s32 %s32, %s39
      %p93 = scmp.eq.s32.totalorder %s92, 0
      %s95 = sadd.s32 %s94, 1
      %s96 = scalar_select %p93, %s94, %s95
      %p99 = pneg %p93
      %p100 = scmp.eq.s32.totalorder %s32, 1
      %p101 = por %p99, %p100
      %p102 = scmp.ne.s32.totalorder %s94, %s97
      %p103 = scmp.eq.s32.totalorder %s32, 0
      %p104 = por %p102, %p103
      %p105 = scmp.ne.s32.totalorder %s94, %s97
      %p106 = scmp.eq.s32.totalorder %s37, 1
      %p107 = por %p105, %p106
      %p108 = scmp.ne.s32.totalorder %s97, %s98
      %p109 = scmp.eq.s32.totalorder %s37, 0
      %p110 = por %p108, %p109
      %p111 = scmp.ne.s32.totalorder %s97, %s98
      %p112 = scmp.eq.s32.totalorder %s38, 1
      %p113 = por %p111, %p112
      %p115 = scmp.ne.s32.totalorder %s98, %s114
      %p116 = scmp.eq.s32.totalorder %s38, 0
      %p117 = por %p115, %p116
      %s119 = sadd.s32 %s118, 1
      %p122 = scmp.eq.s32.totalorder %s32, 1
      %p123 = scmp.ne.s32.totalorder %s118, %s120
      %p124 = scmp.eq.s32.totalorder %s32, 0
      %p125 = por %p123, %p124
      %p126 = scmp.ne.s32.totalorder %s118, %s120
      %p127 = scmp.eq.s32.totalorder %s37, 1
      %p128 = por %p126, %p127
      %p129 = scmp.ne.s32.totalorder %s120, %s121
      %p130 = scmp.eq.s32.totalorder %s37, 0
      %p131 = por %p129, %p130
      %p132 = scmp.ne.s32.totalorder %s120, %s121
      %p133 = scmp.eq.s32.totalorder %s38, 1
      %p134 = por %p132, %p133
      %p136 = scmp.ne.s32.totalorder %s121, %s135
      %p137 = scmp.eq.s32.totalorder %s38, 0
      %p138 = por %p136, %p137
      %s140 = sadd.s32 %s139, 1
      %p143 = scmp.eq.s32.totalorder %s32, 1
      %p144 = scmp.ne.s32.totalorder %s139, %s141
      %p145 = scmp.eq.s32.totalorder %s32, 0
      %p146 = por %p144, %p145
      %p147 = scmp.ne.s32.totalorder %s139, %s141
      %p148 = scmp.eq.s32.totalorder %s37, 1
      %p149 = por %p147, %p148
      %p150 = scmp.ne.s32.totalorder %s141, %s142
      %p151 = scmp.eq.s32.totalorder %s37, 0
      %p152 = por %p150, %p151
      %p153 = scmp.ne.s32.totalorder %s141, %s142
      %p154 = scmp.eq.s32.totalorder %s38, 1
      %p155 = por %p153, %p154
      %p157 = scmp.ne.s32.totalorder %s142, %s156
      %p158 = scmp.eq.s32.totalorder %s38, 0
      %p159 = por %p157, %p158
      %s161 = sadd.s32 %s160, 1
      %p164 = scmp.eq.s32.totalorder %s32, 1
      %p165 = scmp.ne.s32.totalorder %s160, %s162
      %p166 = scmp.eq.s32.totalorder %s32, 0
      %p167 = por %p165, %p166
      %p168 = scmp.ne.s32.totalorder %s160, %s162
      %p169 = scmp.eq.s32.totalorder %s37, 1
      %p170 = por %p168, %p169
      %p171 = scmp.ne.s32.totalorder %s162, %s163
      %p172 = scmp.eq.s32.totalorder %s37, 0
      %p173 = por %p171, %p172
      %p174 = scmp.ne.s32.totalorder %s162, %s163
      %p175 = scmp.eq.s32.totalorder %s38, 1
      %p176 = por %p174, %p175
      %p178 = scmp.ne.s32.totalorder %s163, %s177
      %p179 = scmp.eq.s32.totalorder %s38, 0
      %p180 = por %p178, %p179
      %s182 = sadd.s32 %s181, 1
      %p185 = scmp.eq.s32.totalorder %s32, 1
      %p186 = scmp.ne.s32.totalorder %s181, %s183
      %p187 = scmp.eq.s32.totalorder %s32, 0
      %p188 = por %p186, %p187
      %p189 = scmp.ne.s32.totalorder %s181, %s183
      %p190 = scmp.eq.s32.totalorder %s37, 1
      %p191 = por %p189, %p190
      %p192 = scmp.ne.s32.totalorder %s183, %s184
      %p193 = scmp.eq.s32.totalorder %s37, 0
      %p194 = por %p192, %p193
      %p195 = scmp.ne.s32.totalorder %s183, %s184
      %p196 = scmp.eq.s32.totalorder %s38, 1
      %p197 = por %p195, %p196
      %p199 = scmp.ne.s32.totalorder %s184, %s198
      %p200 = scmp.eq.s32.totalorder %s38, 0
      %p201 = por %p199, %p200
      %s203 = sadd.s32 %s202, 1
      %p206 = scmp.eq.s32.totalorder %s32, 1
      %p207 = scmp.ne.s32.totalorder %s202, %s204
      %p208 = scmp.eq.s32.totalorder %s32, 0
      %p209 = por %p207, %p208
      %p210 = scmp.ne.s32.totalorder %s202, %s204
      %p211 = scmp.eq.s32.totalorder %s37, 1
      %p212 = por %p210, %p211
      %p213 = scmp.ne.s32.totalorder %s204, %s205
      %p214 = scmp.eq.s32.totalorder %s37, 0
      %p215 = por %p213, %p214
      %p216 = scmp.ne.s32.totalorder %s204, %s205
      %p217 = scmp.eq.s32.totalorder %s38, 1
      %p218 = por %p216, %p217
      %p220 = scmp.ne.s32.totalorder %s205, %s219
      %p221 = scmp.eq.s32.totalorder %s38, 0
      %p222 = por %p220, %p221
      %s224 = sadd.s32 %s223, 1
      %p227 = scmp.eq.s32.totalorder %s32, 1
      %p228 = scmp.ne.s32.totalorder %s223, %s225
      %p229 = scmp.eq.s32.totalorder %s32, 0
      %p230 = por %p228, %p229
      %p231 = scmp.ne.s32.totalorder %s223, %s225
      %p232 = scmp.eq.s32.totalorder %s37, 1
      %p233 = por %p231, %p232
      %p234 = scmp.ne.s32.totalorder %s225, %s226
      %p235 = scmp.eq.s32.totalorder %s37, 0
      %p236 = por %p234, %p235
      %p237 = scmp.ne.s32.totalorder %s225, %s226
      %p238 = scmp.eq.s32.totalorder %s38, 1
      %p239 = por %p237, %p238
      %p241 = scmp.ne.s32.totalorder %s226, %s240
      %p242 = scmp.eq.s32.totalorder %s38, 0
      %p243 = por %p241, %p242
      %s245 = sadd.s32 %s244, 1
      %p248 = scmp.eq.s32.totalorder %s32, 1
      %p249 = scmp.ne.s32.totalorder %s244, %s246
      %p250 = scmp.eq.s32.totalorder %s32, 0
      %p251 = por %p249, %p250
      %p252 = scmp.ne.s32.totalorder %s244, %s246
      %p253 = scmp.eq.s32.totalorder %s37, 1
      %p254 = por %p252, %p253
      %p255 = scmp.ne.s32.totalorder %s246, %s247
      %p256 = scmp.eq.s32.totalorder %s37, 0
      %p257 = por %p255, %p256
      %p258 = scmp.ne.s32.totalorder %s246, %s247
      %p259 = scmp.eq.s32.totalorder %s38, 1
      %p260 = por %p258, %p259
      %p262 = scmp.ne.s32.totalorder %s247, %s261
      %p263 = scmp.eq.s32.totalorder %s38, 0
      %p264 = por %p262, %p263
      %s266 = sadd.s32 %s265, 1
      %p269 = scmp.eq.s32.totalorder %s32, 1
      %p270 = scmp.ne.s32.totalorder %s265, %s267
      %p271 = scmp.eq.s32.totalorder %s32, 0
      %p272 = por %p270, %p271
      %p273 = scmp.ne.s32.totalorder %s265, %s267
      %p274 = scmp.eq.s32.totalorder %s37, 1
      %p275 = por %p273, %p274
      %p276 = scmp.ne.s32.totalorder %s267, %s268
      %p277 = scmp.eq.s32.totalorder %s37, 0
      %p278 = por %p276, %p277
      %p279 = scmp.ne.s32.totalorder %s267, %s268
      %p280 = scmp.eq.s32.totalorder %s38, 1
      %p281 = por %p279, %p280
      %p283 = scmp.ne.s32.totalorder %s268, %s282
      %p284 = scmp.eq.s32.totalorder %s38, 0
      %p285 = por %p283, %p284
      %s287 = sadd.s32 %s286, 1
      %p290 = scmp.eq.s32.totalorder %s32, 1
      %p291 = scmp.ne.s32.totalorder %s286, %s288
      %p292 = scmp.eq.s32.totalorder %s32, 0
      %p293 = por %p291, %p292
      %p294 = scmp.ne.s32.totalorder %s286, %s288
      %p295 = scmp.eq.s32.totalorder %s37, 1
      %p296 = por %p294, %p295
      %p297 = scmp.ne.s32.totalorder %s288, %s289
      %p298 = scmp.eq.s32.totalorder %s37, 0
      %p299 = por %p297, %p298
      %p300 = scmp.ne.s32.totalorder %s288, %s289
      %p301 = scmp.eq.s32.totalorder %s38, 1
      %p302 = por %p300, %p301
      %p304 = scmp.ne.s32.totalorder %s289, %s303
      %p305 = scmp.eq.s32.totalorder %s38, 0
      %p306 = por %p304, %p305
      %s308 = sadd.s32 %s307, 1
      %p311 = scmp.eq.s32.totalorder %s32, 1
      %p312 = scmp.ne.s32.totalorder %s307, %s309
      %p313 = scmp.eq.s32.totalorder %s32, 0
      %p314 = por %p312, %p313
      %p315 = scmp.ne.s32.totalorder %s307, %s309
      %p316 = scmp.eq.s32.totalorder %s37, 1
      %p317 = por %p315, %p316
      %p318 = scmp.ne.s32.totalorder %s309, %s310
      %p319 = scmp.eq.s32.totalorder %s37, 0
      %p320 = por %p318, %p319
      %p321 = scmp.ne.s32.totalorder %s309, %s310
      %p322 = scmp.eq.s32.totalorder %s38, 1
      %p323 = por %p321, %p322
      %p325 = scmp.ne.s32.totalorder %s310, %s324
      %p326 = scmp.eq.s32.totalorder %s38, 0
      %p327 = por %p325, %p326
      %s328 = ssub.s32 %s32, %s39
      %p329 = scmp.eq.s32.totalorder %s328, 0
      %s331 = sadd.s32 %s330, 1
      %s332 = scalar_select %p329, %s330, %s331
      %p335 = pneg %p329
      %p336 = scmp.eq.s32.totalorder %s32, 1
      %p337 = por %p335, %p336
      %p338 = scmp.ne.s32.totalorder %s330, %s333
      %p339 = scmp.eq.s32.totalorder %s32, 0
      %p340 = por %p338, %p339
      %p341 = scmp.ne.s32.totalorder %s330, %s333
      %p342 = scmp.eq.s32.totalorder %s37, 1
      %p343 = por %p341, %p342
      %p344 = scmp.ne.s32.totalorder %s333, %s334
      %p345 = scmp.eq.s32.totalorder %s37, 0
      %p346 = por %p344, %p345
      %p347 = scmp.ne.s32.totalorder %s333, %s334
      %p348 = scmp.eq.s32.totalorder %s38, 1
      %p349 = por %p347, %p348
      %p351 = scmp.ne.s32.totalorder %s334, %s350
      %p352 = scmp.eq.s32.totalorder %s38, 0
      %p353 = por %p351, %p352
      %p354 = scmp.le.s32.totalorder 1, %s32
      %p355 = scmp.lt.s32.totalorder %s32, 3
      %p356 = pnand %p354, %p355
      %p357 = pneg %p356
      // Predicated region
      $region9: #{tpu_custom_call.1} parent=5 // pred_check
        _
      $region10: #{tpu_custom_call.1} parent=5 // pred_check_branch
        %359 = sbr.rel (%p356) target = $region12
      $region11: #{tpu_custom_call.1} parent=5 // pred_region
        %s360 = ssub.s32 %s32, 1
        // Predicated region
        $region13: #{tpu_custom_call.1} parent=11 // pred_check
          %p361 = pneg %p131
        $region14: #{tpu_custom_call.1} parent=11 // pred_check_branch
          %363 = sbr.rel (%p361) target = $region16
        $region15: #{tpu_custom_call.1} parent=11 // pred_region
          %s365 = ssub.s32 4096, 4096
          %366 = vsyncadd [#allocation10], %s365
          %s367 = sshll.u32 [#allocation9], 4
          %s368 = int_to_ptr.vmem [resolvable:$true] %s367
          %373 = dma.hbm_to_vmem [thread:$0]  %s3, 4096, %s368, [#allocation10], 128, 128, 8
        $region16: #{tpu_custom_call.1} parent=11 // pred_fallthru
          _
        // Predicated region
        $region17: #{tpu_custom_call.1} parent=11 // pred_check
          %p374 = pneg %p152
        $region18: #{tpu_custom_call.1} parent=11 // pred_check_branch
          %376 = sbr.rel (%p374) target = $region20
        $region19: #{tpu_custom_call.1} parent=11 // pred_region
          _
        $region20: #{tpu_custom_call.1} parent=11 // pred_fallthru
          _
        // Predicated region
        $region21: #{tpu_custom_call.1} parent=11 // pred_check
          %p377 = pneg %p173
        $region22: #{tpu_custom_call.1} parent=11 // pred_check_branch
          %379 = sbr.rel (%p377) target = $region24
        $region23: #{tpu_custom_call.1} parent=11 // pred_region
          %s381 = ssub.s32 2048, 2048
          %382 = vsyncadd [#allocation10], %s381
          %s383 = sshll.u32 [#allocation11], 4
          %s384 = int_to_ptr.vmem [resolvable:$true] %s383
          %389 = dma.hbm_to_vmem [thread:$0]  %s5, 2048, %s384, [#allocation10], 128, 128, 8
        $region24: #{tpu_custom_call.1} parent=11 // pred_fallthru
          _
        // Predicated region
        $region25: #{tpu_custom_call.1} parent=11 // pred_check
          %p390 = pneg %p194
        $region26: #{tpu_custom_call.1} parent=11 // pred_check_branch
          %392 = sbr.rel (%p390) target = $region28
        $region27: #{tpu_custom_call.1} parent=11 // pred_region
          _
        $region28: #{tpu_custom_call.1} parent=11 // pred_fallthru
          _
        // Predicated region
        $region29: #{tpu_custom_call.1} parent=11 // pred_check
          %p393 = pneg %p215
        $region30: #{tpu_custom_call.1} parent=11 // pred_check_branch
          %395 = sbr.rel (%p393) target = $region32
        $region31: #{tpu_custom_call.1} parent=11 // pred_region
          %s397 = ssub.s32 4096, 4096
          %398 = vsyncadd [#allocation13], %s397
          %s399 = sshll.u32 [#allocation12], 4
          %s400 = int_to_ptr.vmem [resolvable:$true] %s399
          %405 = dma.hbm_to_vmem [thread:$0]  %s7, 4096, %s400, [#allocation13], 128, 128, 8
        $region32: #{tpu_custom_call.1} parent=11 // pred_fallthru
          _
        // Predicated region
        $region33: #{tpu_custom_call.1} parent=11 // pred_check
          %p406 = pneg %p236
        $region34: #{tpu_custom_call.1} parent=11 // pred_check_branch
          %408 = sbr.rel (%p406) target = $region36
        $region35: #{tpu_custom_call.1} parent=11 // pred_region
          _
        $region36: #{tpu_custom_call.1} parent=11 // pred_fallthru
          _
        // Predicated region
        $region37: #{tpu_custom_call.1} parent=11 // pred_check
          %p409 = pneg %p257
        $region38: #{tpu_custom_call.1} parent=11 // pred_check_branch
          %411 = sbr.rel (%p409) target = $region40
        $region39: #{tpu_custom_call.1} parent=11 // pred_region
          %s413 = ssub.s32 2048, 2048
          %414 = vsyncadd [#allocation13], %s413
          %s415 = sshll.u32 [#allocation14], 4
          %s416 = int_to_ptr.vmem [resolvable:$true] %s415
          %421 = dma.hbm_to_vmem [thread:$0]  %s9, 2048, %s416, [#allocation13], 128, 128, 8
        $region40: #{tpu_custom_call.1} parent=11 // pred_fallthru
          _
        // Predicated region
        $region41: #{tpu_custom_call.1} parent=11 // pred_check
          %p422 = pneg %p278
        $region42: #{tpu_custom_call.1} parent=11 // pred_check_branch
          %424 = sbr.rel (%p422) target = $region44
        $region43: #{tpu_custom_call.1} parent=11 // pred_region
          _
        $region44: #{tpu_custom_call.1} parent=11 // pred_fallthru
          _
        // Predicated region
        $region45: #{tpu_custom_call.1} parent=11 // pred_check
          %p425 = pneg %p299
        $region46: #{tpu_custom_call.1} parent=11 // pred_check_branch
          %427 = sbr.rel (%p425) target = $region48
        $region47: #{tpu_custom_call.1} parent=11 // pred_region
          _
        $region48: #{tpu_custom_call.1} parent=11 // pred_fallthru
          _
        // Predicated region
        $region49: #{tpu_custom_call.1} parent=11 // pred_check
          %p428 = pneg %p320
        $region50: #{tpu_custom_call.1} parent=11 // pred_check_branch
          %430 = sbr.rel (%p428) target = $region52
        $region51: #{tpu_custom_call.1} parent=11 // pred_region
          _
        $region52: #{tpu_custom_call.1} parent=11 // pred_fallthru
          _
      $region12: #{tpu_custom_call.1} parent=5 // pred_fallthru
        _
      %p431 = scmp.lt.s32.totalorder %s32, 2
      // Predicated region
      $region53: #{tpu_custom_call.1} parent=5 // pred_check
        %p432 = pneg %p431
      $region54: #{tpu_custom_call.1} parent=5 // pred_check_branch
        %434 = sbr.rel (%p432) target = $region56
      $region55: #{tpu_custom_call.1} parent=5 // pred_region
        // Predicated region
        $region57: #{tpu_custom_call.1} parent=55 // pred_check
          %p435 = pneg %p52
        $region58: #{tpu_custom_call.1} parent=55 // pred_check_branch
          %437 = sbr.rel (%p435) target = $region60
        $region59: #{tpu_custom_call.1} parent=55 // pred_region
          %s438 = sand.u32 %s42, 1
          %s439 = scalar_lea.sflag [#allocation4], %s438
          %s440 = sand.u32 %s42, 1
          %s441 = smul.addr %s440, 256
          %s442 = scalar_lea.vmem [#allocation3], %s441
          %s443 = smul.u32 32, %s32
          %s445 = ssub.s32 4096, 4096
          %446 = vsyncadd %s439, %s445
          %s447 = smul.addr %s443, 128
          %s448 = scalar_lea.hbm %s0, %s447
          %s449 = sshll.u32 %s442, 4
          %s450 = int_to_ptr.vmem [resolvable:$true] %s449
          %455 = dma.hbm_to_vmem [thread:$0]  %s448, 4096, %s450, %s439, 128, 128, 8
        $region60: #{tpu_custom_call.1} parent=55 // pred_fallthru
          _
        // Predicated region
        $region61: #{tpu_custom_call.1} parent=55 // pred_check
          %p456 = pneg %p78
        $region62: #{tpu_custom_call.1} parent=55 // pred_check_branch
          %458 = sbr.rel (%p456) target = $region64
        $region63: #{tpu_custom_call.1} parent=55 // pred_region
          %s459 = sand.u32 %s32, 1
          %s460 = scalar_lea.sflag [#allocation7], %s459
          %s461 = sand.u32 %s68, 1
          %s462 = smul.addr %s461, 256
          %s463 = scalar_lea.vmem [#allocation6], %s462
          %s464 = smul.u32 32, %s32
          %s466 = ssub.s32 4096, 4096
          %467 = vsyncadd %s460, %s466
          %s468 = smul.addr %s464, 128
          %s469 = scalar_lea.hbm %s1, %s468
          %s470 = sshll.u32 %s463, 4
          %s471 = int_to_ptr.vmem [resolvable:$true] %s470
          %476 = dma.hbm_to_vmem [thread:$0]  %s469, 4096, %s471, %s460, 128, 128, 8
        $region64: #{tpu_custom_call.1} parent=55 // pred_fallthru
          _
        // Predicated region
        $region65: #{tpu_custom_call.1} parent=55 // pred_check
          %p477 = pneg %p104
        $region66: #{tpu_custom_call.1} parent=55 // pred_check_branch
          %479 = sbr.rel (%p477) target = $region68
        $region67: #{tpu_custom_call.1} parent=55 // pred_region
          %s480 = sand.u32 %s32, 1
          %s481 = scalar_lea.sflag [#allocation7], %s480
          %s482 = sand.u32 %s94, 1
          %s483 = smul.addr %s482, 32
          %s484 = scalar_lea.vmem [#allocation8], %s483
          %s485 = smul.u32 4, %s32
          %s487 = ssub.s32 512, 512
          %488 = vsyncadd %s481, %s487
          %s489 = smul.addr %s485, 128
          %s490 = scalar_lea.hbm %s2, %s489
          %s491 = sshll.u32 %s484, 4
          %s492 = int_to_ptr.vmem [resolvable:$true] %s491
          %497 = dma.hbm_to_vmem [thread:$0]  %s490, 512, %s492, %s481, 128, 128, 8
        $region68: #{tpu_custom_call.1} parent=55 // pred_fallthru
          _
      $region56: #{tpu_custom_call.1} parent=5 // pred_fallthru
        _
      %p498 = scmp.le.s32.totalorder 1, %s32
      %p499 = scmp.lt.s32.totalorder %s32, 3
      %p500 = pnand %p498, %p499
      %p501 = pneg %p500
      // Predicated region
      $region69: #{tpu_custom_call.1} parent=5 // pred_check
        _
      $region70: #{tpu_custom_call.1} parent=5 // pred_check_branch
        %503 = sbr.rel (%p500) target = $region72
      $region71: #{tpu_custom_call.1} parent=5 // pred_region
        %s504 = ssub.s32 %s32, 1
        %s505 = sand.u32 %s45, 1
        %s506 = scalar_lea.sflag [#allocation4], %s505
        %s507 = sand.u32 %s45, 1
        %s508 = smul.addr %s507, 256
        %s509 = scalar_lea.vmem [#allocation3], %s508
        // Predicated region
        $region73: #{tpu_custom_call.1} parent=71 // pred_check
          %p510 = pneg %p58
        $region74: #{tpu_custom_call.1} parent=71 // pred_check_branch
          %512 = sbr.rel (%p510) target = $region76
        $region75: #{tpu_custom_call.1} parent=71 // pred_region
          %513 = dma.done %s506, 4096
        $region76: #{tpu_custom_call.1} parent=71 // pred_fallthru
          _
        %s514 = sand.u32 %s37, 1
        %s515 = scalar_lea.sflag [#allocation7], %s514
        %s516 = sand.u32 %s71, 1
        %s517 = smul.addr %s516, 256
        %s518 = scalar_lea.vmem [#allocation6], %s517
        // Predicated region
        $region77: #{tpu_custom_call.1} parent=71 // pred_check
          %p519 = pneg %p84
        $region78: #{tpu_custom_call.1} parent=71 // pred_check_branch
          %521 = sbr.rel (%p519) target = $region80
        $region79: #{tpu_custom_call.1} parent=71 // pred_region
          %522 = dma.done %s515, 4096
        $region80: #{tpu_custom_call.1} parent=71 // pred_fallthru
          _
        %s523 = sand.u32 %s37, 1
        %s524 = scalar_lea.sflag [#allocation7], %s523
        %s525 = sand.u32 %s97, 1
        %s526 = smul.addr %s525, 32
        %s527 = scalar_lea.vmem [#allocation8], %s526
        // Predicated region
        $region81: #{tpu_custom_call.1} parent=71 // pred_check
          %p528 = pneg %p110
        $region82: #{tpu_custom_call.1} parent=71 // pred_check_branch
          %530 = sbr.rel (%p528) target = $region84
        $region83: #{tpu_custom_call.1} parent=71 // pred_region
          %531 = dma.done %s524, 512
        $region84: #{tpu_custom_call.1} parent=71 // pred_fallthru
          _
        // Predicated region
        $region85: #{tpu_custom_call.1} parent=71 // pred_check
          %p532 = pneg %p131
        $region86: #{tpu_custom_call.1} parent=71 // pred_check_branch
          %534 = sbr.rel (%p532) target = $region88
        $region87: #{tpu_custom_call.1} parent=71 // pred_region
          %535 = dma.done [#allocation10], 4096
        $region88: #{tpu_custom_call.1} parent=71 // pred_fallthru
          _
        // Predicated region
        $region89: #{tpu_custom_call.1} parent=71 // pred_check
          %p536 = pneg %p173
        $region90: #{tpu_custom_call.1} parent=71 // pred_check_branch
          %538 = sbr.rel (%p536) target = $region92
        $region91: #{tpu_custom_call.1} parent=71 // pred_region
          %539 = dma.done [#allocation10], 2048
        $region92: #{tpu_custom_call.1} parent=71 // pred_fallthru
          _
        // Predicated region
        $region93: #{tpu_custom_call.1} parent=71 // pred_check
          %p540 = pneg %p215
        $region94: #{tpu_custom_call.1} parent=71 // pred_check_branch
          %542 = sbr.rel (%p540) target = $region96
        $region95: #{tpu_custom_call.1} parent=71 // pred_region
          %543 = dma.done [#allocation13], 4096
        $region96: #{tpu_custom_call.1} parent=71 // pred_fallthru
          _
        // Predicated region
        $region97: #{tpu_custom_call.1} parent=71 // pred_check
          %p544 = pneg %p257
        $region98: #{tpu_custom_call.1} parent=71 // pred_check_branch
          %546 = sbr.rel (%p544) target = $region100
        $region99: #{tpu_custom_call.1} parent=71 // pred_region
          %547 = dma.done [#allocation13], 2048
        $region100: #{tpu_custom_call.1} parent=71 // pred_fallthru
          _
        %s548 = sand.u32 %s45, 1
        %s549 = scalar_lea.sflag [#allocation4], %s548
        %s550 = sand.u32 %s45, 1
        %s551 = smul.addr %s550, 256
        %s552 = scalar_lea.vmem [#allocation3], %s551
        %p553 = pneg %p58
        %p554 = pneg %p55
        %s555 = sand.u32 %s37, 1
        %s556 = scalar_lea.sflag [#allocation7], %s555
        %s557 = sand.u32 %s71, 1
        %s558 = smul.addr %s557, 256
        %s559 = scalar_lea.vmem [#allocation6], %s558
        %p560 = pneg %p84
        %p561 = pneg %p81
        %s562 = sand.u32 %s37, 1
        %s563 = scalar_lea.sflag [#allocation7], %s562
        %s564 = sand.u32 %s97, 1
        %s565 = smul.addr %s564, 32
        %s566 = scalar_lea.vmem [#allocation8], %s565
        %p567 = pneg %p110
        %p568 = pneg %p107
        %p569 = pneg %p131
        %p570 = pneg %p128
        %p571 = pneg %p152
        %p572 = pneg %p149
        %p573 = pneg %p173
        %p574 = pneg %p170
        %p575 = pneg %p194
        %p576 = pneg %p191
        %p577 = pneg %p215
        %p578 = pneg %p212
        %p579 = pneg %p236
        %p580 = pneg %p233
        %p581 = pneg %p257
        %p582 = pneg %p254
        %p583 = pneg %p278
        %p584 = pneg %p275
        %p585 = pneg %p299
        %p586 = pneg %p296
        %p587 = pneg %p320
        %p588 = pneg %p317
        %p589 = pneg %p346
        %p590 = pneg %p343
        %s591 = sand.u32 %s333, 1
        %s592 = scalar_lea.sflag [#allocation5], %s591
        %s593 = sand.u32 %s333, 1
        %s594 = smul.addr %s593, 32
        %s595 = scalar_lea.vmem [#allocation15], %s594
        %s596 = smul.u32 32, %s37
        %s597 = smul.u32 32, %s37
        %s598 = smul.u32 4, %s37
        %s599 = smul.u32 4, %s37
        %v600 = vld [vmem:[%s509] sm:$0xff]
        %v601 = vld [vmem:[%s509 + $0x8] sm:$0xff]
        %v602 = vld [vmem:[%s509 + $0x10] sm:$0xff]
        %v603 = vld [vmem:[%s509 + $0x18] sm:$0xff]
        %v604 = vld [vmem:[%s509 + $0x20] sm:$0xff]
        %v605 = vld [vmem:[%s509 + $0x28] sm:$0xff]
        %v606 = vld [vmem:[%s509 + $0x30] sm:$0xff]
        %v607 = vld [vmem:[%s509 + $0x38] sm:$0xff]
        %v608 = vld [vmem:[%s509 + $0x40] sm:$0xff]
        %v609 = vld [vmem:[%s509 + $0x48] sm:$0xff]
        %v610 = vld [vmem:[%s509 + $0x50] sm:$0xff]
        %v611 = vld [vmem:[%s509 + $0x58] sm:$0xff]
        %v612 = vld [vmem:[%s509 + $0x60] sm:$0xff]
        %v613 = vld [vmem:[%s509 + $0x68] sm:$0xff]
        %v614 = vld [vmem:[%s509 + $0x70] sm:$0xff]
        %v615 = vld [vmem:[%s509 + $0x78] sm:$0xff]
        %v616 = vld [vmem:[%s509 + $0x80] sm:$0xff]
        %v617 = vld [vmem:[%s509 + $0x88] sm:$0xff]
        %v618 = vld [vmem:[%s509 + $0x90] sm:$0xff]
        %v619 = vld [vmem:[%s509 + $0x98] sm:$0xff]
        %v620 = vld [vmem:[%s509 + $0xa0] sm:$0xff]
        %v621 = vld [vmem:[%s509 + $0xa8] sm:$0xff]
        %v622 = vld [vmem:[%s509 + $0xb0] sm:$0xff]
        %v623 = vld [vmem:[%s509 + $0xb8] sm:$0xff]
        %v624 = vld [vmem:[%s509 + $0xc0] sm:$0xff]
        %v625 = vld [vmem:[%s509 + $0xc8] sm:$0xff]
        %v626 = vld [vmem:[%s509 + $0xd0] sm:$0xff]
        %v627 = vld [vmem:[%s509 + $0xd8] sm:$0xff]
        %v628 = vld [vmem:[%s509 + $0xe0] sm:$0xff]
        %v629 = vld [vmem:[%s509 + $0xe8] sm:$0xff]
        %v630 = vld [vmem:[%s509 + $0xf0] sm:$0xff]
        %v631 = vld [vmem:[%s509 + $0xf8] sm:$0xff]
        %v632 = vld [vmem:[%s518] sm:$0xff]
        %v633 = vld [vmem:[%s518 + $0x8] sm:$0xff]
        %v634 = vld [vmem:[%s518 + $0x10] sm:$0xff]
        %v635 = vld [vmem:[%s518 + $0x18] sm:$0xff]
        %v636 = vld [vmem:[%s518 + $0x20] sm:$0xff]
        %v637 = vld [vmem:[%s518 + $0x28] sm:$0xff]
        %v638 = vld [vmem:[%s518 + $0x30] sm:$0xff]
        %v639 = vld [vmem:[%s518 + $0x38] sm:$0xff]
        %v640 = vld [vmem:[%s518 + $0x40] sm:$0xff]
        %v641 = vld [vmem:[%s518 + $0x48] sm:$0xff]
        %v642 = vld [vmem:[%s518 + $0x50] sm:$0xff]
        %v643 = vld [vmem:[%s518 + $0x58] sm:$0xff]
        %v644 = vld [vmem:[%s518 + $0x60] sm:$0xff]
        %v645 = vld [vmem:[%s518 + $0x68] sm:$0xff]
        %v646 = vld [vmem:[%s518 + $0x70] sm:$0xff]
        %v647 = vld [vmem:[%s518 + $0x78] sm:$0xff]
        %v648 = vld [vmem:[%s518 + $0x80] sm:$0xff]
        %v649 = vld [vmem:[%s518 + $0x88] sm:$0xff]
        %v650 = vld [vmem:[%s518 + $0x90] sm:$0xff]
        %v651 = vld [vmem:[%s518 + $0x98] sm:$0xff]
        %v652 = vld [vmem:[%s518 + $0xa0] sm:$0xff]
        %v653 = vld [vmem:[%s518 + $0xa8] sm:$0xff]
        %v654 = vld [vmem:[%s518 + $0xb0] sm:$0xff]
        %v655 = vld [vmem:[%s518 + $0xb8] sm:$0xff]
        %v656 = vld [vmem:[%s518 + $0xc0] sm:$0xff]
        %v657 = vld [vmem:[%s518 + $0xc8] sm:$0xff]
        %v658 = vld [vmem:[%s518 + $0xd0] sm:$0xff]
        %v659 = vld [vmem:[%s518 + $0xd8] sm:$0xff]
        %v660 = vld [vmem:[%s518 + $0xe0] sm:$0xff]
        %v661 = vld [vmem:[%s518 + $0xe8] sm:$0xff]
        %v662 = vld [vmem:[%s518 + $0xf0] sm:$0xff]
        %v663 = vld [vmem:[%s518 + $0xf8] sm:$0xff]
        %v664 = vld [vmem:[%s527] sm:$0xff]
        %v665 = vld [vmem:[%s527 + $0x8] sm:$0xff]
        %v666 = vld [vmem:[%s527 + $0x10] sm:$0xff]
        %v667 = vld [vmem:[%s527 + $0x18] sm:$0xff]
        %v668 = vld [vmem:[#allocation9] sm:$0xff]
        %v669 = vld [vmem:[#allocation9 + $0x8] sm:$0xff]
        %v670 = vld [vmem:[#allocation9 + $0x10] sm:$0xff]
        %v671 = vld [vmem:[#allocation9 + $0x18] sm:$0xff]
        %v672 = vld [vmem:[#allocation9 + $0x20] sm:$0xff]
        %v673 = vld [vmem:[#allocation9 + $0x28] sm:$0xff]
        %v674 = vld [vmem:[#allocation9 + $0x30] sm:$0xff]
        %v675 = vld [vmem:[#allocation9 + $0x38] sm:$0xff]
        %v676 = vld [vmem:[#allocation9 + $0x40] sm:$0xff]
        %v677 = vld [vmem:[#allocation9 + $0x48] sm:$0xff]
        %v678 = vld [vmem:[#allocation9 + $0x50] sm:$0xff]
        %v679 = vld [vmem:[#allocation9 + $0x58] sm:$0xff]
        %v680 = vld [vmem:[#allocation9 + $0x60] sm:$0xff]
        %v681 = vld [vmem:[#allocation9 + $0x68] sm:$0xff]
        %v682 = vld [vmem:[#allocation9 + $0x70] sm:$0xff]
        %v683 = vld [vmem:[#allocation9 + $0x78] sm:$0xff]
        %v684 = vld [vmem:[#allocation9 + $0x80] sm:$0xff]
        %v685 = vld [vmem:[#allocation9 + $0x88] sm:$0xff]
        %v686 = vld [vmem:[#allocation9 + $0x90] sm:$0xff]
        %v687 = vld [vmem:[#allocation9 + $0x98] sm:$0xff]
        %v688 = vld [vmem:[#allocation9 + $0xa0] sm:$0xff]
        %v689 = vld [vmem:[#allocation9 + $0xa8] sm:$0xff]
        %v690 = vld [vmem:[#allocation9 + $0xb0] sm:$0xff]
        %v691 = vld [vmem:[#allocation9 + $0xb8] sm:$0xff]
        %v692 = vld [vmem:[#allocation9 + $0xc0] sm:$0xff]
        %v693 = vld [vmem:[#allocation9 + $0xc8] sm:$0xff]
        %v694 = vld [vmem:[#allocation9 + $0xd0] sm:$0xff]
        %v695 = vld [vmem:[#allocation9 + $0xd8] sm:$0xff]
        %v696 = vld [vmem:[#allocation9 + $0xe0] sm:$0xff]
        %v697 = vld [vmem:[#allocation9 + $0xe8] sm:$0xff]
        %v698 = vld [vmem:[#allocation9 + $0xf0] sm:$0xff]
        %v699 = vld [vmem:[#allocation9 + $0xf8] sm:$0xff]
        %v700 = vld [vmem:[%s4] sm:$0x1]
        %v702 = vlaneseq
        %v703 = vshrl.u32 %v702, 7
        %v704 = vsub.s32 0, %v703
        %v705 = vrot.slane %v700, %v704
        %707 = vmatprep.subr.mxu0 0.0
        %708 = vmatpush1.msra.mxu0 %v683
        %709 = vmatprep.subr.mxu0 0.0
        %710 = vmatpush1.msra.mxu0 %v682
        %711 = vmatprep.subr.mxu0 0.0
        %712 = vmatpush1.msra.mxu0 %v681
        %713 = vmatprep.subr.mxu0 0.0
        %714 = vmatpush1.msra.mxu0 %v680
        %715 = vmatprep.subr.mxu0 0.0
        %716 = vmatpush1.msra.mxu0 %v679
        %717 = vmatprep.subr.mxu0 0.0
        %718 = vmatpush1.msra.mxu0 %v678
        %719 = vmatprep.subr.mxu0 0.0
        %720 = vmatpush1.msra.mxu0 %v677
        %721 = vmatprep.subr.mxu0 0.0
        %722 = vmatpush1.msra.mxu0 %v676
        %723 = vmatprep.subr.mxu0 0.0
        %724 = vmatpush1.msra.mxu0 %v675
        %725 = vmatprep.subr.mxu0 0.0
        %726 = vmatpush1.msra.mxu0 %v674
        %727 = vmatprep.subr.mxu0 0.0
        %728 = vmatpush1.msra.mxu0 %v673
        %729 = vmatprep.subr.mxu0 0.0
        %730 = vmatpush1.msra.mxu0 %v672
        %731 = vmatprep.subr.mxu0 0.0
        %732 = vmatpush1.msra.mxu0 %v671
        %733 = vmatprep.subr.mxu0 0.0
        %734 = vmatpush1.msra.mxu0 %v670
        %735 = vmatprep.subr.mxu0 0.0
        %736 = vmatpush1.msra.mxu0 %v669
        %737 = vmatprep.subr.mxu0 0.0
        %738 = vmatpush1.msra.mxu0 %v668
        %739 = vmatprep.subr.mxu0 0.0
        %740 = vmatpush2.msra.mxu0 %v699
        %741 = vmatprep.subr.mxu0 0.0
        %742 = vmatpush2.msra.mxu0 %v698
        %743 = vmatprep.subr.mxu0 0.0
        %744 = vmatpush2.msra.mxu0 %v697
        %745 = vmatprep.subr.mxu0 0.0
        %746 = vmatpush2.msra.mxu0 %v696
        %747 = vmatprep.subr.mxu0 0.0
        %748 = vmatpush2.msra.mxu0 %v695
        %749 = vmatprep.subr.mxu0 0.0
        %750 = vmatpush2.msra.mxu0 %v694
        %751 = vmatprep.subr.mxu0 0.0
        %752 = vmatpush2.msra.mxu0 %v693
        %753 = vmatprep.subr.mxu0 0.0
        %754 = vmatpush2.msra.mxu0 %v692
        %755 = vmatprep.subr.mxu0 0.0
        %756 = vmatpush2.msra.mxu0 %v691
        %757 = vmatprep.subr.mxu0 0.0
        %758 = vmatpush2.msra.mxu0 %v690
        %759 = vmatprep.subr.mxu0 0.0
        %760 = vmatpush2.msra.mxu0 %v689
        %761 = vmatprep.subr.mxu0 0.0
        %762 = vmatpush2.msra.mxu0 %v688
        %763 = vmatprep.subr.mxu0 0.0
        %764 = vmatpush2.msra.mxu0 %v687
        %765 = vmatprep.subr.mxu0 0.0
        %766 = vmatpush2.msra.mxu0 %v686
        %767 = vmatprep.subr.mxu0 0.0
        %768 = vmatpush2.msra.mxu0 %v685
        %769 = vmatprep.subr.mxu0 0.0
        %770 = vmatpush2.msra.mxu0 %v684
        %771 = vmatprep.mubr.f32.mxu0 %v632
        %772 = vmatmul.mubr.f32.gmra.mxu0 %v600
        %v773 = vpop.f32.mrf.mxu0
        %v774 = vadd.f32 %v705, %v773
        %v775 = vpop.f32.mrf.mxu0
        %776 = vmatprep.mubr.f32.mxu0 %v633
        %777 = vmatmul.mubr.f32.gmra.mxu0 %v601
        %v778 = vpop.f32.mrf.mxu0
        %v779 = vadd.f32 %v705, %v778
        %v780 = vpop.f32.mrf.mxu0
        %781 = vmatprep.mubr.f32.mxu0 %v634
        %782 = vmatmul.mubr.f32.gmra.mxu0 %v602
        %v783 = vpop.f32.mrf.mxu0
        %v784 = vadd.f32 %v705, %v783
        %v785 = vpop.f32.mrf.mxu0
        %786 = vmatprep.mubr.f32.mxu0 %v635
        %787 = vmatmul.mubr.f32.gmra.mxu0 %v603
        %v788 = vpop.f32.mrf.mxu0
        %v789 = vadd.f32 %v705, %v788
        %v790 = vpop.f32.mrf.mxu0
        %791 = vmatprep.mubr.f32.mxu0 %v636
        %792 = vmatmul.mubr.f32.gmra.mxu0 %v604
        %v793 = vpop.f32.mrf.mxu0
        %v794 = vadd.f32 %v705, %v793
        %v795 = vpop.f32.mrf.mxu0
        %796 = vmatprep.mubr.f32.mxu0 %v637
        %797 = vmatmul.mubr.f32.gmra.mxu0 %v605
        %v798 = vpop.f32.mrf.mxu0
        %v799 = vadd.f32 %v705, %v798
        %v800 = vpop.f32.mrf.mxu0
        %801 = vmatprep.mubr.f32.mxu0 %v638
        %802 = vmatmul.mubr.f32.gmra.mxu0 %v606
        %v803 = vpop.f32.mrf.mxu0
        %v804 = vadd.f32 %v705, %v803
        %v805 = vpop.f32.mrf.mxu0
        %806 = vmatprep.mubr.f32.mxu0 %v639
        %807 = vmatmul.mubr.f32.gmra.mxu0 %v607
        %v808 = vpop.f32.mrf.mxu0
        %v809 = vadd.f32 %v705, %v808
        %v810 = vpop.f32.mrf.mxu0
        %811 = vmatprep.mubr.f32.mxu0 %v640
        %812 = vmatmul.mubr.f32.gmra.mxu0 %v608
        %v813 = vpop.f32.mrf.mxu0
        %v814 = vadd.f32 %v705, %v813
        %v815 = vpop.f32.mrf.mxu0
        %816 = vmatprep.mubr.f32.mxu0 %v641
        %817 = vmatmul.mubr.f32.gmra.mxu0 %v609
        %v818 = vpop.f32.mrf.mxu0
        %v819 = vadd.f32 %v705, %v818
        %v820 = vpop.f32.mrf.mxu0
        %821 = vmatprep.mubr.f32.mxu0 %v642
        %822 = vmatmul.mubr.f32.gmra.mxu0 %v610
        %v823 = vpop.f32.mrf.mxu0
        %v824 = vadd.f32 %v705, %v823
        %v825 = vpop.f32.mrf.mxu0
        %826 = vmatprep.mubr.f32.mxu0 %v643
        %827 = vmatmul.mubr.f32.gmra.mxu0 %v611
        %v828 = vpop.f32.mrf.mxu0
        %v829 = vadd.f32 %v705, %v828
        %v830 = vpop.f32.mrf.mxu0
        %831 = vmatprep.mubr.f32.mxu0 %v644
        %832 = vmatmul.mubr.f32.gmra.mxu0 %v612
        %v833 = vpop.f32.mrf.mxu0
        %v834 = vadd.f32 %v705, %v833
        %v835 = vpop.f32.mrf.mxu0
        %836 = vmatprep.mubr.f32.mxu0 %v645
        %837 = vmatmul.mubr.f32.gmra.mxu0 %v613
        %v838 = vpop.f32.mrf.mxu0
        %v839 = vadd.f32 %v705, %v838
        %v840 = vpop.f32.mrf.mxu0
        %841 = vmatprep.mubr.f32.mxu0 %v646
        %842 = vmatmul.mubr.f32.gmra.mxu0 %v614
        %v843 = vpop.f32.mrf.mxu0
        %v844 = vadd.f32 %v705, %v843
        %v845 = vpop.f32.mrf.mxu0
        %846 = vmatprep.mubr.f32.mxu0 %v647
        %847 = vmatmul.mubr.f32.gmra.mxu0 %v615
        %v848 = vpop.f32.mrf.mxu0
        %v849 = vadd.f32 %v705, %v848
        %v850 = vpop.f32.mrf.mxu0
        %851 = vmatprep.mubr.f32.mxu0 %v648
        %852 = vmatmul.mubr.f32.gmra.mxu0 %v616
        %v853 = vpop.f32.mrf.mxu0
        %v854 = vadd.f32 %v705, %v853
        %v855 = vpop.f32.mrf.mxu0
        %856 = vmatprep.mubr.f32.mxu0 %v649
        %857 = vmatmul.mubr.f32.gmra.mxu0 %v617
        %v858 = vpop.f32.mrf.mxu0
        %v859 = vadd.f32 %v705, %v858
        %v860 = vpop.f32.mrf.mxu0
        %861 = vmatprep.mubr.f32.mxu0 %v650
        %862 = vmatmul.mubr.f32.gmra.mxu0 %v618
        %v863 = vpop.f32.mrf.mxu0
        %v864 = vadd.f32 %v705, %v863
        %v865 = vpop.f32.mrf.mxu0
        %866 = vmatprep.mubr.f32.mxu0 %v651
        %867 = vmatmul.mubr.f32.gmra.mxu0 %v619
        %v868 = vpop.f32.mrf.mxu0
        %v869 = vadd.f32 %v705, %v868
        %v870 = vpop.f32.mrf.mxu0
        %871 = vmatprep.mubr.f32.mxu0 %v652
        %872 = vmatmul.mubr.f32.gmra.mxu0 %v620
        %v873 = vpop.f32.mrf.mxu0
        %v874 = vadd.f32 %v705, %v873
        %v875 = vpop.f32.mrf.mxu0
        %876 = vmatprep.mubr.f32.mxu0 %v653
        %877 = vmatmul.mubr.f32.gmra.mxu0 %v621
        %v878 = vpop.f32.mrf.mxu0
        %v879 = vadd.f32 %v705, %v878
        %v880 = vpop.f32.mrf.mxu0
        %881 = vmatprep.mubr.f32.mxu0 %v654
        %882 = vmatmul.mubr.f32.gmra.mxu0 %v622
        %v883 = vpop.f32.mrf.mxu0
        %v884 = vadd.f32 %v705, %v883
        %v885 = vpop.f32.mrf.mxu0
        %886 = vmatprep.mubr.f32.mxu0 %v655
        %887 = vmatmul.mubr.f32.gmra.mxu0 %v623
        %v888 = vpop.f32.mrf.mxu0
        %v889 = vadd.f32 %v705, %v888
        %v890 = vpop.f32.mrf.mxu0
        %891 = vmatprep.mubr.f32.mxu0 %v656
        %892 = vmatmul.mubr.f32.gmra.mxu0 %v624
        %v893 = vpop.f32.mrf.mxu0
        %v894 = vadd.f32 %v705, %v893
        %v895 = vpop.f32.mrf.mxu0
        %896 = vmatprep.mubr.f32.mxu0 %v657
        %897 = vmatmul.mubr.f32.gmra.mxu0 %v625
        %v898 = vpop.f32.mrf.mxu0
        %v899 = vadd.f32 %v705, %v898
        %v900 = vpop.f32.mrf.mxu0
        %901 = vmatprep.mubr.f32.mxu0 %v658
        %902 = vmatmul.mubr.f32.gmra.mxu0 %v626
        %v903 = vpop.f32.mrf.mxu0
        %v904 = vadd.f32 %v705, %v903
        %v905 = vpop.f32.mrf.mxu0
        %906 = vmatprep.mubr.f32.mxu0 %v659
        %907 = vmatmul.mubr.f32.gmra.mxu0 %v627
        %v908 = vpop.f32.mrf.mxu0
        %v909 = vadd.f32 %v705, %v908
        %v910 = vpop.f32.mrf.mxu0
        %911 = vmatprep.mubr.f32.mxu0 %v660
        %912 = vmatmul.mubr.f32.gmra.mxu0 %v628
        %v913 = vpop.f32.mrf.mxu0
        %v914 = vadd.f32 %v705, %v913
        %v915 = vpop.f32.mrf.mxu0
        %916 = vmatprep.mubr.f32.mxu0 %v661
        %917 = vmatmul.mubr.f32.gmra.mxu0 %v629
        %v918 = vpop.f32.mrf.mxu0
        %v919 = vadd.f32 %v705, %v918
        %v920 = vpop.f32.mrf.mxu0
        %921 = vmatprep.mubr.f32.mxu0 %v662
        %922 = vmatmul.mubr.f32.gmra.mxu0 %v630
        %v923 = vpop.f32.mrf.mxu0
        %v924 = vadd.f32 %v705, %v923
        %v925 = vpop.f32.mrf.mxu0
        %926 = vmatprep.mubr.f32.mxu0 %v663
        %927 = vmatmul.mubr.f32.gmra.mxu0 %v631
        %v928 = vpop.f32.mrf.mxu0
        %v929 = vadd.f32 %v705, %v928
        %v930 = vpop.f32.mrf.mxu0
        %931 = vdwg.mxu0
        %v932 = vmax.f32 %v774, 0.0
        %v933 = vmax.f32 %v779, 0.0
        %v934 = vmax.f32 %v784, 0.0
        %v935 = vmax.f32 %v789, 0.0
        %v936 = vmax.f32 %v794, 0.0
        %v937 = vmax.f32 %v799, 0.0
        %v938 = vmax.f32 %v804, 0.0
        %v939 = vmax.f32 %v809, 0.0
        %v940 = vmax.f32 %v814, 0.0
        %v941 = vmax.f32 %v819, 0.0
        %v942 = vmax.f32 %v824, 0.0
        %v943 = vmax.f32 %v829, 0.0
        %v944 = vmax.f32 %v834, 0.0
        %v945 = vmax.f32 %v839, 0.0
        %v946 = vmax.f32 %v844, 0.0
        %v947 = vmax.f32 %v849, 0.0
        %v948 = vmax.f32 %v854, 0.0
        %v949 = vmax.f32 %v859, 0.0
        %v950 = vmax.f32 %v864, 0.0
        %v951 = vmax.f32 %v869, 0.0
        %v952 = vmax.f32 %v874, 0.0
        %v953 = vmax.f32 %v879, 0.0
        %v954 = vmax.f32 %v884, 0.0
        %v955 = vmax.f32 %v889, 0.0
        %v956 = vmax.f32 %v894, 0.0
        %v957 = vmax.f32 %v899, 0.0
        %v958 = vmax.f32 %v904, 0.0
        %v959 = vmax.f32 %v909, 0.0
        %v960 = vmax.f32 %v914, 0.0
        %v961 = vmax.f32 %v919, 0.0
        %v962 = vmax.f32 %v924, 0.0
        %v963 = vmax.f32 %v929, 0.0
        %v964 = vld [vmem:[#allocation11] sm:$0xff]
        %v965 = vld [vmem:[#allocation11 + $0x8] sm:$0xff]
        %v966 = vld [vmem:[#allocation11 + $0x10] sm:$0xff]
        %v967 = vld [vmem:[#allocation11 + $0x18] sm:$0xff]
        %v968 = vld [vmem:[#allocation11 + $0x20] sm:$0xff]
        %v969 = vld [vmem:[#allocation11 + $0x28] sm:$0xff]
        %v970 = vld [vmem:[#allocation11 + $0x30] sm:$0xff]
        %v971 = vld [vmem:[#allocation11 + $0x38] sm:$0xff]
        %v972 = vld [vmem:[#allocation11 + $0x40] sm:$0xff]
        %v973 = vld [vmem:[#allocation11 + $0x48] sm:$0xff]
        %v974 = vld [vmem:[#allocation11 + $0x50] sm:$0xff]
        %v975 = vld [vmem:[#allocation11 + $0x58] sm:$0xff]
        %v976 = vld [vmem:[#allocation11 + $0x60] sm:$0xff]
        %v977 = vld [vmem:[#allocation11 + $0x68] sm:$0xff]
        %v978 = vld [vmem:[#allocation11 + $0x70] sm:$0xff]
        %v979 = vld [vmem:[#allocation11 + $0x78] sm:$0xff]
        %v980 = vld [vmem:[%s6] sm:$0x1]
        %v982 = vlaneseq
        %v983 = vshrl.u32 %v982, 7
        %v984 = vsub.s32 0, %v983
        %v985 = vrot.slane %v980, %v984
        %987 = vmatprep.subr.mxu0 0.0
        %988 = vmatpush1.msra.mxu0 %v979
        %989 = vmatprep.subr.mxu0 0.0
        %990 = vmatpush1.msra.mxu0 %v978
        %991 = vmatprep.subr.mxu0 0.0
        %992 = vmatpush1.msra.mxu0 %v977
        %993 = vmatprep.subr.mxu0 0.0
        %994 = vmatpush1.msra.mxu0 %v976
        %995 = vmatprep.subr.mxu0 0.0
        %996 = vmatpush1.msra.mxu0 %v975
        %997 = vmatprep.subr.mxu0 0.0
        %998 = vmatpush1.msra.mxu0 %v974
        %999 = vmatprep.subr.mxu0 0.0
        %1000 = vmatpush1.msra.mxu0 %v973
        %1001 = vmatprep.subr.mxu0 0.0
        %1002 = vmatpush1.msra.mxu0 %v972
        %1003 = vmatprep.subr.mxu0 0.0
        %1004 = vmatpush1.msra.mxu0 %v971
        %1005 = vmatprep.subr.mxu0 0.0
        %1006 = vmatpush1.msra.mxu0 %v970
        %1007 = vmatprep.subr.mxu0 0.0
        %1008 = vmatpush1.msra.mxu0 %v969
        %1009 = vmatprep.subr.mxu0 0.0
        %1010 = vmatpush1.msra.mxu0 %v968
        %1011 = vmatprep.subr.mxu0 0.0
        %1012 = vmatpush1.msra.mxu0 %v967
        %1013 = vmatprep.subr.mxu0 0.0
        %1014 = vmatpush1.msra.mxu0 %v966
        %1015 = vmatprep.subr.mxu0 0.0
        %1016 = vmatpush1.msra.mxu0 %v965
        %1017 = vmatprep.subr.mxu0 0.0
        %1018 = vmatpush1.msra.mxu0 %v964
        %1019 = vmatprep.subr.mxu0 0.0
        %1020 = vmatpush2.msra.mxu0 0.0
        %1021 = vmatprep.subr.mxu0 0.0
        %1022 = vmatpush2.msra.mxu0 0.0
        %1023 = vmatprep.subr.mxu0 0.0
        %1024 = vmatpush2.msra.mxu0 0.0
        %1025 = vmatprep.subr.mxu0 0.0
        %1026 = vmatpush2.msra.mxu0 0.0
        %1027 = vmatprep.subr.mxu0 0.0
        %1028 = vmatpush2.msra.mxu0 0.0
        %1029 = vmatprep.subr.mxu0 0.0
        %1030 = vmatpush2.msra.mxu0 0.0
        %1031 = vmatprep.subr.mxu0 0.0
        %1032 = vmatpush2.msra.mxu0 0.0
        %1033 = vmatprep.subr.mxu0 0.0
        %1034 = vmatpush2.msra.mxu0 0.0
        %1035 = vmatprep.subr.mxu0 0.0
        %1036 = vmatpush2.msra.mxu0 0.0
        %1037 = vmatprep.subr.mxu0 0.0
        %1038 = vmatpush2.msra.mxu0 0.0
        %1039 = vmatprep.subr.mxu0 0.0
        %1040 = vmatpush2.msra.mxu0 0.0
        %1041 = vmatprep.subr.mxu0 0.0
        %1042 = vmatpush2.msra.mxu0 0.0
        %1043 = vmatprep.subr.mxu0 0.0
        %1044 = vmatpush2.msra.mxu0 0.0
        %1045 = vmatprep.subr.mxu0 0.0
        %1046 = vmatpush2.msra.mxu0 0.0
        %1047 = vmatprep.subr.mxu0 0.0
        %1048 = vmatpush2.msra.mxu0 0.0
        %1049 = vmatprep.subr.mxu0 0.0
        %1050 = vmatpush2.msra.mxu0 0.0
        %1051 = vmatprep.mubr.f32.mxu0 0.0
        %1052 = vmatmul.mubr.f32.gmra.mxu0 %v932
        %v1053 = vpop.f32.mrf.mxu0
        %v1054 = vadd.f32 %v985, %v1053
        %v1055 = vpop.f32.mrf.mxu0
        %1056 = vmatprep.mubr.f32.mxu0 0.0
        %1057 = vmatmul.mubr.f32.gmra.mxu0 %v933
        %v1058 = vpop.f32.mrf.mxu0
        %v1059 = vadd.f32 %v985, %v1058
        %v1060 = vpop.f32.mrf.mxu0
        %1061 = vmatprep.mubr.f32.mxu0 0.0
        %1062 = vmatmul.mubr.f32.gmra.mxu0 %v934
        %v1063 = vpop.f32.mrf.mxu0
        %v1064 = vadd.f32 %v985, %v1063
        %v1065 = vpop.f32.mrf.mxu0
        %1066 = vmatprep.mubr.f32.mxu0 0.0
        %1067 = vmatmul.mubr.f32.gmra.mxu0 %v935
        %v1068 = vpop.f32.mrf.mxu0
        %v1069 = vadd.f32 %v985, %v1068
        %v1070 = vpop.f32.mrf.mxu0
        %1071 = vmatprep.mubr.f32.mxu0 0.0
        %1072 = vmatmul.mubr.f32.gmra.mxu0 %v936
        %v1073 = vpop.f32.mrf.mxu0
        %v1074 = vadd.f32 %v985, %v1073
        %v1075 = vpop.f32.mrf.mxu0
        %1076 = vmatprep.mubr.f32.mxu0 0.0
        %1077 = vmatmul.mubr.f32.gmra.mxu0 %v937
        %v1078 = vpop.f32.mrf.mxu0
        %v1079 = vadd.f32 %v985, %v1078
        %v1080 = vpop.f32.mrf.mxu0
        %1081 = vmatprep.mubr.f32.mxu0 0.0
        %1082 = vmatmul.mubr.f32.gmra.mxu0 %v938
        %v1083 = vpop.f32.mrf.mxu0
        %v1084 = vadd.f32 %v985, %v1083
        %v1085 = vpop.f32.mrf.mxu0
        %1086 = vmatprep.mubr.f32.mxu0 0.0
        %1087 = vmatmul.mubr.f32.gmra.mxu0 %v939
        %v1088 = vpop.f32.mrf.mxu0
        %v1089 = vadd.f32 %v985, %v1088
        %v1090 = vpop.f32.mrf.mxu0
        %1091 = vmatprep.mubr.f32.mxu0 0.0
        %1092 = vmatmul.mubr.f32.gmra.mxu0 %v940
        %v1093 = vpop.f32.mrf.mxu0
        %v1094 = vadd.f32 %v985, %v1093
        %v1095 = vpop.f32.mrf.mxu0
        %1096 = vmatprep.mubr.f32.mxu0 0.0
        %1097 = vmatmul.mubr.f32.gmra.mxu0 %v941
        %v1098 = vpop.f32.mrf.mxu0
        %v1099 = vadd.f32 %v985, %v1098
        %v1100 = vpop.f32.mrf.mxu0
        %1101 = vmatprep.mubr.f32.mxu0 0.0
        %1102 = vmatmul.mubr.f32.gmra.mxu0 %v942
        %v1103 = vpop.f32.mrf.mxu0
        %v1104 = vadd.f32 %v985, %v1103
        %v1105 = vpop.f32.mrf.mxu0
        %1106 = vmatprep.mubr.f32.mxu0 0.0
        %1107 = vmatmul.mubr.f32.gmra.mxu0 %v943
        %v1108 = vpop.f32.mrf.mxu0
        %v1109 = vadd.f32 %v985, %v1108
        %v1110 = vpop.f32.mrf.mxu0
        %1111 = vmatprep.mubr.f32.mxu0 0.0
        %1112 = vmatmul.mubr.f32.gmra.mxu0 %v944
        %v1113 = vpop.f32.mrf.mxu0
        %v1114 = vadd.f32 %v985, %v1113
        %v1115 = vpop.f32.mrf.mxu0
        %1116 = vmatprep.mubr.f32.mxu0 0.0
        %1117 = vmatmul.mubr.f32.gmra.mxu0 %v945
        %v1118 = vpop.f32.mrf.mxu0
        %v1119 = vadd.f32 %v985, %v1118
        %v1120 = vpop.f32.mrf.mxu0
        %1121 = vmatprep.mubr.f32.mxu0 0.0
        %1122 = vmatmul.mubr.f32.gmra.mxu0 %v946
        %v1123 = vpop.f32.mrf.mxu0
        %v1124 = vadd.f32 %v985, %v1123
        %v1125 = vpop.f32.mrf.mxu0
        %1126 = vmatprep.mubr.f32.mxu0 0.0
        %1127 = vmatmul.mubr.f32.gmra.mxu0 %v947
        %v1128 = vpop.f32.mrf.mxu0
        %v1129 = vadd.f32 %v985, %v1128
        %v1130 = vpop.f32.mrf.mxu0
        %1131 = vmatprep.mubr.f32.mxu0 0.0
        %1132 = vmatmul.mubr.f32.gmra.mxu0 %v948
        %v1133 = vpop.f32.mrf.mxu0
        %v1134 = vadd.f32 %v985, %v1133
        %v1135 = vpop.f32.mrf.mxu0
        %1136 = vmatprep.mubr.f32.mxu0 0.0
        %1137 = vmatmul.mubr.f32.gmra.mxu0 %v949
        %v1138 = vpop.f32.mrf.mxu0
        %v1139 = vadd.f32 %v985, %v1138
        %v1140 = vpop.f32.mrf.mxu0
        %1141 = vmatprep.mubr.f32.mxu0 0.0
        %1142 = vmatmul.mubr.f32.gmra.mxu0 %v950
        %v1143 = vpop.f32.mrf.mxu0
        %v1144 = vadd.f32 %v985, %v1143
        %v1145 = vpop.f32.mrf.mxu0
        %1146 = vmatprep.mubr.f32.mxu0 0.0
        %1147 = vmatmul.mubr.f32.gmra.mxu0 %v951
        %v1148 = vpop.f32.mrf.mxu0
        %v1149 = vadd.f32 %v985, %v1148
        %v1150 = vpop.f32.mrf.mxu0
        %1151 = vmatprep.mubr.f32.mxu0 0.0
        %1152 = vmatmul.mubr.f32.gmra.mxu0 %v952
        %v1153 = vpop.f32.mrf.mxu0
        %v1154 = vadd.f32 %v985, %v1153
        %v1155 = vpop.f32.mrf.mxu0
        %1156 = vmatprep.mubr.f32.mxu0 0.0
        %1157 = vmatmul.mubr.f32.gmra.mxu0 %v953
        %v1158 = vpop.f32.mrf.mxu0
        %v1159 = vadd.f32 %v985, %v1158
        %v1160 = vpop.f32.mrf.mxu0
        %1161 = vmatprep.mubr.f32.mxu0 0.0
        %1162 = vmatmul.mubr.f32.gmra.mxu0 %v954
        %v1163 = vpop.f32.mrf.mxu0
        %v1164 = vadd.f32 %v985, %v1163
        %v1165 = vpop.f32.mrf.mxu0
        %1166 = vmatprep.mubr.f32.mxu0 0.0
        %1167 = vmatmul.mubr.f32.gmra.mxu0 %v955
        %v1168 = vpop.f32.mrf.mxu0
        %v1169 = vadd.f32 %v985, %v1168
        %v1170 = vpop.f32.mrf.mxu0
        %1171 = vmatprep.mubr.f32.mxu0 0.0
        %1172 = vmatmul.mubr.f32.gmra.mxu0 %v956
        %v1173 = vpop.f32.mrf.mxu0
        %v1174 = vadd.f32 %v985, %v1173
        %v1175 = vpop.f32.mrf.mxu0
        %1176 = vmatprep.mubr.f32.mxu0 0.0
        %1177 = vmatmul.mubr.f32.gmra.mxu0 %v957
        %v1178 = vpop.f32.mrf.mxu0
        %v1179 = vadd.f32 %v985, %v1178
        %v1180 = vpop.f32.mrf.mxu0
        %1181 = vmatprep.mubr.f32.mxu0 0.0
        %1182 = vmatmul.mubr.f32.gmra.mxu0 %v958
        %v1183 = vpop.f32.mrf.mxu0
        %v1184 = vadd.f32 %v985, %v1183
        %v1185 = vpop.f32.mrf.mxu0
        %1186 = vmatprep.mubr.f32.mxu0 0.0
        %1187 = vmatmul.mubr.f32.gmra.mxu0 %v959
        %v1188 = vpop.f32.mrf.mxu0
        %v1189 = vadd.f32 %v985, %v1188
        %v1190 = vpop.f32.mrf.mxu0
        %1191 = vmatprep.mubr.f32.mxu0 0.0
        %1192 = vmatmul.mubr.f32.gmra.mxu0 %v960
        %v1193 = vpop.f32.mrf.mxu0
        %v1194 = vadd.f32 %v985, %v1193
        %v1195 = vpop.f32.mrf.mxu0
        %1196 = vmatprep.mubr.f32.mxu0 0.0
        %1197 = vmatmul.mubr.f32.gmra.mxu0 %v961
        %v1198 = vpop.f32.mrf.mxu0
        %v1199 = vadd.f32 %v985, %v1198
        %v1200 = vpop.f32.mrf.mxu0
        %1201 = vmatprep.mubr.f32.mxu0 0.0
        %1202 = vmatmul.mubr.f32.gmra.mxu0 %v962
        %v1203 = vpop.f32.mrf.mxu0
        %v1204 = vadd.f32 %v985, %v1203
        %v1205 = vpop.f32.mrf.mxu0
        %1206 = vmatprep.mubr.f32.mxu0 0.0
        %1207 = vmatmul.mubr.f32.gmra.mxu0 %v963
        %v1208 = vpop.f32.mrf.mxu0
        %v1209 = vadd.f32 %v985, %v1208
        %v1210 = vpop.f32.mrf.mxu0
        %1211 = vdwg.mxu0
        %v1212 = vmax.f32 %v1054, 0.0
        %v1213 = vmax.f32 %v1059, 0.0
        %v1214 = vmax.f32 %v1064, 0.0
        %v1215 = vmax.f32 %v1069, 0.0
        %v1216 = vmax.f32 %v1074, 0.0
        %v1217 = vmax.f32 %v1079, 0.0
        %v1218 = vmax.f32 %v1084, 0.0
        %v1219 = vmax.f32 %v1089, 0.0
        %v1220 = vmax.f32 %v1094, 0.0
        %v1221 = vmax.f32 %v1099, 0.0
        %v1222 = vmax.f32 %v1104, 0.0
        %v1223 = vmax.f32 %v1109, 0.0
        %v1224 = vmax.f32 %v1114, 0.0
        %v1225 = vmax.f32 %v1119, 0.0
        %v1226 = vmax.f32 %v1124, 0.0
        %v1227 = vmax.f32 %v1129, 0.0
        %v1228 = vmax.f32 %v1134, 0.0
        %v1229 = vmax.f32 %v1139, 0.0
        %v1230 = vmax.f32 %v1144, 0.0
        %v1231 = vmax.f32 %v1149, 0.0
        %v1232 = vmax.f32 %v1154, 0.0
        %v1233 = vmax.f32 %v1159, 0.0
        %v1234 = vmax.f32 %v1164, 0.0
        %v1235 = vmax.f32 %v1169, 0.0
        %v1236 = vmax.f32 %v1174, 0.0
        %v1237 = vmax.f32 %v1179, 0.0
        %v1238 = vmax.f32 %v1184, 0.0
        %v1239 = vmax.f32 %v1189, 0.0
        %v1240 = vmax.f32 %v1194, 0.0
        %v1241 = vmax.f32 %v1199, 0.0
        %v1242 = vmax.f32 %v1204, 0.0
        %v1243 = vmax.f32 %v1209, 0.0
        %v1248 = vcombine.high %v664, %v664
        %v1250 = vunpack.c.l.s4 1966171168
        %v1251 = vunpack.c.0.s8 %v1250
        %v1252 = vlaneseq
        %v1253 = vshrl.u32 %v1252, 7
        %v1254 = vsub.s32 %v1251, %v1253
        %v1255 = vrot.slane %v664, %v1254
        %v1257 = vunpack.c.l.s4 1966171168
        %v1258 = vunpack.c.0.s8 %v1257
        %v1259 = vlaneseq
        %v1260 = vshrl.u32 %v1259, 7
        %v1261 = vsub.s32 %v1258, %v1260
        %v1262 = vrot.slane %v1248, %v1261
        %v1263 = vcombine.high %v1255, %v1255
        %v1264 = vcombine.high %v1262, %v1262
        %v1266 = vunpack.c.l.s4 1966171168
        %v1267 = vunpack.c.0.s8 %v1266
        %v1268 = vlaneseq
        %v1269 = vshrl.u32 %v1268, 7
        %v1270 = vsub.s32 %v1267, %v1269
        %v1271 = vrot.slane %v1255, %v1270
        %v1273 = vunpack.c.l.s4 1966171168
        %v1274 = vunpack.c.0.s8 %v1273
        %v1275 = vlaneseq
        %v1276 = vshrl.u32 %v1275, 7
        %v1277 = vsub.s32 %v1274, %v1276
        %v1278 = vrot.slane %v1262, %v1277
        %v1280 = vunpack.c.l.s4 1966171168
        %v1281 = vunpack.c.0.s8 %v1280
        %v1282 = vlaneseq
        %v1283 = vshrl.u32 %v1282, 7
        %v1284 = vsub.s32 %v1281, %v1283
        %v1285 = vrot.slane %v1263, %v1284
        %v1287 = vunpack.c.l.s4 1966171168
        %v1288 = vunpack.c.0.s8 %v1287
        %v1289 = vlaneseq
        %v1290 = vshrl.u32 %v1289, 7
        %v1291 = vsub.s32 %v1288, %v1290
        %v1292 = vrot.slane %v1264, %v1291
        %v1293 = vcombine.high %v1271, %v1271
        %v1294 = vcombine.high %v1278, %v1278
        %v1295 = vcombine.high %v1285, %v1285
        %v1296 = vcombine.high %v1292, %v1292
        %v1297 = vcombine.high %v665, %v665
        %v1299 = vunpack.c.l.s4 1966171168
        %v1300 = vunpack.c.0.s8 %v1299
        %v1301 = vlaneseq
        %v1302 = vshrl.u32 %v1301, 7
        %v1303 = vsub.s32 %v1300, %v1302
        %v1304 = vrot.slane %v665, %v1303
        %v1306 = vunpack.c.l.s4 1966171168
        %v1307 = vunpack.c.0.s8 %v1306
        %v1308 = vlaneseq
        %v1309 = vshrl.u32 %v1308, 7
        %v1310 = vsub.s32 %v1307, %v1309
        %v1311 = vrot.slane %v1297, %v1310
        %v1312 = vcombine.high %v1304, %v1304
        %v1313 = vcombine.high %v1311, %v1311
        %v1315 = vunpack.c.l.s4 1966171168
        %v1316 = vunpack.c.0.s8 %v1315
        %v1317 = vlaneseq
        %v1318 = vshrl.u32 %v1317, 7
        %v1319 = vsub.s32 %v1316, %v1318
        %v1320 = vrot.slane %v1304, %v1319
        %v1322 = vunpack.c.l.s4 1966171168
        %v1323 = vunpack.c.0.s8 %v1322
        %v1324 = vlaneseq
        %v1325 = vshrl.u32 %v1324, 7
        %v1326 = vsub.s32 %v1323, %v1325
        %v1327 = vrot.slane %v1311, %v1326
        %v1329 = vunpack.c.l.s4 1966171168
        %v1330 = vunpack.c.0.s8 %v1329
        %v1331 = vlaneseq
        %v1332 = vshrl.u32 %v1331, 7
        %v1333 = vsub.s32 %v1330, %v1332
        %v1334 = vrot.slane %v1312, %v1333
        %v1336 = vunpack.c.l.s4 1966171168
        %v1337 = vunpack.c.0.s8 %v1336
        %v1338 = vlaneseq
        %v1339 = vshrl.u32 %v1338, 7
        %v1340 = vsub.s32 %v1337, %v1339
        %v1341 = vrot.slane %v1313, %v1340
        %v1342 = vcombine.high %v1320, %v1320
        %v1343 = vcombine.high %v1327, %v1327
        %v1344 = vcombine.high %v1334, %v1334
        %v1345 = vcombine.high %v1341, %v1341
        %v1346 = vcombine.high %v666, %v666
        %v1348 = vunpack.c.l.s4 1966171168
        %v1349 = vunpack.c.0.s8 %v1348
        %v1350 = vlaneseq
        %v1351 = vshrl.u32 %v1350, 7
        %v1352 = vsub.s32 %v1349, %v1351
        %v1353 = vrot.slane %v666, %v1352
        %v1355 = vunpack.c.l.s4 1966171168
        %v1356 = vunpack.c.0.s8 %v1355
        %v1357 = vlaneseq
        %v1358 = vshrl.u32 %v1357, 7
        %v1359 = vsub.s32 %v1356, %v1358
        %v1360 = vrot.slane %v1346, %v1359
        %v1361 = vcombine.high %v1353, %v1353
        %v1362 = vcombine.high %v1360, %v1360
        %v1364 = vunpack.c.l.s4 1966171168
        %v1365 = vunpack.c.0.s8 %v1364
        %v1366 = vlaneseq
        %v1367 = vshrl.u32 %v1366, 7
        %v1368 = vsub.s32 %v1365, %v1367
        %v1369 = vrot.slane %v1353, %v1368
        %v1371 = vunpack.c.l.s4 1966171168
        %v1372 = vunpack.c.0.s8 %v1371
        %v1373 = vlaneseq
        %v1374 = vshrl.u32 %v1373, 7
        %v1375 = vsub.s32 %v1372, %v1374
        %v1376 = vrot.slane %v1360, %v1375
        %v1378 = vunpack.c.l.s4 1966171168
        %v1379 = vunpack.c.0.s8 %v1378
        %v1380 = vlaneseq
        %v1381 = vshrl.u32 %v1380, 7
        %v1382 = vsub.s32 %v1379, %v1381
        %v1383 = vrot.slane %v1361, %v1382
        %v1385 = vunpack.c.l.s4 1966171168
        %v1386 = vunpack.c.0.s8 %v1385
        %v1387 = vlaneseq
        %v1388 = vshrl.u32 %v1387, 7
        %v1389 = vsub.s32 %v1386, %v1388
        %v1390 = vrot.slane %v1362, %v1389
        %v1391 = vcombine.high %v1369, %v1369
        %v1392 = vcombine.high %v1376, %v1376
        %v1393 = vcombine.high %v1383, %v1383
        %v1394 = vcombine.high %v1390, %v1390
        %v1395 = vcombine.high %v667, %v667
        %v1397 = vunpack.c.l.s4 1966171168
        %v1398 = vunpack.c.0.s8 %v1397
        %v1399 = vlaneseq
        %v1400 = vshrl.u32 %v1399, 7
        %v1401 = vsub.s32 %v1398, %v1400
        %v1402 = vrot.slane %v667, %v1401
        %v1404 = vunpack.c.l.s4 1966171168
        %v1405 = vunpack.c.0.s8 %v1404
        %v1406 = vlaneseq
        %v1407 = vshrl.u32 %v1406, 7
        %v1408 = vsub.s32 %v1405, %v1407
        %v1409 = vrot.slane %v1395, %v1408
        %v1410 = vcombine.high %v1402, %v1402
        %v1411 = vcombine.high %v1409, %v1409
        %v1413 = vunpack.c.l.s4 1966171168
        %v1414 = vunpack.c.0.s8 %v1413
        %v1415 = vlaneseq
        %v1416 = vshrl.u32 %v1415, 7
        %v1417 = vsub.s32 %v1414, %v1416
        %v1418 = vrot.slane %v1402, %v1417
        %v1420 = vunpack.c.l.s4 1966171168
        %v1421 = vunpack.c.0.s8 %v1420
        %v1422 = vlaneseq
        %v1423 = vshrl.u32 %v1422, 7
        %v1424 = vsub.s32 %v1421, %v1423
        %v1425 = vrot.slane %v1409, %v1424
        %v1427 = vunpack.c.l.s4 1966171168
        %v1428 = vunpack.c.0.s8 %v1427
        %v1429 = vlaneseq
        %v1430 = vshrl.u32 %v1429, 7
        %v1431 = vsub.s32 %v1428, %v1430
        %v1432 = vrot.slane %v1410, %v1431
        %v1434 = vunpack.c.l.s4 1966171168
        %v1435 = vunpack.c.0.s8 %v1434
        %v1436 = vlaneseq
        %v1437 = vshrl.u32 %v1436, 7
        %v1438 = vsub.s32 %v1435, %v1437
        %v1439 = vrot.slane %v1411, %v1438
        %v1440 = vcombine.high %v1418, %v1418
        %v1441 = vcombine.high %v1425, %v1425
        %v1442 = vcombine.high %v1432, %v1432
        %v1443 = vcombine.high %v1439, %v1439
        %v1444 = vlaneseq
        %v1445 = vshrl.u32 %v1444, 7
        %v1446 = vsub.s32 0, %v1445
        %v1447 = vrot.slane %v1271, %v1446
        %v1448 = vlaneseq
        %v1449 = vshrl.u32 %v1448, 7
        %v1450 = vsub.s32 0, %v1449
        %v1451 = vrot.slane %v1285, %v1450
        %v1452 = vlaneseq
        %v1453 = vshrl.u32 %v1452, 7
        %v1454 = vsub.s32 0, %v1453
        %v1455 = vrot.slane %v1293, %v1454
        %v1456 = vlaneseq
        %v1457 = vshrl.u32 %v1456, 7
        %v1458 = vsub.s32 0, %v1457
        %v1459 = vrot.slane %v1295, %v1458
        %v1460 = vlaneseq
        %v1461 = vshrl.u32 %v1460, 7
        %v1462 = vsub.s32 0, %v1461
        %v1463 = vrot.slane %v1278, %v1462
        %v1464 = vlaneseq
        %v1465 = vshrl.u32 %v1464, 7
        %v1466 = vsub.s32 0, %v1465
        %v1467 = vrot.slane %v1292, %v1466
        %v1468 = vlaneseq
        %v1469 = vshrl.u32 %v1468, 7
        %v1470 = vsub.s32 0, %v1469
        %v1471 = vrot.slane %v1294, %v1470
        %v1472 = vlaneseq
        %v1473 = vshrl.u32 %v1472, 7
        %v1474 = vsub.s32 0, %v1473
        %v1475 = vrot.slane %v1296, %v1474
        %v1476 = vlaneseq
        %v1477 = vshrl.u32 %v1476, 7
        %v1478 = vsub.s32 0, %v1477
        %v1479 = vrot.slane %v1320, %v1478
        %v1480 = vlaneseq
        %v1481 = vshrl.u32 %v1480, 7
        %v1482 = vsub.s32 0, %v1481
        %v1483 = vrot.slane %v1334, %v1482
        %v1484 = vlaneseq
        %v1485 = vshrl.u32 %v1484, 7
        %v1486 = vsub.s32 0, %v1485
        %v1487 = vrot.slane %v1342, %v1486
        %v1488 = vlaneseq
        %v1489 = vshrl.u32 %v1488, 7
        %v1490 = vsub.s32 0, %v1489
        %v1491 = vrot.slane %v1344, %v1490
        %v1492 = vlaneseq
        %v1493 = vshrl.u32 %v1492, 7
        %v1494 = vsub.s32 0, %v1493
        %v1495 = vrot.slane %v1327, %v1494
        %v1496 = vlaneseq
        %v1497 = vshrl.u32 %v1496, 7
        %v1498 = vsub.s32 0, %v1497
        %v1499 = vrot.slane %v1341, %v1498
        %v1500 = vlaneseq
        %v1501 = vshrl.u32 %v1500, 7
        %v1502 = vsub.s32 0, %v1501
        %v1503 = vrot.slane %v1343, %v1502
        %v1504 = vlaneseq
        %v1505 = vshrl.u32 %v1504, 7
        %v1506 = vsub.s32 0, %v1505
        %v1507 = vrot.slane %v1345, %v1506
        %v1508 = vlaneseq
        %v1509 = vshrl.u32 %v1508, 7
        %v1510 = vsub.s32 0, %v1509
        %v1511 = vrot.slane %v1369, %v1510
        %v1512 = vlaneseq
        %v1513 = vshrl.u32 %v1512, 7
        %v1514 = vsub.s32 0, %v1513
        %v1515 = vrot.slane %v1383, %v1514
        %v1516 = vlaneseq
        %v1517 = vshrl.u32 %v1516, 7
        %v1518 = vsub.s32 0, %v1517
        %v1519 = vrot.slane %v1391, %v1518
        %v1520 = vlaneseq
        %v1521 = vshrl.u32 %v1520, 7
        %v1522 = vsub.s32 0, %v1521
        %v1523 = vrot.slane %v1393, %v1522
        %v1524 = vlaneseq
        %v1525 = vshrl.u32 %v1524, 7
        %v1526 = vsub.s32 0, %v1525
        %v1527 = vrot.slane %v1376, %v1526
        %v1528 = vlaneseq
        %v1529 = vshrl.u32 %v1528, 7
        %v1530 = vsub.s32 0, %v1529
        %v1531 = vrot.slane %v1390, %v1530
        %v1532 = vlaneseq
        %v1533 = vshrl.u32 %v1532, 7
        %v1534 = vsub.s32 0, %v1533
        %v1535 = vrot.slane %v1392, %v1534
        %v1536 = vlaneseq
        %v1537 = vshrl.u32 %v1536, 7
        %v1538 = vsub.s32 0, %v1537
        %v1539 = vrot.slane %v1394, %v1538
        %v1540 = vlaneseq
        %v1541 = vshrl.u32 %v1540, 7
        %v1542 = vsub.s32 0, %v1541
        %v1543 = vrot.slane %v1418, %v1542
        %v1544 = vlaneseq
        %v1545 = vshrl.u32 %v1544, 7
        %v1546 = vsub.s32 0, %v1545
        %v1547 = vrot.slane %v1432, %v1546
        %v1548 = vlaneseq
        %v1549 = vshrl.u32 %v1548, 7
        %v1550 = vsub.s32 0, %v1549
        %v1551 = vrot.slane %v1440, %v1550
        %v1552 = vlaneseq
        %v1553 = vshrl.u32 %v1552, 7
        %v1554 = vsub.s32 0, %v1553
        %v1555 = vrot.slane %v1442, %v1554
        %v1556 = vlaneseq
        %v1557 = vshrl.u32 %v1556, 7
        %v1558 = vsub.s32 0, %v1557
        %v1559 = vrot.slane %v1425, %v1558
        %v1560 = vlaneseq
        %v1561 = vshrl.u32 %v1560, 7
        %v1562 = vsub.s32 0, %v1561
        %v1563 = vrot.slane %v1439, %v1562
        %v1564 = vlaneseq
        %v1565 = vshrl.u32 %v1564, 7
        %v1566 = vsub.s32 0, %v1565
        %v1567 = vrot.slane %v1441, %v1566
        %v1568 = vlaneseq
        %v1569 = vshrl.u32 %v1568, 7
        %v1570 = vsub.s32 0, %v1569
        %v1571 = vrot.slane %v1443, %v1570
        %v1604 = vld [vmem:[#allocation12] sm:$0xff]
        %v1605 = vld [vmem:[#allocation12 + $0x8] sm:$0xff]
        %v1606 = vld [vmem:[#allocation12 + $0x10] sm:$0xff]
        %v1607 = vld [vmem:[#allocation12 + $0x18] sm:$0xff]
        %v1608 = vld [vmem:[#allocation12 + $0x20] sm:$0xff]
        %v1609 = vld [vmem:[#allocation12 + $0x28] sm:$0xff]
        %v1610 = vld [vmem:[#allocation12 + $0x30] sm:$0xff]
        %v1611 = vld [vmem:[#allocation12 + $0x38] sm:$0xff]
        %v1612 = vld [vmem:[#allocation12 + $0x40] sm:$0xff]
        %v1613 = vld [vmem:[#allocation12 + $0x48] sm:$0xff]
        %v1614 = vld [vmem:[#allocation12 + $0x50] sm:$0xff]
        %v1615 = vld [vmem:[#allocation12 + $0x58] sm:$0xff]
        %v1616 = vld [vmem:[#allocation12 + $0x60] sm:$0xff]
        %v1617 = vld [vmem:[#allocation12 + $0x68] sm:$0xff]
        %v1618 = vld [vmem:[#allocation12 + $0x70] sm:$0xff]
        %v1619 = vld [vmem:[#allocation12 + $0x78] sm:$0xff]
        %v1620 = vld [vmem:[#allocation12 + $0x80] sm:$0xff]
        %v1621 = vld [vmem:[#allocation12 + $0x88] sm:$0xff]
        %v1622 = vld [vmem:[#allocation12 + $0x90] sm:$0xff]
        %v1623 = vld [vmem:[#allocation12 + $0x98] sm:$0xff]
        %v1624 = vld [vmem:[#allocation12 + $0xa0] sm:$0xff]
        %v1625 = vld [vmem:[#allocation12 + $0xa8] sm:$0xff]
        %v1626 = vld [vmem:[#allocation12 + $0xb0] sm:$0xff]
        %v1627 = vld [vmem:[#allocation12 + $0xb8] sm:$0xff]
        %v1628 = vld [vmem:[#allocation12 + $0xc0] sm:$0xff]
        %v1629 = vld [vmem:[#allocation12 + $0xc8] sm:$0xff]
        %v1630 = vld [vmem:[#allocation12 + $0xd0] sm:$0xff]
        %v1631 = vld [vmem:[#allocation12 + $0xd8] sm:$0xff]
        %v1632 = vld [vmem:[#allocation12 + $0xe0] sm:$0xff]
        %v1633 = vld [vmem:[#allocation12 + $0xe8] sm:$0xff]
        %v1634 = vld [vmem:[#allocation12 + $0xf0] sm:$0xff]
        %v1635 = vld [vmem:[#allocation12 + $0xf8] sm:$0xff]
        %v1636 = vld [vmem:[%s8] sm:$0x1]
        %v1638 = vlaneseq
        %v1639 = vshrl.u32 %v1638, 7
        %v1640 = vsub.s32 0, %v1639
        %v1641 = vrot.slane %v1636, %v1640
        %1643 = vmatprep.subr.mxu0 0.0
        %1644 = vmatpush1.msra.mxu0 %v1619
        %1645 = vmatprep.subr.mxu0 0.0
        %1646 = vmatpush1.msra.mxu0 %v1618
        %1647 = vmatprep.subr.mxu0 0.0
        %1648 = vmatpush1.msra.mxu0 %v1617
        %1649 = vmatprep.subr.mxu0 0.0
        %1650 = vmatpush1.msra.mxu0 %v1616
        %1651 = vmatprep.subr.mxu0 0.0
        %1652 = vmatpush1.msra.mxu0 %v1615
        %1653 = vmatprep.subr.mxu0 0.0
        %1654 = vmatpush1.msra.mxu0 %v1614
        %1655 = vmatprep.subr.mxu0 0.0
        %1656 = vmatpush1.msra.mxu0 %v1613
        %1657 = vmatprep.subr.mxu0 0.0
        %1658 = vmatpush1.msra.mxu0 %v1612
        %1659 = vmatprep.subr.mxu0 0.0
        %1660 = vmatpush1.msra.mxu0 %v1611
        %1661 = vmatprep.subr.mxu0 0.0
        %1662 = vmatpush1.msra.mxu0 %v1610
        %1663 = vmatprep.subr.mxu0 0.0
        %1664 = vmatpush1.msra.mxu0 %v1609
        %1665 = vmatprep.subr.mxu0 0.0
        %1666 = vmatpush1.msra.mxu0 %v1608
        %1667 = vmatprep.subr.mxu0 0.0
        %1668 = vmatpush1.msra.mxu0 %v1607
        %1669 = vmatprep.subr.mxu0 0.0
        %1670 = vmatpush1.msra.mxu0 %v1606
        %1671 = vmatprep.subr.mxu0 0.0
        %1672 = vmatpush1.msra.mxu0 %v1605
        %1673 = vmatprep.subr.mxu0 0.0
        %1674 = vmatpush1.msra.mxu0 %v1604
        %1675 = vmatprep.subr.mxu0 0.0
        %1676 = vmatpush2.msra.mxu0 %v1635
        %1677 = vmatprep.subr.mxu0 0.0
        %1678 = vmatpush2.msra.mxu0 %v1634
        %1679 = vmatprep.subr.mxu0 0.0
        %1680 = vmatpush2.msra.mxu0 %v1633
        %1681 = vmatprep.subr.mxu0 0.0
        %1682 = vmatpush2.msra.mxu0 %v1632
        %1683 = vmatprep.subr.mxu0 0.0
        %1684 = vmatpush2.msra.mxu0 %v1631
        %1685 = vmatprep.subr.mxu0 0.0
        %1686 = vmatpush2.msra.mxu0 %v1630
        %1687 = vmatprep.subr.mxu0 0.0
        %1688 = vmatpush2.msra.mxu0 %v1629
        %1689 = vmatprep.subr.mxu0 0.0
        %1690 = vmatpush2.msra.mxu0 %v1628
        %1691 = vmatprep.subr.mxu0 0.0
        %1692 = vmatpush2.msra.mxu0 %v1627
        %1693 = vmatprep.subr.mxu0 0.0
        %1694 = vmatpush2.msra.mxu0 %v1626
        %1695 = vmatprep.subr.mxu0 0.0
        %1696 = vmatpush2.msra.mxu0 %v1625
        %1697 = vmatprep.subr.mxu0 0.0
        %1698 = vmatpush2.msra.mxu0 %v1624
        %1699 = vmatprep.subr.mxu0 0.0
        %1700 = vmatpush2.msra.mxu0 %v1623
        %1701 = vmatprep.subr.mxu0 0.0
        %1702 = vmatpush2.msra.mxu0 %v1622
        %1703 = vmatprep.subr.mxu0 0.0
        %1704 = vmatpush2.msra.mxu0 %v1621
        %1705 = vmatprep.subr.mxu0 0.0
        %1706 = vmatpush2.msra.mxu0 %v1620
        %1707 = vmatprep.mubr.f32.mxu0 %v1447
        %1708 = vmatmul.mubr.f32.gmra.mxu0 %v1212
        %v1709 = vpop.f32.mrf.mxu0
        %v1710 = vadd.f32 %v1641, %v1709
        %v1711 = vpop.f32.mrf.mxu0
        %1712 = vmatprep.mubr.f32.mxu0 %v1451
        %1713 = vmatmul.mubr.f32.gmra.mxu0 %v1213
        %v1714 = vpop.f32.mrf.mxu0
        %v1715 = vadd.f32 %v1641, %v1714
        %v1716 = vpop.f32.mrf.mxu0
        %1717 = vmatprep.mubr.f32.mxu0 %v1455
        %1718 = vmatmul.mubr.f32.gmra.mxu0 %v1214
        %v1719 = vpop.f32.mrf.mxu0
        %v1720 = vadd.f32 %v1641, %v1719
        %v1721 = vpop.f32.mrf.mxu0
        %1722 = vmatprep.mubr.f32.mxu0 %v1459
        %1723 = vmatmul.mubr.f32.gmra.mxu0 %v1215
        %v1724 = vpop.f32.mrf.mxu0
        %v1725 = vadd.f32 %v1641, %v1724
        %v1726 = vpop.f32.mrf.mxu0
        %1727 = vmatprep.mubr.f32.mxu0 %v1463
        %1728 = vmatmul.mubr.f32.gmra.mxu0 %v1216
        %v1729 = vpop.f32.mrf.mxu0
        %v1730 = vadd.f32 %v1641, %v1729
        %v1731 = vpop.f32.mrf.mxu0
        %1732 = vmatprep.mubr.f32.mxu0 %v1467
        %1733 = vmatmul.mubr.f32.gmra.mxu0 %v1217
        %v1734 = vpop.f32.mrf.mxu0
        %v1735 = vadd.f32 %v1641, %v1734
        %v1736 = vpop.f32.mrf.mxu0
        %1737 = vmatprep.mubr.f32.mxu0 %v1471
        %1738 = vmatmul.mubr.f32.gmra.mxu0 %v1218
        %v1739 = vpop.f32.mrf.mxu0
        %v1740 = vadd.f32 %v1641, %v1739
        %v1741 = vpop.f32.mrf.mxu0
        %1742 = vmatprep.mubr.f32.mxu0 %v1475
        %1743 = vmatmul.mubr.f32.gmra.mxu0 %v1219
        %v1744 = vpop.f32.mrf.mxu0
        %v1745 = vadd.f32 %v1641, %v1744
        %v1746 = vpop.f32.mrf.mxu0
        %1747 = vmatprep.mubr.f32.mxu0 %v1479
        %1748 = vmatmul.mubr.f32.gmra.mxu0 %v1220
        %v1749 = vpop.f32.mrf.mxu0
        %v1750 = vadd.f32 %v1641, %v1749
        %v1751 = vpop.f32.mrf.mxu0
        %1752 = vmatprep.mubr.f32.mxu0 %v1483
        %1753 = vmatmul.mubr.f32.gmra.mxu0 %v1221
        %v1754 = vpop.f32.mrf.mxu0
        %v1755 = vadd.f32 %v1641, %v1754
        %v1756 = vpop.f32.mrf.mxu0
        %1757 = vmatprep.mubr.f32.mxu0 %v1487
        %1758 = vmatmul.mubr.f32.gmra.mxu0 %v1222
        %v1759 = vpop.f32.mrf.mxu0
        %v1760 = vadd.f32 %v1641, %v1759
        %v1761 = vpop.f32.mrf.mxu0
        %1762 = vmatprep.mubr.f32.mxu0 %v1491
        %1763 = vmatmul.mubr.f32.gmra.mxu0 %v1223
        %v1764 = vpop.f32.mrf.mxu0
        %v1765 = vadd.f32 %v1641, %v1764
        %v1766 = vpop.f32.mrf.mxu0
        %1767 = vmatprep.mubr.f32.mxu0 %v1495
        %1768 = vmatmul.mubr.f32.gmra.mxu0 %v1224
        %v1769 = vpop.f32.mrf.mxu0
        %v1770 = vadd.f32 %v1641, %v1769
        %v1771 = vpop.f32.mrf.mxu0
        %1772 = vmatprep.mubr.f32.mxu0 %v1499
        %1773 = vmatmul.mubr.f32.gmra.mxu0 %v1225
        %v1774 = vpop.f32.mrf.mxu0
        %v1775 = vadd.f32 %v1641, %v1774
        %v1776 = vpop.f32.mrf.mxu0
        %1777 = vmatprep.mubr.f32.mxu0 %v1503
        %1778 = vmatmul.mubr.f32.gmra.mxu0 %v1226
        %v1779 = vpop.f32.mrf.mxu0
        %v1780 = vadd.f32 %v1641, %v1779
        %v1781 = vpop.f32.mrf.mxu0
        %1782 = vmatprep.mubr.f32.mxu0 %v1507
        %1783 = vmatmul.mubr.f32.gmra.mxu0 %v1227
        %v1784 = vpop.f32.mrf.mxu0
        %v1785 = vadd.f32 %v1641, %v1784
        %v1786 = vpop.f32.mrf.mxu0
        %1787 = vmatprep.mubr.f32.mxu0 %v1511
        %1788 = vmatmul.mubr.f32.gmra.mxu0 %v1228
        %v1789 = vpop.f32.mrf.mxu0
        %v1790 = vadd.f32 %v1641, %v1789
        %v1791 = vpop.f32.mrf.mxu0
        %1792 = vmatprep.mubr.f32.mxu0 %v1515
        %1793 = vmatmul.mubr.f32.gmra.mxu0 %v1229
        %v1794 = vpop.f32.mrf.mxu0
        %v1795 = vadd.f32 %v1641, %v1794
        %v1796 = vpop.f32.mrf.mxu0
        %1797 = vmatprep.mubr.f32.mxu0 %v1519
        %1798 = vmatmul.mubr.f32.gmra.mxu0 %v1230
        %v1799 = vpop.f32.mrf.mxu0
        %v1800 = vadd.f32 %v1641, %v1799
        %v1801 = vpop.f32.mrf.mxu0
        %1802 = vmatprep.mubr.f32.mxu0 %v1523
        %1803 = vmatmul.mubr.f32.gmra.mxu0 %v1231
        %v1804 = vpop.f32.mrf.mxu0
        %v1805 = vadd.f32 %v1641, %v1804
        %v1806 = vpop.f32.mrf.mxu0
        %1807 = vmatprep.mubr.f32.mxu0 %v1527
        %1808 = vmatmul.mubr.f32.gmra.mxu0 %v1232
        %v1809 = vpop.f32.mrf.mxu0
        %v1810 = vadd.f32 %v1641, %v1809
        %v1811 = vpop.f32.mrf.mxu0
        %1812 = vmatprep.mubr.f32.mxu0 %v1531
        %1813 = vmatmul.mubr.f32.gmra.mxu0 %v1233
        %v1814 = vpop.f32.mrf.mxu0
        %v1815 = vadd.f32 %v1641, %v1814
        %v1816 = vpop.f32.mrf.mxu0
        %1817 = vmatprep.mubr.f32.mxu0 %v1535
        %1818 = vmatmul.mubr.f32.gmra.mxu0 %v1234
        %v1819 = vpop.f32.mrf.mxu0
        %v1820 = vadd.f32 %v1641, %v1819
        %v1821 = vpop.f32.mrf.mxu0
        %1822 = vmatprep.mubr.f32.mxu0 %v1539
        %1823 = vmatmul.mubr.f32.gmra.mxu0 %v1235
        %v1824 = vpop.f32.mrf.mxu0
        %v1825 = vadd.f32 %v1641, %v1824
        %v1826 = vpop.f32.mrf.mxu0
        %1827 = vmatprep.mubr.f32.mxu0 %v1543
        %1828 = vmatmul.mubr.f32.gmra.mxu0 %v1236
        %v1829 = vpop.f32.mrf.mxu0
        %v1830 = vadd.f32 %v1641, %v1829
        %v1831 = vpop.f32.mrf.mxu0
        %1832 = vmatprep.mubr.f32.mxu0 %v1547
        %1833 = vmatmul.mubr.f32.gmra.mxu0 %v1237
        %v1834 = vpop.f32.mrf.mxu0
        %v1835 = vadd.f32 %v1641, %v1834
        %v1836 = vpop.f32.mrf.mxu0
        %1837 = vmatprep.mubr.f32.mxu0 %v1551
        %1838 = vmatmul.mubr.f32.gmra.mxu0 %v1238
        %v1839 = vpop.f32.mrf.mxu0
        %v1840 = vadd.f32 %v1641, %v1839
        %v1841 = vpop.f32.mrf.mxu0
        %1842 = vmatprep.mubr.f32.mxu0 %v1555
        %1843 = vmatmul.mubr.f32.gmra.mxu0 %v1239
        %v1844 = vpop.f32.mrf.mxu0
        %v1845 = vadd.f32 %v1641, %v1844
        %v1846 = vpop.f32.mrf.mxu0
        %1847 = vmatprep.mubr.f32.mxu0 %v1559
        %1848 = vmatmul.mubr.f32.gmra.mxu0 %v1240
        %v1849 = vpop.f32.mrf.mxu0
        %v1850 = vadd.f32 %v1641, %v1849
        %v1851 = vpop.f32.mrf.mxu0
        %1852 = vmatprep.mubr.f32.mxu0 %v1563
        %1853 = vmatmul.mubr.f32.gmra.mxu0 %v1241
        %v1854 = vpop.f32.mrf.mxu0
        %v1855 = vadd.f32 %v1641, %v1854
        %v1856 = vpop.f32.mrf.mxu0
        %1857 = vmatprep.mubr.f32.mxu0 %v1567
        %1858 = vmatmul.mubr.f32.gmra.mxu0 %v1242
        %v1859 = vpop.f32.mrf.mxu0
        %v1860 = vadd.f32 %v1641, %v1859
        %v1861 = vpop.f32.mrf.mxu0
        %1862 = vmatprep.mubr.f32.mxu0 %v1571
        %1863 = vmatmul.mubr.f32.gmra.mxu0 %v1243
        %v1864 = vpop.f32.mrf.mxu0
        %v1865 = vadd.f32 %v1641, %v1864
        %v1866 = vpop.f32.mrf.mxu0
        %1867 = vdwg.mxu0
        %v1868 = vmax.f32 %v1710, 0.0
        %v1869 = vmax.f32 %v1715, 0.0
        %v1870 = vmax.f32 %v1720, 0.0
        %v1871 = vmax.f32 %v1725, 0.0
        %v1872 = vmax.f32 %v1730, 0.0
        %v1873 = vmax.f32 %v1735, 0.0
        %v1874 = vmax.f32 %v1740, 0.0
        %v1875 = vmax.f32 %v1745, 0.0
        %v1876 = vmax.f32 %v1750, 0.0
        %v1877 = vmax.f32 %v1755, 0.0
        %v1878 = vmax.f32 %v1760, 0.0
        %v1879 = vmax.f32 %v1765, 0.0
        %v1880 = vmax.f32 %v1770, 0.0
        %v1881 = vmax.f32 %v1775, 0.0
        %v1882 = vmax.f32 %v1780, 0.0
        %v1883 = vmax.f32 %v1785, 0.0
        %v1884 = vmax.f32 %v1790, 0.0
        %v1885 = vmax.f32 %v1795, 0.0
        %v1886 = vmax.f32 %v1800, 0.0
        %v1887 = vmax.f32 %v1805, 0.0
        %v1888 = vmax.f32 %v1810, 0.0
        %v1889 = vmax.f32 %v1815, 0.0
        %v1890 = vmax.f32 %v1820, 0.0
        %v1891 = vmax.f32 %v1825, 0.0
        %v1892 = vmax.f32 %v1830, 0.0
        %v1893 = vmax.f32 %v1835, 0.0
        %v1894 = vmax.f32 %v1840, 0.0
        %v1895 = vmax.f32 %v1845, 0.0
        %v1896 = vmax.f32 %v1850, 0.0
        %v1897 = vmax.f32 %v1855, 0.0
        %v1898 = vmax.f32 %v1860, 0.0
        %v1899 = vmax.f32 %v1865, 0.0
        %v1900 = vld [vmem:[#allocation14] sm:$0xff]
        %v1901 = vld [vmem:[#allocation14 + $0x8] sm:$0xff]
        %v1902 = vld [vmem:[#allocation14 + $0x10] sm:$0xff]
        %v1903 = vld [vmem:[#allocation14 + $0x18] sm:$0xff]
        %v1904 = vld [vmem:[#allocation14 + $0x20] sm:$0xff]
        %v1905 = vld [vmem:[#allocation14 + $0x28] sm:$0xff]
        %v1906 = vld [vmem:[#allocation14 + $0x30] sm:$0xff]
        %v1907 = vld [vmem:[#allocation14 + $0x38] sm:$0xff]
        %v1908 = vld [vmem:[#allocation14 + $0x40] sm:$0xff]
        %v1909 = vld [vmem:[#allocation14 + $0x48] sm:$0xff]
        %v1910 = vld [vmem:[#allocation14 + $0x50] sm:$0xff]
        %v1911 = vld [vmem:[#allocation14 + $0x58] sm:$0xff]
        %v1912 = vld [vmem:[#allocation14 + $0x60] sm:$0xff]
        %v1913 = vld [vmem:[#allocation14 + $0x68] sm:$0xff]
        %v1914 = vld [vmem:[#allocation14 + $0x70] sm:$0xff]
        %v1915 = vld [vmem:[#allocation14 + $0x78] sm:$0xff]
        %v1916 = vld [vmem:[%s10] sm:$0x1]
        %v1918 = vlaneseq
        %v1919 = vshrl.u32 %v1918, 7
        %v1920 = vsub.s32 0, %v1919
        %v1921 = vrot.slane %v1916, %v1920
        %1923 = vmatprep.subr.mxu0 0.0
        %1924 = vmatpush1.msra.mxu0 %v1915
        %1925 = vmatprep.subr.mxu0 0.0
        %1926 = vmatpush1.msra.mxu0 %v1914
        %1927 = vmatprep.subr.mxu0 0.0
        %1928 = vmatpush1.msra.mxu0 %v1913
        %1929 = vmatprep.subr.mxu0 0.0
        %1930 = vmatpush1.msra.mxu0 %v1912
        %1931 = vmatprep.subr.mxu0 0.0
        %1932 = vmatpush1.msra.mxu0 %v1911
        %1933 = vmatprep.subr.mxu0 0.0
        %1934 = vmatpush1.msra.mxu0 %v1910
        %1935 = vmatprep.subr.mxu0 0.0
        %1936 = vmatpush1.msra.mxu0 %v1909
        %1937 = vmatprep.subr.mxu0 0.0
        %1938 = vmatpush1.msra.mxu0 %v1908
        %1939 = vmatprep.subr.mxu0 0.0
        %1940 = vmatpush1.msra.mxu0 %v1907
        %1941 = vmatprep.subr.mxu0 0.0
        %1942 = vmatpush1.msra.mxu0 %v1906
        %1943 = vmatprep.subr.mxu0 0.0
        %1944 = vmatpush1.msra.mxu0 %v1905
        %1945 = vmatprep.subr.mxu0 0.0
        %1946 = vmatpush1.msra.mxu0 %v1904
        %1947 = vmatprep.subr.mxu0 0.0
        %1948 = vmatpush1.msra.mxu0 %v1903
        %1949 = vmatprep.subr.mxu0 0.0
        %1950 = vmatpush1.msra.mxu0 %v1902
        %1951 = vmatprep.subr.mxu0 0.0
        %1952 = vmatpush1.msra.mxu0 %v1901
        %1953 = vmatprep.subr.mxu0 0.0
        %1954 = vmatpush1.msra.mxu0 %v1900
        %1955 = vmatprep.subr.mxu0 0.0
        %1956 = vmatpush2.msra.mxu0 0.0
        %1957 = vmatprep.subr.mxu0 0.0
        %1958 = vmatpush2.msra.mxu0 0.0
        %1959 = vmatprep.subr.mxu0 0.0
        %1960 = vmatpush2.msra.mxu0 0.0
        %1961 = vmatprep.subr.mxu0 0.0
        %1962 = vmatpush2.msra.mxu0 0.0
        %1963 = vmatprep.subr.mxu0 0.0
        %1964 = vmatpush2.msra.mxu0 0.0
        %1965 = vmatprep.subr.mxu0 0.0
        %1966 = vmatpush2.msra.mxu0 0.0
        %1967 = vmatprep.subr.mxu0 0.0
        %1968 = vmatpush2.msra.mxu0 0.0
        %1969 = vmatprep.subr.mxu0 0.0
        %1970 = vmatpush2.msra.mxu0 0.0
        %1971 = vmatprep.subr.mxu0 0.0
        %1972 = vmatpush2.msra.mxu0 0.0
        %1973 = vmatprep.subr.mxu0 0.0
        %1974 = vmatpush2.msra.mxu0 0.0
        %1975 = vmatprep.subr.mxu0 0.0
        %1976 = vmatpush2.msra.mxu0 0.0
        %1977 = vmatprep.subr.mxu0 0.0
        %1978 = vmatpush2.msra.mxu0 0.0
        %1979 = vmatprep.subr.mxu0 0.0
        %1980 = vmatpush2.msra.mxu0 0.0
        %1981 = vmatprep.subr.mxu0 0.0
        %1982 = vmatpush2.msra.mxu0 0.0
        %1983 = vmatprep.subr.mxu0 0.0
        %1984 = vmatpush2.msra.mxu0 0.0
        %1985 = vmatprep.subr.mxu0 0.0
        %1986 = vmatpush2.msra.mxu0 0.0
        %1987 = vmatprep.mubr.f32.mxu0 0.0
        %1988 = vmatmul.mubr.f32.gmra.mxu0 %v1868
        %v1989 = vpop.f32.mrf.mxu0
        %v1990 = vadd.f32 %v1921, %v1989
        %v1991 = vpop.f32.mrf.mxu0
        %1992 = vmatprep.mubr.f32.mxu0 0.0
        %1993 = vmatmul.mubr.f32.gmra.mxu0 %v1869
        %v1994 = vpop.f32.mrf.mxu0
        %v1995 = vadd.f32 %v1921, %v1994
        %v1996 = vpop.f32.mrf.mxu0
        %1997 = vmatprep.mubr.f32.mxu0 0.0
        %1998 = vmatmul.mubr.f32.gmra.mxu0 %v1870
        %v1999 = vpop.f32.mrf.mxu0
        %v2000 = vadd.f32 %v1921, %v1999
        %v2001 = vpop.f32.mrf.mxu0
        %2002 = vmatprep.mubr.f32.mxu0 0.0
        %2003 = vmatmul.mubr.f32.gmra.mxu0 %v1871
        %v2004 = vpop.f32.mrf.mxu0
        %v2005 = vadd.f32 %v1921, %v2004
        %v2006 = vpop.f32.mrf.mxu0
        %2007 = vmatprep.mubr.f32.mxu0 0.0
        %2008 = vmatmul.mubr.f32.gmra.mxu0 %v1872
        %v2009 = vpop.f32.mrf.mxu0
        %v2010 = vadd.f32 %v1921, %v2009
        %v2011 = vpop.f32.mrf.mxu0
        %2012 = vmatprep.mubr.f32.mxu0 0.0
        %2013 = vmatmul.mubr.f32.gmra.mxu0 %v1873
        %v2014 = vpop.f32.mrf.mxu0
        %v2015 = vadd.f32 %v1921, %v2014
        %v2016 = vpop.f32.mrf.mxu0
        %2017 = vmatprep.mubr.f32.mxu0 0.0
        %2018 = vmatmul.mubr.f32.gmra.mxu0 %v1874
        %v2019 = vpop.f32.mrf.mxu0
        %v2020 = vadd.f32 %v1921, %v2019
        %v2021 = vpop.f32.mrf.mxu0
        %2022 = vmatprep.mubr.f32.mxu0 0.0
        %2023 = vmatmul.mubr.f32.gmra.mxu0 %v1875
        %v2024 = vpop.f32.mrf.mxu0
        %v2025 = vadd.f32 %v1921, %v2024
        %v2026 = vpop.f32.mrf.mxu0
        %2027 = vmatprep.mubr.f32.mxu0 0.0
        %2028 = vmatmul.mubr.f32.gmra.mxu0 %v1876
        %v2029 = vpop.f32.mrf.mxu0
        %v2030 = vadd.f32 %v1921, %v2029
        %v2031 = vpop.f32.mrf.mxu0
        %2032 = vmatprep.mubr.f32.mxu0 0.0
        %2033 = vmatmul.mubr.f32.gmra.mxu0 %v1877
        %v2034 = vpop.f32.mrf.mxu0
        %v2035 = vadd.f32 %v1921, %v2034
        %v2036 = vpop.f32.mrf.mxu0
        %2037 = vmatprep.mubr.f32.mxu0 0.0
        %2038 = vmatmul.mubr.f32.gmra.mxu0 %v1878
        %v2039 = vpop.f32.mrf.mxu0
        %v2040 = vadd.f32 %v1921, %v2039
        %v2041 = vpop.f32.mrf.mxu0
        %2042 = vmatprep.mubr.f32.mxu0 0.0
        %2043 = vmatmul.mubr.f32.gmra.mxu0 %v1879
        %v2044 = vpop.f32.mrf.mxu0
        %v2045 = vadd.f32 %v1921, %v2044
        %v2046 = vpop.f32.mrf.mxu0
        %2047 = vmatprep.mubr.f32.mxu0 0.0
        %2048 = vmatmul.mubr.f32.gmra.mxu0 %v1880
        %v2049 = vpop.f32.mrf.mxu0
        %v2050 = vadd.f32 %v1921, %v2049
        %v2051 = vpop.f32.mrf.mxu0
        %2052 = vmatprep.mubr.f32.mxu0 0.0
        %2053 = vmatmul.mubr.f32.gmra.mxu0 %v1881
        %v2054 = vpop.f32.mrf.mxu0
        %v2055 = vadd.f32 %v1921, %v2054
        %v2056 = vpop.f32.mrf.mxu0
        %2057 = vmatprep.mubr.f32.mxu0 0.0
        %2058 = vmatmul.mubr.f32.gmra.mxu0 %v1882
        %v2059 = vpop.f32.mrf.mxu0
        %v2060 = vadd.f32 %v1921, %v2059
        %v2061 = vpop.f32.mrf.mxu0
        %2062 = vmatprep.mubr.f32.mxu0 0.0
        %2063 = vmatmul.mubr.f32.gmra.mxu0 %v1883
        %v2064 = vpop.f32.mrf.mxu0
        %v2065 = vadd.f32 %v1921, %v2064
        %v2066 = vpop.f32.mrf.mxu0
        %2067 = vmatprep.mubr.f32.mxu0 0.0
        %2068 = vmatmul.mubr.f32.gmra.mxu0 %v1884
        %v2069 = vpop.f32.mrf.mxu0
        %v2070 = vadd.f32 %v1921, %v2069
        %v2071 = vpop.f32.mrf.mxu0
        %2072 = vmatprep.mubr.f32.mxu0 0.0
        %2073 = vmatmul.mubr.f32.gmra.mxu0 %v1885
        %v2074 = vpop.f32.mrf.mxu0
        %v2075 = vadd.f32 %v1921, %v2074
        %v2076 = vpop.f32.mrf.mxu0
        %2077 = vmatprep.mubr.f32.mxu0 0.0
        %2078 = vmatmul.mubr.f32.gmra.mxu0 %v1886
        %v2079 = vpop.f32.mrf.mxu0
        %v2080 = vadd.f32 %v1921, %v2079
        %v2081 = vpop.f32.mrf.mxu0
        %2082 = vmatprep.mubr.f32.mxu0 0.0
        %2083 = vmatmul.mubr.f32.gmra.mxu0 %v1887
        %v2084 = vpop.f32.mrf.mxu0
        %v2085 = vadd.f32 %v1921, %v2084
        %v2086 = vpop.f32.mrf.mxu0
        %2087 = vmatprep.mubr.f32.mxu0 0.0
        %2088 = vmatmul.mubr.f32.gmra.mxu0 %v1888
        %v2089 = vpop.f32.mrf.mxu0
        %v2090 = vadd.f32 %v1921, %v2089
        %v2091 = vpop.f32.mrf.mxu0
        %2092 = vmatprep.mubr.f32.mxu0 0.0
        %2093 = vmatmul.mubr.f32.gmra.mxu0 %v1889
        %v2094 = vpop.f32.mrf.mxu0
        %v2095 = vadd.f32 %v1921, %v2094
        %v2096 = vpop.f32.mrf.mxu0
        %2097 = vmatprep.mubr.f32.mxu0 0.0
        %2098 = vmatmul.mubr.f32.gmra.mxu0 %v1890
        %v2099 = vpop.f32.mrf.mxu0
        %v2100 = vadd.f32 %v1921, %v2099
        %v2101 = vpop.f32.mrf.mxu0
        %2102 = vmatprep.mubr.f32.mxu0 0.0
        %2103 = vmatmul.mubr.f32.gmra.mxu0 %v1891
        %v2104 = vpop.f32.mrf.mxu0
        %v2105 = vadd.f32 %v1921, %v2104
        %v2106 = vpop.f32.mrf.mxu0
        %2107 = vmatprep.mubr.f32.mxu0 0.0
        %2108 = vmatmul.mubr.f32.gmra.mxu0 %v1892
        %v2109 = vpop.f32.mrf.mxu0
        %v2110 = vadd.f32 %v1921, %v2109
        %v2111 = vpop.f32.mrf.mxu0
        %2112 = vmatprep.mubr.f32.mxu0 0.0
        %2113 = vmatmul.mubr.f32.gmra.mxu0 %v1893
        %v2114 = vpop.f32.mrf.mxu0
        %v2115 = vadd.f32 %v1921, %v2114
        %v2116 = vpop.f32.mrf.mxu0
        %2117 = vmatprep.mubr.f32.mxu0 0.0
        %2118 = vmatmul.mubr.f32.gmra.mxu0 %v1894
        %v2119 = vpop.f32.mrf.mxu0
        %v2120 = vadd.f32 %v1921, %v2119
        %v2121 = vpop.f32.mrf.mxu0
        %2122 = vmatprep.mubr.f32.mxu0 0.0
        %2123 = vmatmul.mubr.f32.gmra.mxu0 %v1895
        %v2124 = vpop.f32.mrf.mxu0
        %v2125 = vadd.f32 %v1921, %v2124
        %v2126 = vpop.f32.mrf.mxu0
        %2127 = vmatprep.mubr.f32.mxu0 0.0
        %2128 = vmatmul.mubr.f32.gmra.mxu0 %v1896
        %v2129 = vpop.f32.mrf.mxu0
        %v2130 = vadd.f32 %v1921, %v2129
        %v2131 = vpop.f32.mrf.mxu0
        %2132 = vmatprep.mubr.f32.mxu0 0.0
        %2133 = vmatmul.mubr.f32.gmra.mxu0 %v1897
        %v2134 = vpop.f32.mrf.mxu0
        %v2135 = vadd.f32 %v1921, %v2134
        %v2136 = vpop.f32.mrf.mxu0
        %2137 = vmatprep.mubr.f32.mxu0 0.0
        %2138 = vmatmul.mubr.f32.gmra.mxu0 %v1898
        %v2139 = vpop.f32.mrf.mxu0
        %v2140 = vadd.f32 %v1921, %v2139
        %v2141 = vpop.f32.mrf.mxu0
        %2142 = vmatprep.mubr.f32.mxu0 0.0
        %2143 = vmatmul.mubr.f32.gmra.mxu0 %v1899
        %v2144 = vpop.f32.mrf.mxu0
        %v2145 = vadd.f32 %v1921, %v2144
        %v2146 = vpop.f32.mrf.mxu0
        %2147 = vdwg.mxu0
        %v2148 = vmax.f32 %v1990, 0.0
        %v2149 = vmax.f32 %v1995, 0.0
        %v2150 = vmax.f32 %v2000, 0.0
        %v2151 = vmax.f32 %v2005, 0.0
        %v2152 = vmax.f32 %v2010, 0.0
        %v2153 = vmax.f32 %v2015, 0.0
        %v2154 = vmax.f32 %v2020, 0.0
        %v2155 = vmax.f32 %v2025, 0.0
        %v2156 = vmax.f32 %v2030, 0.0
        %v2157 = vmax.f32 %v2035, 0.0
        %v2158 = vmax.f32 %v2040, 0.0
        %v2159 = vmax.f32 %v2045, 0.0
        %v2160 = vmax.f32 %v2050, 0.0
        %v2161 = vmax.f32 %v2055, 0.0
        %v2162 = vmax.f32 %v2060, 0.0
        %v2163 = vmax.f32 %v2065, 0.0
        %v2164 = vmax.f32 %v2070, 0.0
        %v2165 = vmax.f32 %v2075, 0.0
        %v2166 = vmax.f32 %v2080, 0.0
        %v2167 = vmax.f32 %v2085, 0.0
        %v2168 = vmax.f32 %v2090, 0.0
        %v2169 = vmax.f32 %v2095, 0.0
        %v2170 = vmax.f32 %v2100, 0.0
        %v2171 = vmax.f32 %v2105, 0.0
        %v2172 = vmax.f32 %v2110, 0.0
        %v2173 = vmax.f32 %v2115, 0.0
        %v2174 = vmax.f32 %v2120, 0.0
        %v2175 = vmax.f32 %v2125, 0.0
        %v2176 = vmax.f32 %v2130, 0.0
        %v2177 = vmax.f32 %v2135, 0.0
        %v2178 = vmax.f32 %v2140, 0.0
        %v2179 = vmax.f32 %v2145, 0.0
        %v2180 = vld [vmem:[%s11] sm:$0x1]
        %v2182 = vlaneseq
        %v2183 = vshrl.u32 %v2182, 7
        %v2184 = vsub.s32 0, %v2183
        %v2185 = vrot.slane %v2180, %v2184
        %v2187 = vmul.f32 %v2148, %v2185
        %v2188 = vmul.f32 %v2149, %v2185
        %v2189 = vmul.f32 %v2150, %v2185
        %v2190 = vmul.f32 %v2151, %v2185
        %v2191 = vmul.f32 %v2152, %v2185
        %v2192 = vmul.f32 %v2153, %v2185
        %v2193 = vmul.f32 %v2154, %v2185
        %v2194 = vmul.f32 %v2155, %v2185
        %v2195 = vmul.f32 %v2156, %v2185
        %v2196 = vmul.f32 %v2157, %v2185
        %v2197 = vmul.f32 %v2158, %v2185
        %v2198 = vmul.f32 %v2159, %v2185
        %v2199 = vmul.f32 %v2160, %v2185
        %v2200 = vmul.f32 %v2161, %v2185
        %v2201 = vmul.f32 %v2162, %v2185
        %v2202 = vmul.f32 %v2163, %v2185
        %v2203 = vmul.f32 %v2164, %v2185
        %v2204 = vmul.f32 %v2165, %v2185
        %v2205 = vmul.f32 %v2166, %v2185
        %v2206 = vmul.f32 %v2167, %v2185
        %v2207 = vmul.f32 %v2168, %v2185
        %v2208 = vmul.f32 %v2169, %v2185
        %v2209 = vmul.f32 %v2170, %v2185
        %v2210 = vmul.f32 %v2171, %v2185
        %v2211 = vmul.f32 %v2172, %v2185
        %v2212 = vmul.f32 %v2173, %v2185
        %v2213 = vmul.f32 %v2174, %v2185
        %v2214 = vmul.f32 %v2175, %v2185
        %v2215 = vmul.f32 %v2176, %v2185
        %v2216 = vmul.f32 %v2177, %v2185
        %v2217 = vmul.f32 %v2178, %v2185
        %v2218 = vmul.f32 %v2179, %v2185
        %2219 = vadd.xlane.f32.xlu0 %v2187
        %v2220 = vpop.xlane.xlu0 %2219
        %2221 = vadd.xlane.f32.xlu0 %v2188
        %v2222 = vpop.xlane.xlu0 %2221
        %2223 = vadd.xlane.f32.xlu0 %v2189
        %v2224 = vpop.xlane.xlu0 %2223
        %2225 = vadd.xlane.f32.xlu0 %v2190
        %v2226 = vpop.xlane.xlu0 %2225
        %2227 = vadd.xlane.f32.xlu0 %v2191
        %v2228 = vpop.xlane.xlu0 %2227
        %2229 = vadd.xlane.f32.xlu0 %v2192
        %v2230 = vpop.xlane.xlu0 %2229
        %2231 = vadd.xlane.f32.xlu0 %v2193
        %v2232 = vpop.xlane.xlu0 %2231
        %2233 = vadd.xlane.f32.xlu0 %v2194
        %v2234 = vpop.xlane.xlu0 %2233
        %2235 = vadd.xlane.f32.xlu0 %v2195
        %v2236 = vpop.xlane.xlu0 %2235
        %2237 = vadd.xlane.f32.xlu0 %v2196
        %v2238 = vpop.xlane.xlu0 %2237
        %2239 = vadd.xlane.f32.xlu0 %v2197
        %v2240 = vpop.xlane.xlu0 %2239
        %2241 = vadd.xlane.f32.xlu0 %v2198
        %v2242 = vpop.xlane.xlu0 %2241
        %2243 = vadd.xlane.f32.xlu0 %v2199
        %v2244 = vpop.xlane.xlu0 %2243
        %2245 = vadd.xlane.f32.xlu0 %v2200
        %v2246 = vpop.xlane.xlu0 %2245
        %2247 = vadd.xlane.f32.xlu0 %v2201
        %v2248 = vpop.xlane.xlu0 %2247
        %2249 = vadd.xlane.f32.xlu0 %v2202
        %v2250 = vpop.xlane.xlu0 %2249
        %2251 = vadd.xlane.f32.xlu0 %v2203
        %v2252 = vpop.xlane.xlu0 %2251
        %2253 = vadd.xlane.f32.xlu0 %v2204
        %v2254 = vpop.xlane.xlu0 %2253
        %2255 = vadd.xlane.f32.xlu0 %v2205
        %v2256 = vpop.xlane.xlu0 %2255
        %2257 = vadd.xlane.f32.xlu0 %v2206
        %v2258 = vpop.xlane.xlu0 %2257
        %2259 = vadd.xlane.f32.xlu0 %v2207
        %v2260 = vpop.xlane.xlu0 %2259
        %2261 = vadd.xlane.f32.xlu0 %v2208
        %v2262 = vpop.xlane.xlu0 %2261
        %2263 = vadd.xlane.f32.xlu0 %v2209
        %v2264 = vpop.xlane.xlu0 %2263
        %2265 = vadd.xlane.f32.xlu0 %v2210
        %v2266 = vpop.xlane.xlu0 %2265
        %2267 = vadd.xlane.f32.xlu0 %v2211
        %v2268 = vpop.xlane.xlu0 %2267
        %2269 = vadd.xlane.f32.xlu0 %v2212
        %v2270 = vpop.xlane.xlu0 %2269
        %2271 = vadd.xlane.f32.xlu0 %v2213
        %v2272 = vpop.xlane.xlu0 %2271
        %2273 = vadd.xlane.f32.xlu0 %v2214
        %v2274 = vpop.xlane.xlu0 %2273
        %2275 = vadd.xlane.f32.xlu0 %v2215
        %v2276 = vpop.xlane.xlu0 %2275
        %2277 = vadd.xlane.f32.xlu0 %v2216
        %v2278 = vpop.xlane.xlu0 %2277
        %2279 = vadd.xlane.f32.xlu0 %v2217
        %v2280 = vpop.xlane.xlu0 %2279
        %2281 = vadd.xlane.f32.xlu0 %v2218
        %v2282 = vpop.xlane.xlu0 %2281
        %v2283 = vld [vmem:[#allocation2] sm:$0x1]
        %s2284 = vtos %v2283
        %v2285 = vstv %s2284
        %v2286 = vadd.f32 %v2220, %v2285
        %v2287 = vadd.f32 %v2222, %v2285
        %v2288 = vadd.f32 %v2224, %v2285
        %v2289 = vadd.f32 %v2226, %v2285
        %v2290 = vadd.f32 %v2228, %v2285
        %v2291 = vadd.f32 %v2230, %v2285
        %v2292 = vadd.f32 %v2232, %v2285
        %v2293 = vadd.f32 %v2234, %v2285
        %v2294 = vadd.f32 %v2236, %v2285
        %v2295 = vadd.f32 %v2238, %v2285
        %v2296 = vadd.f32 %v2240, %v2285
        %v2297 = vadd.f32 %v2242, %v2285
        %v2298 = vadd.f32 %v2244, %v2285
        %v2299 = vadd.f32 %v2246, %v2285
        %v2300 = vadd.f32 %v2248, %v2285
        %v2301 = vadd.f32 %v2250, %v2285
        %v2302 = vadd.f32 %v2252, %v2285
        %v2303 = vadd.f32 %v2254, %v2285
        %v2304 = vadd.f32 %v2256, %v2285
        %v2305 = vadd.f32 %v2258, %v2285
        %v2306 = vadd.f32 %v2260, %v2285
        %v2307 = vadd.f32 %v2262, %v2285
        %v2308 = vadd.f32 %v2264, %v2285
        %v2309 = vadd.f32 %v2266, %v2285
        %v2310 = vadd.f32 %v2268, %v2285
        %v2311 = vadd.f32 %v2270, %v2285
        %v2312 = vadd.f32 %v2272, %v2285
        %v2313 = vadd.f32 %v2274, %v2285
        %v2314 = vadd.f32 %v2276, %v2285
        %v2315 = vadd.f32 %v2278, %v2285
        %v2316 = vadd.f32 %v2280, %v2285
        %v2317 = vadd.f32 %v2282, %v2285
        %v2350 = vlaneseq
        %v2351 = vand.u32 %v2350, 127
        %v2352 = vlaneseq
        %v2353 = vshrl.u32 %v2352, 7
        %v2354 = vsub.s32 %v2351, %v2353
        %v2355 = vrot.slane %v2286, %v2354
        %v2356 = vlaneseq
        %v2357 = vshrl.u32 %v2356, 7
        %v2358 = vsub.s32 %v2351, %v2357
        %v2359 = vrot.slane %v2287, %v2358
        %v2360 = vlaneseq
        %v2361 = vshrl.u32 %v2360, 7
        %v2362 = vsub.s32 %v2351, %v2361
        %v2363 = vrot.slane %v2288, %v2362
        %v2364 = vlaneseq
        %v2365 = vshrl.u32 %v2364, 7
        %v2366 = vsub.s32 %v2351, %v2365
        %v2367 = vrot.slane %v2289, %v2366
        %v2368 = vlaneseq
        %v2369 = vshrl.u32 %v2368, 7
        %v2370 = vsub.s32 %v2351, %v2369
        %v2371 = vrot.slane %v2290, %v2370
        %v2372 = vlaneseq
        %v2373 = vshrl.u32 %v2372, 7
        %v2374 = vsub.s32 %v2351, %v2373
        %v2375 = vrot.slane %v2291, %v2374
        %v2376 = vlaneseq
        %v2377 = vshrl.u32 %v2376, 7
        %v2378 = vsub.s32 %v2351, %v2377
        %v2379 = vrot.slane %v2292, %v2378
        %v2380 = vlaneseq
        %v2381 = vshrl.u32 %v2380, 7
        %v2382 = vsub.s32 %v2351, %v2381
        %v2383 = vrot.slane %v2293, %v2382
        %v2384 = vlaneseq
        %v2385 = vshrl.u32 %v2384, 7
        %v2386 = vsub.s32 %v2351, %v2385
        %v2387 = vrot.slane %v2294, %v2386
        %v2388 = vlaneseq
        %v2389 = vshrl.u32 %v2388, 7
        %v2390 = vsub.s32 %v2351, %v2389
        %v2391 = vrot.slane %v2295, %v2390
        %v2392 = vlaneseq
        %v2393 = vshrl.u32 %v2392, 7
        %v2394 = vsub.s32 %v2351, %v2393
        %v2395 = vrot.slane %v2296, %v2394
        %v2396 = vlaneseq
        %v2397 = vshrl.u32 %v2396, 7
        %v2398 = vsub.s32 %v2351, %v2397
        %v2399 = vrot.slane %v2297, %v2398
        %v2400 = vlaneseq
        %v2401 = vshrl.u32 %v2400, 7
        %v2402 = vsub.s32 %v2351, %v2401
        %v2403 = vrot.slane %v2298, %v2402
        %v2404 = vlaneseq
        %v2405 = vshrl.u32 %v2404, 7
        %v2406 = vsub.s32 %v2351, %v2405
        %v2407 = vrot.slane %v2299, %v2406
        %v2408 = vlaneseq
        %v2409 = vshrl.u32 %v2408, 7
        %v2410 = vsub.s32 %v2351, %v2409
        %v2411 = vrot.slane %v2300, %v2410
        %v2412 = vlaneseq
        %v2413 = vshrl.u32 %v2412, 7
        %v2414 = vsub.s32 %v2351, %v2413
        %v2415 = vrot.slane %v2301, %v2414
        %v2416 = vlaneseq
        %v2417 = vshrl.u32 %v2416, 7
        %v2418 = vsub.s32 %v2351, %v2417
        %v2419 = vrot.slane %v2302, %v2418
        %v2420 = vlaneseq
        %v2421 = vshrl.u32 %v2420, 7
        %v2422 = vsub.s32 %v2351, %v2421
        %v2423 = vrot.slane %v2303, %v2422
        %v2424 = vlaneseq
        %v2425 = vshrl.u32 %v2424, 7
        %v2426 = vsub.s32 %v2351, %v2425
        %v2427 = vrot.slane %v2304, %v2426
        %v2428 = vlaneseq
        %v2429 = vshrl.u32 %v2428, 7
        %v2430 = vsub.s32 %v2351, %v2429
        %v2431 = vrot.slane %v2305, %v2430
        %v2432 = vlaneseq
        %v2433 = vshrl.u32 %v2432, 7
        %v2434 = vsub.s32 %v2351, %v2433
        %v2435 = vrot.slane %v2306, %v2434
        %v2436 = vlaneseq
        %v2437 = vshrl.u32 %v2436, 7
        %v2438 = vsub.s32 %v2351, %v2437
        %v2439 = vrot.slane %v2307, %v2438
        %v2440 = vlaneseq
        %v2441 = vshrl.u32 %v2440, 7
        %v2442 = vsub.s32 %v2351, %v2441
        %v2443 = vrot.slane %v2308, %v2442
        %v2444 = vlaneseq
        %v2445 = vshrl.u32 %v2444, 7
        %v2446 = vsub.s32 %v2351, %v2445
        %v2447 = vrot.slane %v2309, %v2446
        %v2448 = vlaneseq
        %v2449 = vshrl.u32 %v2448, 7
        %v2450 = vsub.s32 %v2351, %v2449
        %v2451 = vrot.slane %v2310, %v2450
        %v2452 = vlaneseq
        %v2453 = vshrl.u32 %v2452, 7
        %v2454 = vsub.s32 %v2351, %v2453
        %v2455 = vrot.slane %v2311, %v2454
        %v2456 = vlaneseq
        %v2457 = vshrl.u32 %v2456, 7
        %v2458 = vsub.s32 %v2351, %v2457
        %v2459 = vrot.slane %v2312, %v2458
        %v2460 = vlaneseq
        %v2461 = vshrl.u32 %v2460, 7
        %v2462 = vsub.s32 %v2351, %v2461
        %v2463 = vrot.slane %v2313, %v2462
        %v2464 = vlaneseq
        %v2465 = vshrl.u32 %v2464, 7
        %v2466 = vsub.s32 %v2351, %v2465
        %v2467 = vrot.slane %v2314, %v2466
        %v2468 = vlaneseq
        %v2469 = vshrl.u32 %v2468, 7
        %v2470 = vsub.s32 %v2351, %v2469
        %v2471 = vrot.slane %v2315, %v2470
        %v2472 = vlaneseq
        %v2473 = vshrl.u32 %v2472, 7
        %v2474 = vsub.s32 %v2351, %v2473
        %v2475 = vrot.slane %v2316, %v2474
        %v2476 = vlaneseq
        %v2477 = vshrl.u32 %v2476, 7
        %v2478 = vsub.s32 %v2351, %v2477
        %v2479 = vrot.slane %v2317, %v2478
        %vm2480 = vcmask 1041409
        %v2481 = vsel %vm2480, %v2359, %v2355
        %vm2482 = vcmask 1042434
        %v2483 = vsel %vm2482, %v2363, %v2481
        %vm2484 = vcmask 1043459
        %v2485 = vsel %vm2484, %v2367, %v2483
        %vm2486 = vcmask 1044484
        %v2487 = vsel %vm2486, %v2371, %v2485
        %vm2488 = vcmask 1045509
        %v2489 = vsel %vm2488, %v2375, %v2487
        %vm2490 = vcmask 1046534
        %v2491 = vsel %vm2490, %v2379, %v2489
        %vm2492 = vcmask 1047559
        %v2493 = vsel %vm2492, %v2383, %v2491
        %v2494 = vsel %vm2480, %v2391, %v2387
        %v2495 = vsel %vm2482, %v2395, %v2494
        %v2496 = vsel %vm2484, %v2399, %v2495
        %v2497 = vsel %vm2486, %v2403, %v2496
        %v2498 = vsel %vm2488, %v2407, %v2497
        %v2499 = vsel %vm2490, %v2411, %v2498
        %v2500 = vsel %vm2492, %v2415, %v2499
        %v2501 = vsel %vm2480, %v2423, %v2419
        %v2502 = vsel %vm2482, %v2427, %v2501
        %v2503 = vsel %vm2484, %v2431, %v2502
        %v2504 = vsel %vm2486, %v2435, %v2503
        %v2505 = vsel %vm2488, %v2439, %v2504
        %v2506 = vsel %vm2490, %v2443, %v2505
        %v2507 = vsel %vm2492, %v2447, %v2506
        %v2508 = vsel %vm2480, %v2455, %v2451
        %v2509 = vsel %vm2482, %v2459, %v2508
        %v2510 = vsel %vm2484, %v2463, %v2509
        %v2511 = vsel %vm2486, %v2467, %v2510
        %v2512 = vsel %vm2488, %v2471, %v2511
        %v2513 = vsel %vm2490, %v2475, %v2512
        %v2514 = vsel %vm2492, %v2479, %v2513
        %vm2519 = vcmask 64512
        %v2520 = vsel %vm2519, %v2493, -inf
        %2521 = vmax.xlane.f32.xlu0 %v2520
        %v2522 = vpop.xlane.xlu0 %2521
        %v2523 = vsel %vm2519, %v2500, -inf
        %2524 = vmax.xlane.f32.xlu0 %v2523
        %v2525 = vpop.xlane.xlu0 %2524
        %v2526 = vsel %vm2519, %v2507, -inf
        %2527 = vmax.xlane.f32.xlu0 %v2526
        %v2528 = vpop.xlane.xlu0 %2527
        %v2529 = vsel %vm2519, %v2514, -inf
        %2530 = vmax.xlane.f32.xlu0 %v2529
        %v2531 = vpop.xlane.xlu0 %2530
        %v2536 = vlaneseq
        %v2537 = vshrl.u32 %v2536, 7
        %v2538 = vsub.s32 0, %v2537
        %v2539 = vrot.slane %v2522, %v2538
        %v2540 = vlaneseq
        %v2541 = vshrl.u32 %v2540, 7
        %v2542 = vsub.s32 1, %v2541
        %v2543 = vrot.slane %v2522, %v2542
        %v2544 = vlaneseq
        %v2545 = vshrl.u32 %v2544, 7
        %v2546 = vsub.s32 2, %v2545
        %v2547 = vrot.slane %v2522, %v2546
        %v2548 = vlaneseq
        %v2549 = vshrl.u32 %v2548, 7
        %v2550 = vsub.s32 3, %v2549
        %v2551 = vrot.slane %v2522, %v2550
        %v2552 = vlaneseq
        %v2553 = vshrl.u32 %v2552, 7
        %v2554 = vsub.s32 4, %v2553
        %v2555 = vrot.slane %v2522, %v2554
        %v2556 = vlaneseq
        %v2557 = vshrl.u32 %v2556, 7
        %v2558 = vsub.s32 5, %v2557
        %v2559 = vrot.slane %v2522, %v2558
        %v2560 = vlaneseq
        %v2561 = vshrl.u32 %v2560, 7
        %v2562 = vsub.s32 6, %v2561
        %v2563 = vrot.slane %v2522, %v2562
        %v2564 = vlaneseq
        %v2565 = vshrl.u32 %v2564, 7
        %v2566 = vsub.s32 7, %v2565
        %v2567 = vrot.slane %v2522, %v2566
        %v2568 = vlaneseq
        %v2569 = vshrl.u32 %v2568, 7
        %v2570 = vsub.s32 0, %v2569
        %v2571 = vrot.slane %v2525, %v2570
        %v2572 = vlaneseq
        %v2573 = vshrl.u32 %v2572, 7
        %v2574 = vsub.s32 1, %v2573
        %v2575 = vrot.slane %v2525, %v2574
        %v2576 = vlaneseq
        %v2577 = vshrl.u32 %v2576, 7
        %v2578 = vsub.s32 2, %v2577
        %v2579 = vrot.slane %v2525, %v2578
        %v2580 = vlaneseq
        %v2581 = vshrl.u32 %v2580, 7
        %v2582 = vsub.s32 3, %v2581
        %v2583 = vrot.slane %v2525, %v2582
        %v2584 = vlaneseq
        %v2585 = vshrl.u32 %v2584, 7
        %v2586 = vsub.s32 4, %v2585
        %v2587 = vrot.slane %v2525, %v2586
        %v2588 = vlaneseq
        %v2589 = vshrl.u32 %v2588, 7
        %v2590 = vsub.s32 5, %v2589
        %v2591 = vrot.slane %v2525, %v2590
        %v2592 = vlaneseq
        %v2593 = vshrl.u32 %v2592, 7
        %v2594 = vsub.s32 6, %v2593
        %v2595 = vrot.slane %v2525, %v2594
        %v2596 = vlaneseq
        %v2597 = vshrl.u32 %v2596, 7
        %v2598 = vsub.s32 7, %v2597
        %v2599 = vrot.slane %v2525, %v2598
        %v2600 = vlaneseq
        %v2601 = vshrl.u32 %v2600, 7
        %v2602 = vsub.s32 0, %v2601
        %v2603 = vrot.slane %v2528, %v2602
        %v2604 = vlaneseq
        %v2605 = vshrl.u32 %v2604, 7
        %v2606 = vsub.s32 1, %v2605
        %v2607 = vrot.slane %v2528, %v2606
        %v2608 = vlaneseq
        %v2609 = vshrl.u32 %v2608, 7
        %v2610 = vsub.s32 2, %v2609
        %v2611 = vrot.slane %v2528, %v2610
        %v2612 = vlaneseq
        %v2613 = vshrl.u32 %v2612, 7
        %v2614 = vsub.s32 3, %v2613
        %v2615 = vrot.slane %v2528, %v2614
        %v2616 = vlaneseq
        %v2617 = vshrl.u32 %v2616, 7
        %v2618 = vsub.s32 4, %v2617
        %v2619 = vrot.slane %v2528, %v2618
        %v2620 = vlaneseq
        %v2621 = vshrl.u32 %v2620, 7
        %v2622 = vsub.s32 5, %v2621
        %v2623 = vrot.slane %v2528, %v2622
        %v2624 = vlaneseq
        %v2625 = vshrl.u32 %v2624, 7
        %v2626 = vsub.s32 6, %v2625
        %v2627 = vrot.slane %v2528, %v2626
        %v2628 = vlaneseq
        %v2629 = vshrl.u32 %v2628, 7
        %v2630 = vsub.s32 7, %v2629
        %v2631 = vrot.slane %v2528, %v2630
        %v2632 = vlaneseq
        %v2633 = vshrl.u32 %v2632, 7
        %v2634 = vsub.s32 0, %v2633
        %v2635 = vrot.slane %v2531, %v2634
        %v2636 = vlaneseq
        %v2637 = vshrl.u32 %v2636, 7
        %v2638 = vsub.s32 1, %v2637
        %v2639 = vrot.slane %v2531, %v2638
        %v2640 = vlaneseq
        %v2641 = vshrl.u32 %v2640, 7
        %v2642 = vsub.s32 2, %v2641
        %v2643 = vrot.slane %v2531, %v2642
        %v2644 = vlaneseq
        %v2645 = vshrl.u32 %v2644, 7
        %v2646 = vsub.s32 3, %v2645
        %v2647 = vrot.slane %v2531, %v2646
        %v2648 = vlaneseq
        %v2649 = vshrl.u32 %v2648, 7
        %v2650 = vsub.s32 4, %v2649
        %v2651 = vrot.slane %v2531, %v2650
        %v2652 = vlaneseq
        %v2653 = vshrl.u32 %v2652, 7
        %v2654 = vsub.s32 5, %v2653
        %v2655 = vrot.slane %v2531, %v2654
        %v2656 = vlaneseq
        %v2657 = vshrl.u32 %v2656, 7
        %v2658 = vsub.s32 6, %v2657
        %v2659 = vrot.slane %v2531, %v2658
        %v2660 = vlaneseq
        %v2661 = vshrl.u32 %v2660, 7
        %v2662 = vsub.s32 7, %v2661
        %v2663 = vrot.slane %v2531, %v2662
        %v2696 = vsub.f32 %v2286, %v2539
        %v2697 = vsub.f32 %v2287, %v2543
        %v2698 = vsub.f32 %v2288, %v2547
        %v2699 = vsub.f32 %v2289, %v2551
        %v2700 = vsub.f32 %v2290, %v2555
        %v2701 = vsub.f32 %v2291, %v2559
        %v2702 = vsub.f32 %v2292, %v2563
        %v2703 = vsub.f32 %v2293, %v2567
        %v2704 = vsub.f32 %v2294, %v2571
        %v2705 = vsub.f32 %v2295, %v2575
        %v2706 = vsub.f32 %v2296, %v2579
        %v2707 = vsub.f32 %v2297, %v2583
        %v2708 = vsub.f32 %v2298, %v2587
        %v2709 = vsub.f32 %v2299, %v2591
        %v2710 = vsub.f32 %v2300, %v2595
        %v2711 = vsub.f32 %v2301, %v2599
        %v2712 = vsub.f32 %v2302, %v2603
        %v2713 = vsub.f32 %v2303, %v2607
        %v2714 = vsub.f32 %v2304, %v2611
        %v2715 = vsub.f32 %v2305, %v2615
        %v2716 = vsub.f32 %v2306, %v2619
        %v2717 = vsub.f32 %v2307, %v2623
        %v2718 = vsub.f32 %v2308, %v2627
        %v2719 = vsub.f32 %v2309, %v2631
        %v2720 = vsub.f32 %v2310, %v2635
        %v2721 = vsub.f32 %v2311, %v2639
        %v2722 = vsub.f32 %v2312, %v2643
        %v2723 = vsub.f32 %v2313, %v2647
        %v2724 = vsub.f32 %v2314, %v2651
        %v2725 = vsub.f32 %v2315, %v2655
        %v2726 = vsub.f32 %v2316, %v2659
        %v2727 = vsub.f32 %v2317, %v2663
        %v2728 = vmul.f32 %v2696, 1.442695
        %v2729 = vpow.pop %v2728
        %v2730 = vmul.f32 %v2697, 1.442695
        %v2731 = vpow.pop %v2730
        %v2732 = vmul.f32 %v2698, 1.442695
        %v2733 = vpow.pop %v2732
        %v2734 = vmul.f32 %v2699, 1.442695
        %v2735 = vpow.pop %v2734
        %v2736 = vmul.f32 %v2700, 1.442695
        %v2737 = vpow.pop %v2736
        %v2738 = vmul.f32 %v2701, 1.442695
        %v2739 = vpow.pop %v2738
        %v2740 = vmul.f32 %v2702, 1.442695
        %v2741 = vpow.pop %v2740
        %v2742 = vmul.f32 %v2703, 1.442695
        %v2743 = vpow.pop %v2742
        %v2744 = vmul.f32 %v2704, 1.442695
        %v2745 = vpow.pop %v2744
        %v2746 = vmul.f32 %v2705, 1.442695
        %v2747 = vpow.pop %v2746
        %v2748 = vmul.f32 %v2706, 1.442695
        %v2749 = vpow.pop %v2748
        %v2750 = vmul.f32 %v2707, 1.442695
        %v2751 = vpow.pop %v2750
        %v2752 = vmul.f32 %v2708, 1.442695
        %v2753 = vpow.pop %v2752
        %v2754 = vmul.f32 %v2709, 1.442695
        %v2755 = vpow.pop %v2754
        %v2756 = vmul.f32 %v2710, 1.442695
        %v2757 = vpow.pop %v2756
        %v2758 = vmul.f32 %v2711, 1.442695
        %v2759 = vpow.pop %v2758
        %v2760 = vmul.f32 %v2712, 1.442695
        %v2761 = vpow.pop %v2760
        %v2762 = vmul.f32 %v2713, 1.442695
        %v2763 = vpow.pop %v2762
        %v2764 = vmul.f32 %v2714, 1.442695
        %v2765 = vpow.pop %v2764
        %v2766 = vmul.f32 %v2715, 1.442695
        %v2767 = vpow.pop %v2766
        %v2768 = vmul.f32 %v2716, 1.442695
        %v2769 = vpow.pop %v2768
        %v2770 = vmul.f32 %v2717, 1.442695
        %v2771 = vpow.pop %v2770
        %v2772 = vmul.f32 %v2718, 1.442695
        %v2773 = vpow.pop %v2772
        %v2774 = vmul.f32 %v2719, 1.442695
        %v2775 = vpow.pop %v2774
        %v2776 = vmul.f32 %v2720, 1.442695
        %v2777 = vpow.pop %v2776
        %v2778 = vmul.f32 %v2721, 1.442695
        %v2779 = vpow.pop %v2778
        %v2780 = vmul.f32 %v2722, 1.442695
        %v2781 = vpow.pop %v2780
        %v2782 = vmul.f32 %v2723, 1.442695
        %v2783 = vpow.pop %v2782
        %v2784 = vmul.f32 %v2724, 1.442695
        %v2785 = vpow.pop %v2784
        %v2786 = vmul.f32 %v2725, 1.442695
        %v2787 = vpow.pop %v2786
        %v2788 = vmul.f32 %v2726, 1.442695
        %v2789 = vpow.pop %v2788
        %v2790 = vmul.f32 %v2727, 1.442695
        %v2791 = vpow.pop %v2790
        %2824 = vset.pattern.permute.xlu0 0
        %2825 = vperm.xlu0 %2824, %v2729
        %v2826 = vpop.permute.xlu0 %2825
        %2827 = vset.pattern.permute.xlu0 0
        %2828 = vperm.xlu0 %2827, %v2731
        %v2829 = vpop.permute.xlu0 %2828
        %2830 = vset.pattern.permute.xlu0 0
        %2831 = vperm.xlu0 %2830, %v2733
        %v2832 = vpop.permute.xlu0 %2831
        %2833 = vset.pattern.permute.xlu0 0
        %2834 = vperm.xlu0 %2833, %v2735
        %v2835 = vpop.permute.xlu0 %2834
        %2836 = vset.pattern.permute.xlu0 0
        %2837 = vperm.xlu0 %2836, %v2737
        %v2838 = vpop.permute.xlu0 %2837
        %2839 = vset.pattern.permute.xlu0 0
        %2840 = vperm.xlu0 %2839, %v2739
        %v2841 = vpop.permute.xlu0 %2840
        %2842 = vset.pattern.permute.xlu0 0
        %2843 = vperm.xlu0 %2842, %v2741
        %v2844 = vpop.permute.xlu0 %2843
        %2845 = vset.pattern.permute.xlu0 0
        %2846 = vperm.xlu0 %2845, %v2743
        %v2847 = vpop.permute.xlu0 %2846
        %2848 = vset.pattern.permute.xlu0 0
        %2849 = vperm.xlu0 %2848, %v2745
        %v2850 = vpop.permute.xlu0 %2849
        %2851 = vset.pattern.permute.xlu0 0
        %2852 = vperm.xlu0 %2851, %v2747
        %v2853 = vpop.permute.xlu0 %2852
        %2854 = vset.pattern.permute.xlu0 0
        %2855 = vperm.xlu0 %2854, %v2749
        %v2856 = vpop.permute.xlu0 %2855
        %2857 = vset.pattern.permute.xlu0 0
        %2858 = vperm.xlu0 %2857, %v2751
        %v2859 = vpop.permute.xlu0 %2858
        %2860 = vset.pattern.permute.xlu0 0
        %2861 = vperm.xlu0 %2860, %v2753
        %v2862 = vpop.permute.xlu0 %2861
        %2863 = vset.pattern.permute.xlu0 0
        %2864 = vperm.xlu0 %2863, %v2755
        %v2865 = vpop.permute.xlu0 %2864
        %2866 = vset.pattern.permute.xlu0 0
        %2867 = vperm.xlu0 %2866, %v2757
        %v2868 = vpop.permute.xlu0 %2867
        %2869 = vset.pattern.permute.xlu0 0
        %2870 = vperm.xlu0 %2869, %v2759
        %v2871 = vpop.permute.xlu0 %2870
        %2872 = vset.pattern.permute.xlu0 0
        %2873 = vperm.xlu0 %2872, %v2761
        %v2874 = vpop.permute.xlu0 %2873
        %2875 = vset.pattern.permute.xlu0 0
        %2876 = vperm.xlu0 %2875, %v2763
        %v2877 = vpop.permute.xlu0 %2876
        %2878 = vset.pattern.permute.xlu0 0
        %2879 = vperm.xlu0 %2878, %v2765
        %v2880 = vpop.permute.xlu0 %2879
        %2881 = vset.pattern.permute.xlu0 0
        %2882 = vperm.xlu0 %2881, %v2767
        %v2883 = vpop.permute.xlu0 %2882
        %2884 = vset.pattern.permute.xlu0 0
        %2885 = vperm.xlu0 %2884, %v2769
        %v2886 = vpop.permute.xlu0 %2885
        %2887 = vset.pattern.permute.xlu0 0
        %2888 = vperm.xlu0 %2887, %v2771
        %v2889 = vpop.permute.xlu0 %2888
        %2890 = vset.pattern.permute.xlu0 0
        %2891 = vperm.xlu0 %2890, %v2773
        %v2892 = vpop.permute.xlu0 %2891
        %2893 = vset.pattern.permute.xlu0 0
        %2894 = vperm.xlu0 %2893, %v2775
        %v2895 = vpop.permute.xlu0 %2894
        %2896 = vset.pattern.permute.xlu0 0
        %2897 = vperm.xlu0 %2896, %v2777
        %v2898 = vpop.permute.xlu0 %2897
        %2899 = vset.pattern.permute.xlu0 0
        %2900 = vperm.xlu0 %2899, %v2779
        %v2901 = vpop.permute.xlu0 %2900
        %2902 = vset.pattern.permute.xlu0 0
        %2903 = vperm.xlu0 %2902, %v2781
        %v2904 = vpop.permute.xlu0 %2903
        %2905 = vset.pattern.permute.xlu0 0
        %2906 = vperm.xlu0 %2905, %v2783
        %v2907 = vpop.permute.xlu0 %2906
        %2908 = vset.pattern.permute.xlu0 0
        %2909 = vperm.xlu0 %2908, %v2785
        %v2910 = vpop.permute.xlu0 %2909
        %2911 = vset.pattern.permute.xlu0 0
        %2912 = vperm.xlu0 %2911, %v2787
        %v2913 = vpop.permute.xlu0 %2912
        %2914 = vset.pattern.permute.xlu0 0
        %2915 = vperm.xlu0 %2914, %v2789
        %v2916 = vpop.permute.xlu0 %2915
        %2917 = vset.pattern.permute.xlu0 0
        %2918 = vperm.xlu0 %2917, %v2791
        %v2919 = vpop.permute.xlu0 %2918
        %v2920 = vlaneseq
        %v2921 = vshrl.u32 %v2920, 7
        %v2922 = vsub.s32 %v2351, %v2921
        %v2923 = vrot.slane %v2826, %v2922
        %v2924 = vlaneseq
        %v2925 = vshrl.u32 %v2924, 7
        %v2926 = vsub.s32 %v2351, %v2925
        %v2927 = vrot.slane %v2829, %v2926
        %v2928 = vlaneseq
        %v2929 = vshrl.u32 %v2928, 7
        %v2930 = vsub.s32 %v2351, %v2929
        %v2931 = vrot.slane %v2832, %v2930
        %v2932 = vlaneseq
        %v2933 = vshrl.u32 %v2932, 7
        %v2934 = vsub.s32 %v2351, %v2933
        %v2935 = vrot.slane %v2835, %v2934
        %v2936 = vlaneseq
        %v2937 = vshrl.u32 %v2936, 7
        %v2938 = vsub.s32 %v2351, %v2937
        %v2939 = vrot.slane %v2838, %v2938
        %v2940 = vlaneseq
        %v2941 = vshrl.u32 %v2940, 7
        %v2942 = vsub.s32 %v2351, %v2941
        %v2943 = vrot.slane %v2841, %v2942
        %v2944 = vlaneseq
        %v2945 = vshrl.u32 %v2944, 7
        %v2946 = vsub.s32 %v2351, %v2945
        %v2947 = vrot.slane %v2844, %v2946
        %v2948 = vlaneseq
        %v2949 = vshrl.u32 %v2948, 7
        %v2950 = vsub.s32 %v2351, %v2949
        %v2951 = vrot.slane %v2847, %v2950
        %v2952 = vlaneseq
        %v2953 = vshrl.u32 %v2952, 7
        %v2954 = vsub.s32 %v2351, %v2953
        %v2955 = vrot.slane %v2850, %v2954
        %v2956 = vlaneseq
        %v2957 = vshrl.u32 %v2956, 7
        %v2958 = vsub.s32 %v2351, %v2957
        %v2959 = vrot.slane %v2853, %v2958
        %v2960 = vlaneseq
        %v2961 = vshrl.u32 %v2960, 7
        %v2962 = vsub.s32 %v2351, %v2961
        %v2963 = vrot.slane %v2856, %v2962
        %v2964 = vlaneseq
        %v2965 = vshrl.u32 %v2964, 7
        %v2966 = vsub.s32 %v2351, %v2965
        %v2967 = vrot.slane %v2859, %v2966
        %v2968 = vlaneseq
        %v2969 = vshrl.u32 %v2968, 7
        %v2970 = vsub.s32 %v2351, %v2969
        %v2971 = vrot.slane %v2862, %v2970
        %v2972 = vlaneseq
        %v2973 = vshrl.u32 %v2972, 7
        %v2974 = vsub.s32 %v2351, %v2973
        %v2975 = vrot.slane %v2865, %v2974
        %v2976 = vlaneseq
        %v2977 = vshrl.u32 %v2976, 7
        %v2978 = vsub.s32 %v2351, %v2977
        %v2979 = vrot.slane %v2868, %v2978
        %v2980 = vlaneseq
        %v2981 = vshrl.u32 %v2980, 7
        %v2982 = vsub.s32 %v2351, %v2981
        %v2983 = vrot.slane %v2871, %v2982
        %v2984 = vlaneseq
        %v2985 = vshrl.u32 %v2984, 7
        %v2986 = vsub.s32 %v2351, %v2985
        %v2987 = vrot.slane %v2874, %v2986
        %v2988 = vlaneseq
        %v2989 = vshrl.u32 %v2988, 7
        %v2990 = vsub.s32 %v2351, %v2989
        %v2991 = vrot.slane %v2877, %v2990
        %v2992 = vlaneseq
        %v2993 = vshrl.u32 %v2992, 7
        %v2994 = vsub.s32 %v2351, %v2993
        %v2995 = vrot.slane %v2880, %v2994
        %v2996 = vlaneseq
        %v2997 = vshrl.u32 %v2996, 7
        %v2998 = vsub.s32 %v2351, %v2997
        %v2999 = vrot.slane %v2883, %v2998
        %v3000 = vlaneseq
        %v3001 = vshrl.u32 %v3000, 7
        %v3002 = vsub.s32 %v2351, %v3001
        %v3003 = vrot.slane %v2886, %v3002
        %v3004 = vlaneseq
        %v3005 = vshrl.u32 %v3004, 7
        %v3006 = vsub.s32 %v2351, %v3005
        %v3007 = vrot.slane %v2889, %v3006
        %v3008 = vlaneseq
        %v3009 = vshrl.u32 %v3008, 7
        %v3010 = vsub.s32 %v2351, %v3009
        %v3011 = vrot.slane %v2892, %v3010
        %v3012 = vlaneseq
        %v3013 = vshrl.u32 %v3012, 7
        %v3014 = vsub.s32 %v2351, %v3013
        %v3015 = vrot.slane %v2895, %v3014
        %v3016 = vlaneseq
        %v3017 = vshrl.u32 %v3016, 7
        %v3018 = vsub.s32 %v2351, %v3017
        %v3019 = vrot.slane %v2898, %v3018
        %v3020 = vlaneseq
        %v3021 = vshrl.u32 %v3020, 7
        %v3022 = vsub.s32 %v2351, %v3021
        %v3023 = vrot.slane %v2901, %v3022
        %v3024 = vlaneseq
        %v3025 = vshrl.u32 %v3024, 7
        %v3026 = vsub.s32 %v2351, %v3025
        %v3027 = vrot.slane %v2904, %v3026
        %v3028 = vlaneseq
        %v3029 = vshrl.u32 %v3028, 7
        %v3030 = vsub.s32 %v2351, %v3029
        %v3031 = vrot.slane %v2907, %v3030
        %v3032 = vlaneseq
        %v3033 = vshrl.u32 %v3032, 7
        %v3034 = vsub.s32 %v2351, %v3033
        %v3035 = vrot.slane %v2910, %v3034
        %v3036 = vlaneseq
        %v3037 = vshrl.u32 %v3036, 7
        %v3038 = vsub.s32 %v2351, %v3037
        %v3039 = vrot.slane %v2913, %v3038
        %v3040 = vlaneseq
        %v3041 = vshrl.u32 %v3040, 7
        %v3042 = vsub.s32 %v2351, %v3041
        %v3043 = vrot.slane %v2916, %v3042
        %v3044 = vlaneseq
        %v3045 = vshrl.u32 %v3044, 7
        %v3046 = vsub.s32 %v2351, %v3045
        %v3047 = vrot.slane %v2919, %v3046
        %v3048 = vsel %vm2480, %v2927, %v2923
        %v3049 = vsel %vm2482, %v2931, %v3048
        %v3050 = vsel %vm2484, %v2935, %v3049
        %v3051 = vsel %vm2486, %v2939, %v3050
        %v3052 = vsel %vm2488, %v2943, %v3051
        %v3053 = vsel %vm2490, %v2947, %v3052
        %v3054 = vsel %vm2492, %v2951, %v3053
        %v3055 = vsel %vm2480, %v2959, %v2955
        %v3056 = vsel %vm2482, %v2963, %v3055
        %v3057 = vsel %vm2484, %v2967, %v3056
        %v3058 = vsel %vm2486, %v2971, %v3057
        %v3059 = vsel %vm2488, %v2975, %v3058
        %v3060 = vsel %vm2490, %v2979, %v3059
        %v3061 = vsel %vm2492, %v2983, %v3060
        %v3062 = vsel %vm2480, %v2991, %v2987
        %v3063 = vsel %vm2482, %v2995, %v3062
        %v3064 = vsel %vm2484, %v2999, %v3063
        %v3065 = vsel %vm2486, %v3003, %v3064
        %v3066 = vsel %vm2488, %v3007, %v3065
        %v3067 = vsel %vm2490, %v3011, %v3066
        %v3068 = vsel %vm2492, %v3015, %v3067
        %v3069 = vsel %vm2480, %v3023, %v3019
        %v3070 = vsel %vm2482, %v3027, %v3069
        %v3071 = vsel %vm2484, %v3031, %v3070
        %v3072 = vsel %vm2486, %v3035, %v3071
        %v3073 = vsel %vm2488, %v3039, %v3072
        %v3074 = vsel %vm2490, %v3043, %v3073
        %v3075 = vsel %vm2492, %v3047, %v3074
        %v3080 = vsel %vm2519, %v3054, 0.0
        %3081 = vadd.xlane.f32.xlu0 %v3080
        %v3082 = vpop.xlane.xlu0 %3081
        %v3083 = vsel %vm2519, %v3061, 0.0
        %3084 = vadd.xlane.f32.xlu0 %v3083
        %v3085 = vpop.xlane.xlu0 %3084
        %v3086 = vsel %vm2519, %v3068, 0.0
        %3087 = vadd.xlane.f32.xlu0 %v3086
        %v3088 = vpop.xlane.xlu0 %3087
        %v3089 = vsel %vm2519, %v3075, 0.0
        %3090 = vadd.xlane.f32.xlu0 %v3089
        %v3091 = vpop.xlane.xlu0 %3090
        %v3092 = vrcp.pop %v3082
        %v3093 = vrcp.pop %v3085
        %v3094 = vrcp.pop %v3088
        %v3095 = vrcp.pop %v3091
        %v3100 = vlaneseq
        %v3101 = vshrl.u32 %v3100, 7
        %v3102 = vsub.s32 0, %v3101
        %v3103 = vrot.slane %v3092, %v3102
        %v3104 = vlaneseq
        %v3105 = vshrl.u32 %v3104, 7
        %v3106 = vsub.s32 1, %v3105
        %v3107 = vrot.slane %v3092, %v3106
        %v3108 = vlaneseq
        %v3109 = vshrl.u32 %v3108, 7
        %v3110 = vsub.s32 2, %v3109
        %v3111 = vrot.slane %v3092, %v3110
        %v3112 = vlaneseq
        %v3113 = vshrl.u32 %v3112, 7
        %v3114 = vsub.s32 3, %v3113
        %v3115 = vrot.slane %v3092, %v3114
        %v3116 = vlaneseq
        %v3117 = vshrl.u32 %v3116, 7
        %v3118 = vsub.s32 4, %v3117
        %v3119 = vrot.slane %v3092, %v3118
        %v3120 = vlaneseq
        %v3121 = vshrl.u32 %v3120, 7
        %v3122 = vsub.s32 5, %v3121
        %v3123 = vrot.slane %v3092, %v3122
        %v3124 = vlaneseq
        %v3125 = vshrl.u32 %v3124, 7
        %v3126 = vsub.s32 6, %v3125
        %v3127 = vrot.slane %v3092, %v3126
        %v3128 = vlaneseq
        %v3129 = vshrl.u32 %v3128, 7
        %v3130 = vsub.s32 7, %v3129
        %v3131 = vrot.slane %v3092, %v3130
        %v3132 = vlaneseq
        %v3133 = vshrl.u32 %v3132, 7
        %v3134 = vsub.s32 0, %v3133
        %v3135 = vrot.slane %v3093, %v3134
        %v3136 = vlaneseq
        %v3137 = vshrl.u32 %v3136, 7
        %v3138 = vsub.s32 1, %v3137
        %v3139 = vrot.slane %v3093, %v3138
        %v3140 = vlaneseq
        %v3141 = vshrl.u32 %v3140, 7
        %v3142 = vsub.s32 2, %v3141
        %v3143 = vrot.slane %v3093, %v3142
        %v3144 = vlaneseq
        %v3145 = vshrl.u32 %v3144, 7
        %v3146 = vsub.s32 3, %v3145
        %v3147 = vrot.slane %v3093, %v3146
        %v3148 = vlaneseq
        %v3149 = vshrl.u32 %v3148, 7
        %v3150 = vsub.s32 4, %v3149
        %v3151 = vrot.slane %v3093, %v3150
        %v3152 = vlaneseq
        %v3153 = vshrl.u32 %v3152, 7
        %v3154 = vsub.s32 5, %v3153
        %v3155 = vrot.slane %v3093, %v3154
        %v3156 = vlaneseq
        %v3157 = vshrl.u32 %v3156, 7
        %v3158 = vsub.s32 6, %v3157
        %v3159 = vrot.slane %v3093, %v3158
        %v3160 = vlaneseq
        %v3161 = vshrl.u32 %v3160, 7
        %v3162 = vsub.s32 7, %v3161
        %v3163 = vrot.slane %v3093, %v3162
        %v3164 = vlaneseq
        %v3165 = vshrl.u32 %v3164, 7
        %v3166 = vsub.s32 0, %v3165
        %v3167 = vrot.slane %v3094, %v3166
        %v3168 = vlaneseq
        %v3169 = vshrl.u32 %v3168, 7
        %v3170 = vsub.s32 1, %v3169
        %v3171 = vrot.slane %v3094, %v3170
        %v3172 = vlaneseq
        %v3173 = vshrl.u32 %v3172, 7
        %v3174 = vsub.s32 2, %v3173
        %v3175 = vrot.slane %v3094, %v3174
        %v3176 = vlaneseq
        %v3177 = vshrl.u32 %v3176, 7
        %v3178 = vsub.s32 3, %v3177
        %v3179 = vrot.slane %v3094, %v3178
        %v3180 = vlaneseq
        %v3181 = vshrl.u32 %v3180, 7
        %v3182 = vsub.s32 4, %v3181
        %v3183 = vrot.slane %v3094, %v3182
        %v3184 = vlaneseq
        %v3185 = vshrl.u32 %v3184, 7
        %v3186 = vsub.s32 5, %v3185
        %v3187 = vrot.slane %v3094, %v3186
        %v3188 = vlaneseq
        %v3189 = vshrl.u32 %v3188, 7
        %v3190 = vsub.s32 6, %v3189
        %v3191 = vrot.slane %v3094, %v3190
        %v3192 = vlaneseq
        %v3193 = vshrl.u32 %v3192, 7
        %v3194 = vsub.s32 7, %v3193
        %v3195 = vrot.slane %v3094, %v3194
        %v3196 = vlaneseq
        %v3197 = vshrl.u32 %v3196, 7
        %v3198 = vsub.s32 0, %v3197
        %v3199 = vrot.slane %v3095, %v3198
        %v3200 = vlaneseq
        %v3201 = vshrl.u32 %v3200, 7
        %v3202 = vsub.s32 1, %v3201
        %v3203 = vrot.slane %v3095, %v3202
        %v3204 = vlaneseq
        %v3205 = vshrl.u32 %v3204, 7
        %v3206 = vsub.s32 2, %v3205
        %v3207 = vrot.slane %v3095, %v3206
        %v3208 = vlaneseq
        %v3209 = vshrl.u32 %v3208, 7
        %v3210 = vsub.s32 3, %v3209
        %v3211 = vrot.slane %v3095, %v3210
        %v3212 = vlaneseq
        %v3213 = vshrl.u32 %v3212, 7
        %v3214 = vsub.s32 4, %v3213
        %v3215 = vrot.slane %v3095, %v3214
        %v3216 = vlaneseq
        %v3217 = vshrl.u32 %v3216, 7
        %v3218 = vsub.s32 5, %v3217
        %v3219 = vrot.slane %v3095, %v3218
        %v3220 = vlaneseq
        %v3221 = vshrl.u32 %v3220, 7
        %v3222 = vsub.s32 6, %v3221
        %v3223 = vrot.slane %v3095, %v3222
        %v3224 = vlaneseq
        %v3225 = vshrl.u32 %v3224, 7
        %v3226 = vsub.s32 7, %v3225
        %v3227 = vrot.slane %v3095, %v3226
        %v3260 = vmul.f32 %v2729, %v3103
        %v3261 = vmul.f32 %v2731, %v3107
        %v3262 = vmul.f32 %v2733, %v3111
        %v3263 = vmul.f32 %v2735, %v3115
        %v3264 = vmul.f32 %v2737, %v3119
        %v3265 = vmul.f32 %v2739, %v3123
        %v3266 = vmul.f32 %v2741, %v3127
        %v3267 = vmul.f32 %v2743, %v3131
        %v3268 = vmul.f32 %v2745, %v3135
        %v3269 = vmul.f32 %v2747, %v3139
        %v3270 = vmul.f32 %v2749, %v3143
        %v3271 = vmul.f32 %v2751, %v3147
        %v3272 = vmul.f32 %v2753, %v3151
        %v3273 = vmul.f32 %v2755, %v3155
        %v3274 = vmul.f32 %v2757, %v3159
        %v3275 = vmul.f32 %v2759, %v3163
        %v3276 = vmul.f32 %v2761, %v3167
        %v3277 = vmul.f32 %v2763, %v3171
        %v3278 = vmul.f32 %v2765, %v3175
        %v3279 = vmul.f32 %v2767, %v3179
        %v3280 = vmul.f32 %v2769, %v3183
        %v3281 = vmul.f32 %v2771, %v3187
        %v3282 = vmul.f32 %v2773, %v3191
        %v3283 = vmul.f32 %v2775, %v3195
        %v3284 = vmul.f32 %v2777, %v3199
        %v3285 = vmul.f32 %v2779, %v3203
        %v3286 = vmul.f32 %v2781, %v3207
        %v3287 = vmul.f32 %v2783, %v3211
        %v3288 = vmul.f32 %v2785, %v3215
        %v3289 = vmul.f32 %v2787, %v3219
        %v3290 = vmul.f32 %v2789, %v3223
        %v3291 = vmul.f32 %v2791, %v3227
        %3293 = vset.pattern.permute.xlu0 0
        %3294 = vperm.xlu0 %3293, %v3260
        %v3295 = vpop.permute.xlu0 %3294
        %3298 = vset.pattern.permute.xlu0 0
        %3299 = vperm.xlu0 %3298, %v3261
        %v3300 = vpop.permute.xlu0 %3299
        %3303 = vset.pattern.permute.xlu0 0
        %3304 = vperm.xlu0 %3303, %v3262
        %v3305 = vpop.permute.xlu0 %3304
        %3308 = vset.pattern.permute.xlu0 0
        %3309 = vperm.xlu0 %3308, %v3263
        %v3310 = vpop.permute.xlu0 %3309
        %3313 = vset.pattern.permute.xlu0 0
        %3314 = vperm.xlu0 %3313, %v3264
        %v3315 = vpop.permute.xlu0 %3314
        %3318 = vset.pattern.permute.xlu0 0
        %3319 = vperm.xlu0 %3318, %v3265
        %v3320 = vpop.permute.xlu0 %3319
        %3323 = vset.pattern.permute.xlu0 0
        %3324 = vperm.xlu0 %3323, %v3266
        %v3325 = vpop.permute.xlu0 %3324
        %3328 = vset.pattern.permute.xlu0 0
        %3329 = vperm.xlu0 %3328, %v3267
        %v3330 = vpop.permute.xlu0 %3329
        %3333 = vset.pattern.permute.xlu0 0
        %3334 = vperm.xlu0 %3333, %v3268
        %v3335 = vpop.permute.xlu0 %3334
        %3338 = vset.pattern.permute.xlu0 0
        %3339 = vperm.xlu0 %3338, %v3269
        %v3340 = vpop.permute.xlu0 %3339
        %3343 = vset.pattern.permute.xlu0 0
        %3344 = vperm.xlu0 %3343, %v3270
        %v3345 = vpop.permute.xlu0 %3344
        %3348 = vset.pattern.permute.xlu0 0
        %3349 = vperm.xlu0 %3348, %v3271
        %v3350 = vpop.permute.xlu0 %3349
        %3353 = vset.pattern.permute.xlu0 0
        %3354 = vperm.xlu0 %3353, %v3272
        %v3355 = vpop.permute.xlu0 %3354
        %3358 = vset.pattern.permute.xlu0 0
        %3359 = vperm.xlu0 %3358, %v3273
        %v3360 = vpop.permute.xlu0 %3359
        %3363 = vset.pattern.permute.xlu0 0
        %3364 = vperm.xlu0 %3363, %v3274
        %v3365 = vpop.permute.xlu0 %3364
        %3368 = vset.pattern.permute.xlu0 0
        %3369 = vperm.xlu0 %3368, %v3275
        %v3370 = vpop.permute.xlu0 %3369
        %3373 = vset.pattern.permute.xlu0 0
        %3374 = vperm.xlu0 %3373, %v3276
        %v3375 = vpop.permute.xlu0 %3374
        %3378 = vset.pattern.permute.xlu0 0
        %3379 = vperm.xlu0 %3378, %v3277
        %v3380 = vpop.permute.xlu0 %3379
        %3383 = vset.pattern.permute.xlu0 0
        %3384 = vperm.xlu0 %3383, %v3278
        %v3385 = vpop.permute.xlu0 %3384
        %3388 = vset.pattern.permute.xlu0 0
        %3389 = vperm.xlu0 %3388, %v3279
        %v3390 = vpop.permute.xlu0 %3389
        %3393 = vset.pattern.permute.xlu0 0
        %3394 = vperm.xlu0 %3393, %v3280
        %v3395 = vpop.permute.xlu0 %3394
        %3398 = vset.pattern.permute.xlu0 0
        %3399 = vperm.xlu0 %3398, %v3281
        %v3400 = vpop.permute.xlu0 %3399
        %3403 = vset.pattern.permute.xlu0 0
        %3404 = vperm.xlu0 %3403, %v3282
        %v3405 = vpop.permute.xlu0 %3404
        %3408 = vset.pattern.permute.xlu0 0
        %3409 = vperm.xlu0 %3408, %v3283
        %v3410 = vpop.permute.xlu0 %3409
        %3413 = vset.pattern.permute.xlu0 0
        %3414 = vperm.xlu0 %3413, %v3284
        %v3415 = vpop.permute.xlu0 %3414
        %3418 = vset.pattern.permute.xlu0 0
        %3419 = vperm.xlu0 %3418, %v3285
        %v3420 = vpop.permute.xlu0 %3419
        %3423 = vset.pattern.permute.xlu0 0
        %3424 = vperm.xlu0 %3423, %v3286
        %v3425 = vpop.permute.xlu0 %3424
        %3428 = vset.pattern.permute.xlu0 0
        %3429 = vperm.xlu0 %3428, %v3287
        %v3430 = vpop.permute.xlu0 %3429
        %3433 = vset.pattern.permute.xlu0 0
        %3434 = vperm.xlu0 %3433, %v3288
        %v3435 = vpop.permute.xlu0 %3434
        %3438 = vset.pattern.permute.xlu0 0
        %3439 = vperm.xlu0 %3438, %v3289
        %v3440 = vpop.permute.xlu0 %3439
        %3443 = vset.pattern.permute.xlu0 0
        %3444 = vperm.xlu0 %3443, %v3290
        %v3445 = vpop.permute.xlu0 %3444
        %3448 = vset.pattern.permute.xlu0 0
        %3449 = vperm.xlu0 %3448, %v3291
        %v3450 = vpop.permute.xlu0 %3449
        %v3452 = vmul.f32 %v1212, %v3295
        %v3453 = vmul.f32 %v1213, %v3300
        %v3454 = vmul.f32 %v1214, %v3305
        %v3455 = vmul.f32 %v1215, %v3310
        %v3456 = vmul.f32 %v1216, %v3315
        %v3457 = vmul.f32 %v1217, %v3320
        %v3458 = vmul.f32 %v1218, %v3325
        %v3459 = vmul.f32 %v1219, %v3330
        %v3460 = vmul.f32 %v1220, %v3335
        %v3461 = vmul.f32 %v1221, %v3340
        %v3462 = vmul.f32 %v1222, %v3345
        %v3463 = vmul.f32 %v1223, %v3350
        %v3464 = vmul.f32 %v1224, %v3355
        %v3465 = vmul.f32 %v1225, %v3360
        %v3466 = vmul.f32 %v1226, %v3365
        %v3467 = vmul.f32 %v1227, %v3370
        %v3468 = vmul.f32 %v1228, %v3375
        %v3469 = vmul.f32 %v1229, %v3380
        %v3470 = vmul.f32 %v1230, %v3385
        %v3471 = vmul.f32 %v1231, %v3390
        %v3472 = vmul.f32 %v1232, %v3395
        %v3473 = vmul.f32 %v1233, %v3400
        %v3474 = vmul.f32 %v1234, %v3405
        %v3475 = vmul.f32 %v1235, %v3410
        %v3476 = vmul.f32 %v1236, %v3415
        %v3477 = vmul.f32 %v1237, %v3420
        %v3478 = vmul.f32 %v1238, %v3425
        %v3479 = vmul.f32 %v1239, %v3430
        %v3480 = vmul.f32 %v1240, %v3435
        %v3481 = vmul.f32 %v1241, %v3440
        %v3482 = vmul.f32 %v1242, %v3445
        %v3483 = vmul.f32 %v1243, %v3450
        %v3484 = vrot.slane %v3452, 4
        %v3485 = vadd.f32 %v3452, %v3484
        %v3486 = vrot.slane %v3485, 2
        %v3487 = vadd.f32 %v3485, %v3486
        %v3488 = vrot.slane %v3487, 1
        %v3489 = vadd.f32 %v3487, %v3488
        %v3490 = vrot.slane %v3453, 4
        %v3491 = vadd.f32 %v3453, %v3490
        %v3492 = vrot.slane %v3491, 2
        %v3493 = vadd.f32 %v3491, %v3492
        %v3494 = vrot.slane %v3493, 1
        %v3495 = vadd.f32 %v3493, %v3494
        %v3496 = vrot.slane %v3454, 4
        %v3497 = vadd.f32 %v3454, %v3496
        %v3498 = vrot.slane %v3497, 2
        %v3499 = vadd.f32 %v3497, %v3498
        %v3500 = vrot.slane %v3499, 1
        %v3501 = vadd.f32 %v3499, %v3500
        %v3502 = vrot.slane %v3455, 4
        %v3503 = vadd.f32 %v3455, %v3502
        %v3504 = vrot.slane %v3503, 2
        %v3505 = vadd.f32 %v3503, %v3504
        %v3506 = vrot.slane %v3505, 1
        %v3507 = vadd.f32 %v3505, %v3506
        %v3508 = vrot.slane %v3456, 4
        %v3509 = vadd.f32 %v3456, %v3508
        %v3510 = vrot.slane %v3509, 2
        %v3511 = vadd.f32 %v3509, %v3510
        %v3512 = vrot.slane %v3511, 1
        %v3513 = vadd.f32 %v3511, %v3512
        %v3514 = vrot.slane %v3457, 4
        %v3515 = vadd.f32 %v3457, %v3514
        %v3516 = vrot.slane %v3515, 2
        %v3517 = vadd.f32 %v3515, %v3516
        %v3518 = vrot.slane %v3517, 1
        %v3519 = vadd.f32 %v3517, %v3518
        %v3520 = vrot.slane %v3458, 4
        %v3521 = vadd.f32 %v3458, %v3520
        %v3522 = vrot.slane %v3521, 2
        %v3523 = vadd.f32 %v3521, %v3522
        %v3524 = vrot.slane %v3523, 1
        %v3525 = vadd.f32 %v3523, %v3524
        %v3526 = vrot.slane %v3459, 4
        %v3527 = vadd.f32 %v3459, %v3526
        %v3528 = vrot.slane %v3527, 2
        %v3529 = vadd.f32 %v3527, %v3528
        %v3530 = vrot.slane %v3529, 1
        %v3531 = vadd.f32 %v3529, %v3530
        %v3532 = vrot.slane %v3460, 4
        %v3533 = vadd.f32 %v3460, %v3532
        %v3534 = vrot.slane %v3533, 2
        %v3535 = vadd.f32 %v3533, %v3534
        %v3536 = vrot.slane %v3535, 1
        %v3537 = vadd.f32 %v3535, %v3536
        %v3538 = vrot.slane %v3461, 4
        %v3539 = vadd.f32 %v3461, %v3538
        %v3540 = vrot.slane %v3539, 2
        %v3541 = vadd.f32 %v3539, %v3540
        %v3542 = vrot.slane %v3541, 1
        %v3543 = vadd.f32 %v3541, %v3542
        %v3544 = vrot.slane %v3462, 4
        %v3545 = vadd.f32 %v3462, %v3544
        %v3546 = vrot.slane %v3545, 2
        %v3547 = vadd.f32 %v3545, %v3546
        %v3548 = vrot.slane %v3547, 1
        %v3549 = vadd.f32 %v3547, %v3548
        %v3550 = vrot.slane %v3463, 4
        %v3551 = vadd.f32 %v3463, %v3550
        %v3552 = vrot.slane %v3551, 2
        %v3553 = vadd.f32 %v3551, %v3552
        %v3554 = vrot.slane %v3553, 1
        %v3555 = vadd.f32 %v3553, %v3554
        %v3556 = vrot.slane %v3464, 4
        %v3557 = vadd.f32 %v3464, %v3556
        %v3558 = vrot.slane %v3557, 2
        %v3559 = vadd.f32 %v3557, %v3558
        %v3560 = vrot.slane %v3559, 1
        %v3561 = vadd.f32 %v3559, %v3560
        %v3562 = vrot.slane %v3465, 4
        %v3563 = vadd.f32 %v3465, %v3562
        %v3564 = vrot.slane %v3563, 2
        %v3565 = vadd.f32 %v3563, %v3564
        %v3566 = vrot.slane %v3565, 1
        %v3567 = vadd.f32 %v3565, %v3566
        %v3568 = vrot.slane %v3466, 4
        %v3569 = vadd.f32 %v3466, %v3568
        %v3570 = vrot.slane %v3569, 2
        %v3571 = vadd.f32 %v3569, %v3570
        %v3572 = vrot.slane %v3571, 1
        %v3573 = vadd.f32 %v3571, %v3572
        %v3574 = vrot.slane %v3467, 4
        %v3575 = vadd.f32 %v3467, %v3574
        %v3576 = vrot.slane %v3575, 2
        %v3577 = vadd.f32 %v3575, %v3576
        %v3578 = vrot.slane %v3577, 1
        %v3579 = vadd.f32 %v3577, %v3578
        %v3580 = vrot.slane %v3468, 4
        %v3581 = vadd.f32 %v3468, %v3580
        %v3582 = vrot.slane %v3581, 2
        %v3583 = vadd.f32 %v3581, %v3582
        %v3584 = vrot.slane %v3583, 1
        %v3585 = vadd.f32 %v3583, %v3584
        %v3586 = vrot.slane %v3469, 4
        %v3587 = vadd.f32 %v3469, %v3586
        %v3588 = vrot.slane %v3587, 2
        %v3589 = vadd.f32 %v3587, %v3588
        %v3590 = vrot.slane %v3589, 1
        %v3591 = vadd.f32 %v3589, %v3590
        %v3592 = vrot.slane %v3470, 4
        %v3593 = vadd.f32 %v3470, %v3592
        %v3594 = vrot.slane %v3593, 2
        %v3595 = vadd.f32 %v3593, %v3594
        %v3596 = vrot.slane %v3595, 1
        %v3597 = vadd.f32 %v3595, %v3596
        %v3598 = vrot.slane %v3471, 4
        %v3599 = vadd.f32 %v3471, %v3598
        %v3600 = vrot.slane %v3599, 2
        %v3601 = vadd.f32 %v3599, %v3600
        %v3602 = vrot.slane %v3601, 1
        %v3603 = vadd.f32 %v3601, %v3602
        %v3604 = vrot.slane %v3472, 4
        %v3605 = vadd.f32 %v3472, %v3604
        %v3606 = vrot.slane %v3605, 2
        %v3607 = vadd.f32 %v3605, %v3606
        %v3608 = vrot.slane %v3607, 1
        %v3609 = vadd.f32 %v3607, %v3608
        %v3610 = vrot.slane %v3473, 4
        %v3611 = vadd.f32 %v3473, %v3610
        %v3612 = vrot.slane %v3611, 2
        %v3613 = vadd.f32 %v3611, %v3612
        %v3614 = vrot.slane %v3613, 1
        %v3615 = vadd.f32 %v3613, %v3614
        %v3616 = vrot.slane %v3474, 4
        %v3617 = vadd.f32 %v3474, %v3616
        %v3618 = vrot.slane %v3617, 2
        %v3619 = vadd.f32 %v3617, %v3618
        %v3620 = vrot.slane %v3619, 1
        %v3621 = vadd.f32 %v3619, %v3620
        %v3622 = vrot.slane %v3475, 4
        %v3623 = vadd.f32 %v3475, %v3622
        %v3624 = vrot.slane %v3623, 2
        %v3625 = vadd.f32 %v3623, %v3624
        %v3626 = vrot.slane %v3625, 1
        %v3627 = vadd.f32 %v3625, %v3626
        %v3628 = vrot.slane %v3476, 4
        %v3629 = vadd.f32 %v3476, %v3628
        %v3630 = vrot.slane %v3629, 2
        %v3631 = vadd.f32 %v3629, %v3630
        %v3632 = vrot.slane %v3631, 1
        %v3633 = vadd.f32 %v3631, %v3632
        %v3634 = vrot.slane %v3477, 4
        %v3635 = vadd.f32 %v3477, %v3634
        %v3636 = vrot.slane %v3635, 2
        %v3637 = vadd.f32 %v3635, %v3636
        %v3638 = vrot.slane %v3637, 1
        %v3639 = vadd.f32 %v3637, %v3638
        %v3640 = vrot.slane %v3478, 4
        %v3641 = vadd.f32 %v3478, %v3640
        %v3642 = vrot.slane %v3641, 2
        %v3643 = vadd.f32 %v3641, %v3642
        %v3644 = vrot.slane %v3643, 1
        %v3645 = vadd.f32 %v3643, %v3644
        %v3646 = vrot.slane %v3479, 4
        %v3647 = vadd.f32 %v3479, %v3646
        %v3648 = vrot.slane %v3647, 2
        %v3649 = vadd.f32 %v3647, %v3648
        %v3650 = vrot.slane %v3649, 1
        %v3651 = vadd.f32 %v3649, %v3650
        %v3652 = vrot.slane %v3480, 4
        %v3653 = vadd.f32 %v3480, %v3652
        %v3654 = vrot.slane %v3653, 2
        %v3655 = vadd.f32 %v3653, %v3654
        %v3656 = vrot.slane %v3655, 1
        %v3657 = vadd.f32 %v3655, %v3656
        %v3658 = vrot.slane %v3481, 4
        %v3659 = vadd.f32 %v3481, %v3658
        %v3660 = vrot.slane %v3659, 2
        %v3661 = vadd.f32 %v3659, %v3660
        %v3662 = vrot.slane %v3661, 1
        %v3663 = vadd.f32 %v3661, %v3662
        %v3664 = vrot.slane %v3482, 4
        %v3665 = vadd.f32 %v3482, %v3664
        %v3666 = vrot.slane %v3665, 2
        %v3667 = vadd.f32 %v3665, %v3666
        %v3668 = vrot.slane %v3667, 1
        %v3669 = vadd.f32 %v3667, %v3668
        %v3670 = vrot.slane %v3483, 4
        %v3671 = vadd.f32 %v3483, %v3670
        %v3672 = vrot.slane %v3671, 2
        %v3673 = vadd.f32 %v3671, %v3672
        %v3674 = vrot.slane %v3673, 1
        %v3675 = vadd.f32 %v3673, %v3674
        %v3708 = vsel %vm2480, %v3495, %v3489
        %v3709 = vsel %vm2482, %v3501, %v3708
        %v3710 = vsel %vm2484, %v3507, %v3709
        %v3711 = vsel %vm2486, %v3513, %v3710
        %v3712 = vsel %vm2488, %v3519, %v3711
        %v3713 = vsel %vm2490, %v3525, %v3712
        %v3714 = vsel %vm2492, %v3531, %v3713
        %v3715 = vsel %vm2480, %v3543, %v3537
        %v3716 = vsel %vm2482, %v3549, %v3715
        %v3717 = vsel %vm2484, %v3555, %v3716
        %v3718 = vsel %vm2486, %v3561, %v3717
        %v3719 = vsel %vm2488, %v3567, %v3718
        %v3720 = vsel %vm2490, %v3573, %v3719
        %v3721 = vsel %vm2492, %v3579, %v3720
        %v3722 = vsel %vm2480, %v3591, %v3585
        %v3723 = vsel %vm2482, %v3597, %v3722
        %v3724 = vsel %vm2484, %v3603, %v3723
        %v3725 = vsel %vm2486, %v3609, %v3724
        %v3726 = vsel %vm2488, %v3615, %v3725
        %v3727 = vsel %vm2490, %v3621, %v3726
        %v3728 = vsel %vm2492, %v3627, %v3727
        %v3729 = vsel %vm2480, %v3639, %v3633
        %v3730 = vsel %vm2482, %v3645, %v3729
        %v3731 = vsel %vm2484, %v3651, %v3730
        %v3732 = vsel %vm2486, %v3657, %v3731
        %v3733 = vsel %vm2488, %v3663, %v3732
        %v3734 = vsel %vm2490, %v3669, %v3733
        %v3735 = vsel %vm2492, %v3675, %v3734
        %3740 = vst [vmem:[%s595] sm:$0xff] %v3714
        %3741 = vst [vmem:[%s595 + $0x8] sm:$0xff] %v3721
        %3742 = vst [vmem:[%s595 + $0x10] sm:$0xff] %v3728
        %3743 = vst [vmem:[%s595 + $0x18] sm:$0xff] %v3735
        %s3744 = sand.u32 %s333, 1
        %s3745 = scalar_lea.sflag [#allocation5], %s3744
        %s3746 = sand.u32 %s333, 1
        %s3747 = smul.addr %s3746, 32
        %s3748 = scalar_lea.vmem [#allocation15], %s3747
        // Predicated region
        $region101: #{tpu_custom_call.1} parent=71 // pred_check
          %p3749 = pneg %p343
        $region102: #{tpu_custom_call.1} parent=71 // pred_check_branch
          %3751 = sbr.rel (%p3749) target = $region104
        $region103: #{tpu_custom_call.1} parent=71 // pred_region
          %s3752 = smul.u32 4, %s37
          %s3754 = ssub.s32 512, 512
          %3755 = vsyncadd %s3745, %s3754
          %s3756 = smul.addr %s3752, 128
          %s3757 = scalar_lea.hbm %s13, %s3756
          %s3758 = sshll.u32 %s3748, 4
          %s3759 = int_to_ptr.vmem [resolvable:$true] %s3758
          %3764 = dma.vmem_to_hbm [thread:$0]  %s3759, 512, %s3757, %s3745, 128, 128, 8
        $region104: #{tpu_custom_call.1} parent=71 // pred_fallthru
          _
      $region72: #{tpu_custom_call.1} parent=5 // pred_fallthru
        _
      %p3765 = scmp.le.s32.totalorder 2, %s32
      // Predicated region
      $region105: #{tpu_custom_call.1} parent=5 // pred_check
        %p3766 = pneg %p3765
      $region106: #{tpu_custom_call.1} parent=5 // pred_check_branch
        %3768 = sbr.rel (%p3766) target = $region108
      $region107: #{tpu_custom_call.1} parent=5 // pred_region
        %s3769 = ssub.s32 %s32, 2
        // Predicated region
        $region109: #{tpu_custom_call.1} parent=107 // pred_check
          %p3770 = pneg %p349
        $region110: #{tpu_custom_call.1} parent=107 // pred_check_branch
          %3772 = sbr.rel (%p3770) target = $region112
        $region111: #{tpu_custom_call.1} parent=107 // pred_region
          %s3773 = sand.u32 %s334, 1
          %s3774 = scalar_lea.sflag [#allocation5], %s3773
          %s3775 = sand.u32 %s334, 1
          %s3776 = smul.addr %s3775, 32
          %s3777 = scalar_lea.vmem [#allocation15], %s3776
          %3778 = dma.done %s3774, 512
        $region112: #{tpu_custom_call.1} parent=107 // pred_fallthru
          _
      $region108: #{tpu_custom_call.1} parent=5 // pred_fallthru
        _
    $region6: #{tpu_custom_call.1} parent=1 // loop_footer
      %s36 = sadd.s32 1, %s32
    $region7: #{tpu_custom_call.1} parent=1 // loop_footer_branch
      %31 = sbr.rel target = $region3
    $region8: #{tpu_custom_call.1} parent=1 // loop_exit
      _
    %3779 = vsyncpa [#allocation4], 1
    %s3780 = scalar_lea.sflag [#allocation4], 1
    %3781 = vsyncpa %s3780, 1
    %3782 = vsyncpa [#allocation7], 1
    %s3783 = scalar_lea.sflag [#allocation7], 1
    %3784 = vsyncpa %s3783, 1
    %3785 = vsyncpa [#allocation10], 1
    %3786 = vsyncpa [#allocation13], 1
    %3787 = vsyncpa [#allocation5], 1
    %s3788 = scalar_lea.sflag [#allocation5], 1
    %3789 = vsyncpa %s3788, 1

</llo_original>
